<compile_context>
chip_gen: v5e
topology: v5e:2x2
jax: 0.10.0
libtpu: 0.0.40
codegen_flags: <defaults>
</compile_context>

<pallas_src>
import functools

import jax
import jax.numpy as jnp
from jax.experimental import pallas as pl
from jax.experimental.pallas import tpu as pltpu

EPS = 1e-5


def basic_block_kernel(x_ref, w1_ref, b1_ref, w2_ref, b2_ref, o_ref, h_pad_ref):
    """Fused BasicBlock forward for one image (one grid step).

    x_ref     : (H+2, W+2, C_in)   zero-padded NHWC input (batch dim squeezed)
    w1_ref    : (9, C_in, C_out)   conv1 3x3 taps with BN1 scale folded in
    b1_ref    : (1, C_out)         BN1 folded bias
    w2_ref    : (9, C_out, C_out)  conv2 3x3 taps with BN2 scale folded in
    b2_ref    : (1, C_out)         BN2 folded bias
    o_ref     : (H, W, C_out)      output
    h_pad_ref : (H+2, W+2, C_out)  VMEM scratch: zero-padded conv1 activation
    """
    _, _, c_in = x_ref.shape
    H, W, c_out = o_ref.shape

    # ---- conv1 (3x3, stride 1, pad 1) + folded BN1 + ReLU ----------------
    acc = jnp.zeros((H * W, c_out), jnp.float32)
    for dy in range(3):
        for dx in range(3):
            patch = x_ref[dy:dy + H, dx:dx + W, :].reshape(H * W, c_in)
            acc = acc + jnp.dot(patch, w1_ref[dy * 3 + dx],
                                preferred_element_type=jnp.float32)
    h = jnp.maximum(acc + b1_ref[...], 0.0)

    # Zero-pad the intermediate activation (true zero padding, like PyTorch).
    h_pad_ref[...] = jnp.zeros_like(h_pad_ref)
    h_pad_ref[1:H + 1, 1:W + 1, :] = h.reshape(H, W, c_out)

    # ---- conv2 (3x3, stride 1, pad 1) + folded BN2 -----------------------
    acc2 = jnp.zeros((H * W, c_out), jnp.float32)
    for dy in range(3):
        for dx in range(3):
            patch = h_pad_ref[dy:dy + H, dx:dx + W, :].reshape(H * W, c_out)
            acc2 = acc2 + jnp.dot(patch, w2_ref[dy * 3 + dx],
                                  preferred_element_type=jnp.float32)
    out = acc2 + b2_ref[...]

    # ---- identity shortcut + final ReLU ----------------------------------
    shortcut = x_ref[1:H + 1, 1:W + 1, :].reshape(H * W, c_in)
    out = jnp.maximum(out + shortcut, 0.0)

    o_ref[...] = out.reshape(H, W, c_out).astype(o_ref.dtype)


def basic_block_forward(x, w1f, b1, w2f, b2):
    """x: (N, H, W, C_in) float32, NHWC. Returns (N, H, W, C_out) float32."""
    N, H, W, c_in = x.shape
    c_out = w1f.shape[-1]
    assert c_in == c_out, "identity-shortcut BasicBlock requires C_in == C_out"

    # Spatial zero padding for the first conv is done once in the wrapper.
    x_pad = jnp.pad(x, ((0, 0), (1, 1), (1, 1), (0, 0)))

    flops = 2 * N * H * W * 9 * (c_in * c_out + c_out * c_out)
    bytes_accessed = 4 * (x_pad.size + N * H * W * c_out
                          + w1f.size + w2f.size + b1.size + b2.size)
    cost = pl.CostEstimate(flops=flops, transcendentals=0,
                           bytes_accessed=bytes_accessed)

    return pl.pallas_call(
        basic_block_kernel,
        out_shape=jax.ShapeDtypeStruct((N, H, W, c_out), jnp.float32),
        grid=(N,),
        in_specs=[
            # Per-image activation tile (batch dim squeezed away).
            pl.BlockSpec((None, H + 2, W + 2, c_in), lambda n: (n, 0, 0, 0)),
            # Weights/biases: constant index_map -> resident in VMEM, no
            # per-step re-DMA.
            pl.BlockSpec((9, c_in, c_out), lambda n: (0, 0, 0)),
            pl.BlockSpec((1, c_out), lambda n: (0, 0)),
            pl.BlockSpec((9, c_out, c_out), lambda n: (0, 0, 0)),
            pl.BlockSpec((1, c_out), lambda n: (0, 0)),
        ],
        out_specs=pl.BlockSpec((None, H, W, c_out), lambda n: (n, 0, 0, 0)),
        scratch_shapes=[pltpu.VMEM((H + 2, W + 2, c_out), jnp.float32)],
        compiler_params=pltpu.CompilerParams(
            dimension_semantics=("parallel",)),
        cost_estimate=cost,
    )(x_pad, w1f, b1, w2f, b2)


def fold_bn(w, gamma, beta, mean, var, eps=EPS):
    """Fold eval-mode BatchNorm into the preceding bias-free 3x3 conv.

    w: (3, 3, C_in, C_out). Returns (w_folded (9, C_in, C_out), bias (1, C_out)).
    """
    scale = gamma / jnp.sqrt(var + eps)           # (C_out,)
    w_folded = w * scale[None, None, None, :]     # (3,3,Cin,Cout)
    bias = beta - mean * scale                    # (C_out,)
    kh, kw, c_in, c_out = w.shape
    return w_folded.reshape(kh * kw, c_in, c_out), bias.reshape(1, c_out)


def init_params(key, c_in, c_out):
    k1, k2, k3, k4 = jax.random.split(key, 4)
    std1 = (2.0 / (9 * c_in)) ** 0.5
    std2 = (2.0 / (9 * c_out)) ** 0.5
    w1 = std1 * jax.random.normal(k1, (3, 3, c_in, c_out), jnp.float32)
    w2 = std2 * jax.random.normal(k2, (3, 3, c_out, c_out), jnp.float32)

    def bn_params(k, c):
        kg, kb, km, kv = jax.random.split(k, 4)
        gamma = 1.0 + 0.1 * jax.random.normal(kg, (c,), jnp.float32)
        beta = 0.1 * jax.random.normal(kb, (c,), jnp.float32)
        mean = 0.1 * jax.random.normal(km, (c,), jnp.float32)
        var = jax.random.uniform(kv, (c,), jnp.float32, 0.5, 1.5)
        return gamma, beta, mean, var

    return w1, bn_params(k3, c_out), w2, bn_params(k4, c_out)


def reference_forward(x, w1, bn1, w2, bn2):
    """Pure-JAX eval-mode reference of BasicBlock.forward (identity shortcut)."""
    g1, be1, m1, v1 = bn1
    g2, be2, m2, v2 = bn2
    conv = functools.partial(
        jax.lax.conv_general_dilated,
        window_strides=(1, 1), padding=((1, 1), (1, 1)),
        dimension_numbers=("NHWC", "HWIO", "NHWC"),
        precision=jax.lax.Precision.HIGHEST)

    def bn(y, g, b, m, v):
        return (y - m) * (g / jnp.sqrt(v + EPS)) + b

    h = jnp.maximum(bn(conv(x, w1), g1, be1, m1, v1), 0.0)
    out = bn(conv(h, w2), g2, be2, m2, v2)
    return jnp.maximum(out + x, 0.0)


if __name__ == "__main__":
    key = jax.random.PRNGKey(0)
    k_params, k_x = jax.random.split(key)

    # BasicBlock with in_channels == out_channels, strides [[1,1],[1,1]],
    # identity shortcut. C=128 keeps the lane axis fully dense.
    N, H, W, C = 2, 16, 16, 128

    w1, bn1, w2, bn2 = init_params(k_params, C, C)
    w1f, b1 = fold_bn(w1, *bn1)
    w2f, b2 = fold_bn(w2, *bn2)

    x = jax.random.normal(k_x, (N, H, W, C), dtype=jnp.float32)

    out = basic_block_forward(x, w1f, b1, w2f, b2)
    out = jax.block_until_ready(out)

    ref = reference_forward(x, w1, bn1, w2, bn2)
    assert out.shape == (N, H, W, C)
    assert jnp.allclose(out, ref, atol=5e-2, rtol=5e-2), \
        float(jnp.max(jnp.abs(out - ref)))

    print("KERNEL_OK")
</pallas_src>

<mosaic_0001>
module attributes {stable_mosaic.version = 11 : i64} {
  func.func @basic_block_kernel(%arg0: i32, %arg1: memref<1x18x18x128xf32, #tpu.memory_space<vmem>>, %arg2: memref<9x128x128xf32, #tpu.memory_space<vmem>>, %arg3: memref<1x128xf32, #tpu.memory_space<vmem>>, %arg4: memref<9x128x128xf32, #tpu.memory_space<vmem>>, %arg5: memref<1x128xf32, #tpu.memory_space<vmem>>, %arg6: memref<1x16x16x128xf32, #tpu.memory_space<vmem>>, %arg7: memref<18x18x128xf32, #tpu.memory_space<vmem>>) attributes {dimension_semantics = [#tpu.dimension_semantics<parallel>], iteration_bounds = array<i64: 2>, scalar_prefetch = 0 : i64, scratch_operands = 1 : i64, tpu.core_type = #tpu.core_type<tc>, window_params = [{transform_indices = @transform_0, window_bounds = array<i64: 1, 18, 18, 128>}, {pipeline_mode = #tpu.pipeline_mode<synchronous>, transform_indices = @transform_1, window_bounds = array<i64: 9, 128, 128>}, {pipeline_mode = #tpu.pipeline_mode<synchronous>, transform_indices = @transform_2, window_bounds = array<i64: 1, 128>}, {pipeline_mode = #tpu.pipeline_mode<synchronous>, transform_indices = @transform_3, window_bounds = array<i64: 9, 128, 128>}, {pipeline_mode = #tpu.pipeline_mode<synchronous>, transform_indices = @transform_4, window_bounds = array<i64: 1, 128>}, {transform_indices = @transform_5, window_bounds = array<i64: 1, 16, 16, 128>}]} {
    %cst = arith.constant 0.000000e+00 : f32
    %0 = vector.broadcast %cst : f32 to vector<256x128xf32>
    %c0 = arith.constant 0 : index
    %c0_0 = arith.constant 0 : index
    %c0_1 = arith.constant 0 : index
    %c0_2 = arith.constant 0 : index
    %1 = vector.load %arg1[%c0, %c0_0, %c0_1, %c0_2] : memref<1x18x18x128xf32, #tpu.memory_space<vmem>>, vector<1x16x16x128xf32>
    %2 = vector.shape_cast %1 : vector<1x16x16x128xf32> to vector<16x16x128xf32>
    %3 = vector.shape_cast %2 : vector<16x16x128xf32> to vector<256x128xf32>
    %c0_3 = arith.constant 0 : index
    %c0_4 = arith.constant 0 : index
    %c0_5 = arith.constant 0 : index
    %4 = vector.load %arg2[%c0_3, %c0_4, %c0_5] : memref<9x128x128xf32, #tpu.memory_space<vmem>>, vector<1x128x128xf32>
    %5 = vector.shape_cast %4 : vector<1x128x128xf32> to vector<128x128xf32>
    %cst_6 = arith.constant dense<0.000000e+00> : vector<256x128xf32>
    %6 = tpu.matmul %3, %5, %cst_6 {dimension_numbers = #tpu.dot_dimension_numbers<[1], [0], [0], [1], [0, 0, 1, 1], [], []>} : vector<256x128xf32>, vector<128x128xf32>, vector<256x128xf32> -> vector<256x128xf32>
    %7 = arith.addf %0, %6 : vector<256x128xf32>
    %c0_7 = arith.constant 0 : index
    %c0_8 = arith.constant 0 : index
    %c1 = arith.constant 1 : index
    %c0_9 = arith.constant 0 : index
    %8 = vector.load %arg1[%c0_7, %c0_8, %c1, %c0_9] : memref<1x18x18x128xf32, #tpu.memory_space<vmem>>, vector<1x16x16x128xf32>
    %9 = vector.shape_cast %8 : vector<1x16x16x128xf32> to vector<16x16x128xf32>
    %10 = vector.shape_cast %9 : vector<16x16x128xf32> to vector<256x128xf32>
    %c1_10 = arith.constant 1 : index
    %c0_11 = arith.constant 0 : index
    %c0_12 = arith.constant 0 : index
    %11 = vector.load %arg2[%c1_10, %c0_11, %c0_12] : memref<9x128x128xf32, #tpu.memory_space<vmem>>, vector<1x128x128xf32>
    %12 = vector.shape_cast %11 : vector<1x128x128xf32> to vector<128x128xf32>
    %cst_13 = arith.constant dense<0.000000e+00> : vector<256x128xf32>
    %13 = tpu.matmul %10, %12, %cst_13 {dimension_numbers = #tpu.dot_dimension_numbers<[1], [0], [0], [1], [0, 0, 1, 1], [], []>} : vector<256x128xf32>, vector<128x128xf32>, vector<256x128xf32> -> vector<256x128xf32>
    %14 = arith.addf %7, %13 : vector<256x128xf32>
    %c0_14 = arith.constant 0 : index
    %c0_15 = arith.constant 0 : index
    %c2 = arith.constant 2 : index
    %c0_16 = arith.constant 0 : index
    %15 = vector.load %arg1[%c0_14, %c0_15, %c2, %c0_16] : memref<1x18x18x128xf32, #tpu.memory_space<vmem>>, vector<1x16x16x128xf32>
    %16 = vector.shape_cast %15 : vector<1x16x16x128xf32> to vector<16x16x128xf32>
    %17 = vector.shape_cast %16 : vector<16x16x128xf32> to vector<256x128xf32>
    %c2_17 = arith.constant 2 : index
    %c0_18 = arith.constant 0 : index
    %c0_19 = arith.constant 0 : index
    %18 = vector.load %arg2[%c2_17, %c0_18, %c0_19] : memref<9x128x128xf32, #tpu.memory_space<vmem>>, vector<1x128x128xf32>
    %19 = vector.shape_cast %18 : vector<1x128x128xf32> to vector<128x128xf32>
    %cst_20 = arith.constant dense<0.000000e+00> : vector<256x128xf32>
    %20 = tpu.matmul %17, %19, %cst_20 {dimension_numbers = #tpu.dot_dimension_numbers<[1], [0], [0], [1], [0, 0, 1, 1], [], []>} : vector<256x128xf32>, vector<128x128xf32>, vector<256x128xf32> -> vector<256x128xf32>
    %21 = arith.addf %14, %20 : vector<256x128xf32>
    %c0_21 = arith.constant 0 : index
    %c1_22 = arith.constant 1 : index
    %c0_23 = arith.constant 0 : index
    %c0_24 = arith.constant 0 : index
    %22 = vector.load %arg1[%c0_21, %c1_22, %c0_23, %c0_24] : memref<1x18x18x128xf32, #tpu.memory_space<vmem>>, vector<1x16x16x128xf32>
    %23 = vector.shape_cast %22 : vector<1x16x16x128xf32> to vector<16x16x128xf32>
    %24 = vector.shape_cast %23 : vector<16x16x128xf32> to vector<256x128xf32>
    %c3 = arith.constant 3 : index
    %c0_25 = arith.constant 0 : index
    %c0_26 = arith.constant 0 : index
    %25 = vector.load %arg2[%c3, %c0_25, %c0_26] : memref<9x128x128xf32, #tpu.memory_space<vmem>>, vector<1x128x128xf32>
    %26 = vector.shape_cast %25 : vector<1x128x128xf32> to vector<128x128xf32>
    %cst_27 = arith.constant dense<0.000000e+00> : vector<256x128xf32>
    %27 = tpu.matmul %24, %26, %cst_27 {dimension_numbers = #tpu.dot_dimension_numbers<[1], [0], [0], [1], [0, 0, 1, 1], [], []>} : vector<256x128xf32>, vector<128x128xf32>, vector<256x128xf32> -> vector<256x128xf32>
    %28 = arith.addf %21, %27 : vector<256x128xf32>
    %c0_28 = arith.constant 0 : index
    %c1_29 = arith.constant 1 : index
    %c1_30 = arith.constant 1 : index
    %c0_31 = arith.constant 0 : index
    %29 = vector.load %arg1[%c0_28, %c1_29, %c1_30, %c0_31] : memref<1x18x18x128xf32, #tpu.memory_space<vmem>>, vector<1x16x16x128xf32>
    %30 = vector.shape_cast %29 : vector<1x16x16x128xf32> to vector<16x16x128xf32>
    %31 = vector.shape_cast %30 : vector<16x16x128xf32> to vector<256x128xf32>
    %c4 = arith.constant 4 : index
    %c0_32 = arith.constant 0 : index
    %c0_33 = arith.constant 0 : index
    %32 = vector.load %arg2[%c4, %c0_32, %c0_33] : memref<9x128x128xf32, #tpu.memory_space<vmem>>, vector<1x128x128xf32>
    %33 = vector.shape_cast %32 : vector<1x128x128xf32> to vector<128x128xf32>
    %cst_34 = arith.constant dense<0.000000e+00> : vector<256x128xf32>
    %34 = tpu.matmul %31, %33, %cst_34 {dimension_numbers = #tpu.dot_dimension_numbers<[1], [0], [0], [1], [0, 0, 1, 1], [], []>} : vector<256x128xf32>, vector<128x128xf32>, vector<256x128xf32> -> vector<256x128xf32>
    %35 = arith.addf %28, %34 : vector<256x128xf32>
    %c0_35 = arith.constant 0 : index
    %c1_36 = arith.constant 1 : index
    %c2_37 = arith.constant 2 : index
    %c0_38 = arith.constant 0 : index
    %36 = vector.load %arg1[%c0_35, %c1_36, %c2_37, %c0_38] : memref<1x18x18x128xf32, #tpu.memory_space<vmem>>, vector<1x16x16x128xf32>
    %37 = vector.shape_cast %36 : vector<1x16x16x128xf32> to vector<16x16x128xf32>
    %38 = vector.shape_cast %37 : vector<16x16x128xf32> to vector<256x128xf32>
    %c5 = arith.constant 5 : index
    %c0_39 = arith.constant 0 : index
    %c0_40 = arith.constant 0 : index
    %39 = vector.load %arg2[%c5, %c0_39, %c0_40] : memref<9x128x128xf32, #tpu.memory_space<vmem>>, vector<1x128x128xf32>
    %40 = vector.shape_cast %39 : vector<1x128x128xf32> to vector<128x128xf32>
    %cst_41 = arith.constant dense<0.000000e+00> : vector<256x128xf32>
    %41 = tpu.matmul %38, %40, %cst_41 {dimension_numbers = #tpu.dot_dimension_numbers<[1], [0], [0], [1], [0, 0, 1, 1], [], []>} : vector<256x128xf32>, vector<128x128xf32>, vector<256x128xf32> -> vector<256x128xf32>
    %42 = arith.addf %35, %41 : vector<256x128xf32>
    %c0_42 = arith.constant 0 : index
    %c2_43 = arith.constant 2 : index
    %c0_44 = arith.constant 0 : index
    %c0_45 = arith.constant 0 : index
    %43 = vector.load %arg1[%c0_42, %c2_43, %c0_44, %c0_45] : memref<1x18x18x128xf32, #tpu.memory_space<vmem>>, vector<1x16x16x128xf32>
    %44 = vector.shape_cast %43 : vector<1x16x16x128xf32> to vector<16x16x128xf32>
    %45 = vector.shape_cast %44 : vector<16x16x128xf32> to vector<256x128xf32>
    %c6 = arith.constant 6 : index
    %c0_46 = arith.constant 0 : index
    %c0_47 = arith.constant 0 : index
    %46 = vector.load %arg2[%c6, %c0_46, %c0_47] : memref<9x128x128xf32, #tpu.memory_space<vmem>>, vector<1x128x128xf32>
    %47 = vector.shape_cast %46 : vector<1x128x128xf32> to vector<128x128xf32>
    %cst_48 = arith.constant dense<0.000000e+00> : vector<256x128xf32>
    %48 = tpu.matmul %45, %47, %cst_48 {dimension_numbers = #tpu.dot_dimension_numbers<[1], [0], [0], [1], [0, 0, 1, 1], [], []>} : vector<256x128xf32>, vector<128x128xf32>, vector<256x128xf32> -> vector<256x128xf32>
    %49 = arith.addf %42, %48 : vector<256x128xf32>
    %c0_49 = arith.constant 0 : index
    %c2_50 = arith.constant 2 : index
    %c1_51 = arith.constant 1 : index
    %c0_52 = arith.constant 0 : index
    %50 = vector.load %arg1[%c0_49, %c2_50, %c1_51, %c0_52] : memref<1x18x18x128xf32, #tpu.memory_space<vmem>>, vector<1x16x16x128xf32>
    %51 = vector.shape_cast %50 : vector<1x16x16x128xf32> to vector<16x16x128xf32>
    %52 = vector.shape_cast %51 : vector<16x16x128xf32> to vector<256x128xf32>
    %c7 = arith.constant 7 : index
    %c0_53 = arith.constant 0 : index
    %c0_54 = arith.constant 0 : index
    %53 = vector.load %arg2[%c7, %c0_53, %c0_54] : memref<9x128x128xf32, #tpu.memory_space<vmem>>, vector<1x128x128xf32>
    %54 = vector.shape_cast %53 : vector<1x128x128xf32> to vector<128x128xf32>
    %cst_55 = arith.constant dense<0.000000e+00> : vector<256x128xf32>
    %55 = tpu.matmul %52, %54, %cst_55 {dimension_numbers = #tpu.dot_dimension_numbers<[1], [0], [0], [1], [0, 0, 1, 1], [], []>} : vector<256x128xf32>, vector<128x128xf32>, vector<256x128xf32> -> vector<256x128xf32>
    %56 = arith.addf %49, %55 : vector<256x128xf32>
    %c0_56 = arith.constant 0 : index
    %c2_57 = arith.constant 2 : index
    %c2_58 = arith.constant 2 : index
    %c0_59 = arith.constant 0 : index
    %57 = vector.load %arg1[%c0_56, %c2_57, %c2_58, %c0_59] : memref<1x18x18x128xf32, #tpu.memory_space<vmem>>, vector<1x16x16x128xf32>
    %58 = vector.shape_cast %57 : vector<1x16x16x128xf32> to vector<16x16x128xf32>
    %59 = vector.shape_cast %58 : vector<16x16x128xf32> to vector<256x128xf32>
    %c8 = arith.constant 8 : index
    %c0_60 = arith.constant 0 : index
    %c0_61 = arith.constant 0 : index
    %60 = vector.load %arg2[%c8, %c0_60, %c0_61] : memref<9x128x128xf32, #tpu.memory_space<vmem>>, vector<1x128x128xf32>
    %61 = vector.shape_cast %60 : vector<1x128x128xf32> to vector<128x128xf32>
    %cst_62 = arith.constant dense<0.000000e+00> : vector<256x128xf32>
    %62 = tpu.matmul %59, %61, %cst_62 {dimension_numbers = #tpu.dot_dimension_numbers<[1], [0], [0], [1], [0, 0, 1, 1], [], []>} : vector<256x128xf32>, vector<128x128xf32>, vector<256x128xf32> -> vector<256x128xf32>
    %63 = arith.addf %56, %62 : vector<256x128xf32>
    %c0_63 = arith.constant 0 : index
    %c0_64 = arith.constant 0 : index
    %64 = vector.load %arg3[%c0_63, %c0_64] : memref<1x128xf32, #tpu.memory_space<vmem>>, vector<1x128xf32>
    %65 = vector.broadcast %64 : vector<1x128xf32> to vector<256x128xf32>
    %66 = arith.addf %63, %65 : vector<256x128xf32>
    %cst_65 = arith.constant 0.000000e+00 : f32
    %67 = vector.broadcast %cst_65 : f32 to vector<256x128xf32>
    %68 = arith.maximumf %66, %67 : vector<256x128xf32>
    %cst_66 = arith.constant 0.000000e+00 : f32
    %69 = vector.broadcast %cst_66 : f32 to vector<18x18x128xf32>
    %c0_67 = arith.constant 0 : index
    %c0_68 = arith.constant 0 : index
    %c0_69 = arith.constant 0 : index
    %70 = vector.load %arg7[%c0_67, %c0_68, %c0_69] : memref<18x18x128xf32, #tpu.memory_space<vmem>>, vector<18x18x128xf32>
    tpu.vector_store %arg7[%c0_67, %c0_68, %c0_69], %69 {strides = array<i32>} : memref<18x18x128xf32, #tpu.memory_space<vmem>>, vector<18x18x128xf32>,
    %71 = vector.shape_cast %68 : vector<256x128xf32> to vector<16x16x128xf32>
    %c1_70 = arith.constant 1 : index
    %c1_71 = arith.constant 1 : index
    %c0_72 = arith.constant 0 : index
    %72 = vector.load %arg7[%c1_70, %c1_71, %c0_72] : memref<18x18x128xf32, #tpu.memory_space<vmem>>, vector<16x16x128xf32>
    tpu.vector_store %arg7[%c1_70, %c1_71, %c0_72], %71 {strides = array<i32>} : memref<18x18x128xf32, #tpu.memory_space<vmem>>, vector<16x16x128xf32>,
    %cst_73 = arith.constant 0.000000e+00 : f32
    %73 = vector.broadcast %cst_73 : f32 to vector<256x128xf32>
    %c0_74 = arith.constant 0 : index
    %c0_75 = arith.constant 0 : index
    %c0_76 = arith.constant 0 : index
    %74 = vector.load %arg7[%c0_74, %c0_75, %c0_76] : memref<18x18x128xf32, #tpu.memory_space<vmem>>, vector<16x16x128xf32>
    %75 = vector.shape_cast %74 : vector<16x16x128xf32> to vector<256x128xf32>
    %c0_77 = arith.constant 0 : index
    %c0_78 = arith.constant 0 : index
    %c0_79 = arith.constant 0 : index
    %76 = vector.load %arg4[%c0_77, %c0_78, %c0_79] : memref<9x128x128xf32, #tpu.memory_space<vmem>>, vector<1x128x128xf32>
    %77 = vector.shape_cast %76 : vector<1x128x128xf32> to vector<128x128xf32>
    %cst_80 = arith.constant dense<0.000000e+00> : vector<256x128xf32>
    %78 = tpu.matmul %75, %77, %cst_80 {dimension_numbers = #tpu.dot_dimension_numbers<[1], [0], [0], [1], [0, 0, 1, 1], [], []>} : vector<256x128xf32>, vector<128x128xf32>, vector<256x128xf32> -> vector<256x128xf32>
    %79 = arith.addf %73, %78 : vector<256x128xf32>
    %c0_81 = arith.constant 0 : index
    %c1_82 = arith.constant 1 : index
    %c0_83 = arith.constant 0 : index
    %80 = vector.load %arg7[%c0_81, %c1_82, %c0_83] : memref<18x18x128xf32, #tpu.memory_space<vmem>>, vector<16x16x128xf32>
    %81 = vector.shape_cast %80 : vector<16x16x128xf32> to vector<256x128xf32>
    %c1_84 = arith.constant 1 : index
    %c0_85 = arith.constant 0 : index
    %c0_86 = arith.constant 0 : index
    %82 = vector.load %arg4[%c1_84, %c0_85, %c0_86] : memref<9x128x128xf32, #tpu.memory_space<vmem>>, vector<1x128x128xf32>
    %83 = vector.shape_cast %82 : vector<1x128x128xf32> to vector<128x128xf32>
    %cst_87 = arith.constant dense<0.000000e+00> : vector<256x128xf32>
    %84 = tpu.matmul %81, %83, %cst_87 {dimension_numbers = #tpu.dot_dimension_numbers<[1], [0], [0], [1], [0, 0, 1, 1], [], []>} : vector<256x128xf32>, vector<128x128xf32>, vector<256x128xf32> -> vector<256x128xf32>
    %85 = arith.addf %79, %84 : vector<256x128xf32>
    %c0_88 = arith.constant 0 : index
    %c2_89 = arith.constant 2 : index
    %c0_90 = arith.constant 0 : index
    %86 = vector.load %arg7[%c0_88, %c2_89, %c0_90] : memref<18x18x128xf32, #tpu.memory_space<vmem>>, vector<16x16x128xf32>
    %87 = vector.shape_cast %86 : vector<16x16x128xf32> to vector<256x128xf32>
    %c2_91 = arith.constant 2 : index
    %c0_92 = arith.constant 0 : index
    %c0_93 = arith.constant 0 : index
    %88 = vector.load %arg4[%c2_91, %c0_92, %c0_93] : memref<9x128x128xf32, #tpu.memory_space<vmem>>, vector<1x128x128xf32>
    %89 = vector.shape_cast %88 : vector<1x128x128xf32> to vector<128x128xf32>
    %cst_94 = arith.constant dense<0.000000e+00> : vector<256x128xf32>
    %90 = tpu.matmul %87, %89, %cst_94 {dimension_numbers = #tpu.dot_dimension_numbers<[1], [0], [0], [1], [0, 0, 1, 1], [], []>} : vector<256x128xf32>, vector<128x128xf32>, vector<256x128xf32> -> vector<256x128xf32>
    %91 = arith.addf %85, %90 : vector<256x128xf32>
    %c1_95 = arith.constant 1 : index
    %c0_96 = arith.constant 0 : index
    %c0_97 = arith.constant 0 : index
    %92 = vector.load %arg7[%c1_95, %c0_96, %c0_97] : memref<18x18x128xf32, #tpu.memory_space<vmem>>, vector<16x16x128xf32>
    %93 = vector.shape_cast %92 : vector<16x16x128xf32> to vector<256x128xf32>
    %c3_98 = arith.constant 3 : index
    %c0_99 = arith.constant 0 : index
    %c0_100 = arith.constant 0 : index
    %94 = vector.load %arg4[%c3_98, %c0_99, %c0_100] : memref<9x128x128xf32, #tpu.memory_space<vmem>>, vector<1x128x128xf32>
    %95 = vector.shape_cast %94 : vector<1x128x128xf32> to vector<128x128xf32>
    %cst_101 = arith.constant dense<0.000000e+00> : vector<256x128xf32>
    %96 = tpu.matmul %93, %95, %cst_101 {dimension_numbers = #tpu.dot_dimension_numbers<[1], [0], [0], [1], [0, 0, 1, 1], [], []>} : vector<256x128xf32>, vector<128x128xf32>, vector<256x128xf32> -> vector<256x128xf32>
    %97 = arith.addf %91, %96 : vector<256x128xf32>
    %c1_102 = arith.constant 1 : index
    %c1_103 = arith.constant 1 : index
    %c0_104 = arith.constant 0 : index
    %98 = vector.load %arg7[%c1_102, %c1_103, %c0_104] : memref<18x18x128xf32, #tpu.memory_space<vmem>>, vector<16x16x128xf32>
    %99 = vector.shape_cast %98 : vector<16x16x128xf32> to vector<256x128xf32>
    %c4_105 = arith.constant 4 : index
    %c0_106 = arith.constant 0 : index
    %c0_107 = arith.constant 0 : index
    %100 = vector.load %arg4[%c4_105, %c0_106, %c0_107] : memref<9x128x128xf32, #tpu.memory_space<vmem>>, vector<1x128x128xf32>
    %101 = vector.shape_cast %100 : vector<1x128x128xf32> to vector<128x128xf32>
    %cst_108 = arith.constant dense<0.000000e+00> : vector<256x128xf32>
    %102 = tpu.matmul %99, %101, %cst_108 {dimension_numbers = #tpu.dot_dimension_numbers<[1], [0], [0], [1], [0, 0, 1, 1], [], []>} : vector<256x128xf32>, vector<128x128xf32>, vector<256x128xf32> -> vector<256x128xf32>
    %103 = arith.addf %97, %102 : vector<256x128xf32>
    %c1_109 = arith.constant 1 : index
    %c2_110 = arith.constant 2 : index
    %c0_111 = arith.constant 0 : index
    %104 = vector.load %arg7[%c1_109, %c2_110, %c0_111] : memref<18x18x128xf32, #tpu.memory_space<vmem>>, vector<16x16x128xf32>
    %105 = vector.shape_cast %104 : vector<16x16x128xf32> to vector<256x128xf32>
    %c5_112 = arith.constant 5 : index
    %c0_113 = arith.constant 0 : index
    %c0_114 = arith.constant 0 : index
    %106 = vector.load %arg4[%c5_112, %c0_113, %c0_114] : memref<9x128x128xf32, #tpu.memory_space<vmem>>, vector<1x128x128xf32>
    %107 = vector.shape_cast %106 : vector<1x128x128xf32> to vector<128x128xf32>
    %cst_115 = arith.constant dense<0.000000e+00> : vector<256x128xf32>
    %108 = tpu.matmul %105, %107, %cst_115 {dimension_numbers = #tpu.dot_dimension_numbers<[1], [0], [0], [1], [0, 0, 1, 1], [], []>} : vector<256x128xf32>, vector<128x128xf32>, vector<256x128xf32> -> vector<256x128xf32>
    %109 = arith.addf %103, %108 : vector<256x128xf32>
    %c2_116 = arith.constant 2 : index
    %c0_117 = arith.constant 0 : index
    %c0_118 = arith.constant 0 : index
    %110 = vector.load %arg7[%c2_116, %c0_117, %c0_118] : memref<18x18x128xf32, #tpu.memory_space<vmem>>, vector<16x16x128xf32>
    %111 = vector.shape_cast %110 : vector<16x16x128xf32> to vector<256x128xf32>
    %c6_119 = arith.constant 6 : index
    %c0_120 = arith.constant 0 : index
    %c0_121 = arith.constant 0 : index
    %112 = vector.load %arg4[%c6_119, %c0_120, %c0_121] : memref<9x128x128xf32, #tpu.memory_space<vmem>>, vector<1x128x128xf32>
    %113 = vector.shape_cast %112 : vector<1x128x128xf32> to vector<128x128xf32>
    %cst_122 = arith.constant dense<0.000000e+00> : vector<256x128xf32>
    %114 = tpu.matmul %111, %113, %cst_122 {dimension_numbers = #tpu.dot_dimension_numbers<[1], [0], [0], [1], [0, 0, 1, 1], [], []>} : vector<256x128xf32>, vector<128x128xf32>, vector<256x128xf32> -> vector<256x128xf32>
    %115 = arith.addf %109, %114 : vector<256x128xf32>
    %c2_123 = arith.constant 2 : index
    %c1_124 = arith.constant 1 : index
    %c0_125 = arith.constant 0 : index
    %116 = vector.load %arg7[%c2_123, %c1_124, %c0_125] : memref<18x18x128xf32, #tpu.memory_space<vmem>>, vector<16x16x128xf32>
    %117 = vector.shape_cast %116 : vector<16x16x128xf32> to vector<256x128xf32>
    %c7_126 = arith.constant 7 : index
    %c0_127 = arith.constant 0 : index
    %c0_128 = arith.constant 0 : index
    %118 = vector.load %arg4[%c7_126, %c0_127, %c0_128] : memref<9x128x128xf32, #tpu.memory_space<vmem>>, vector<1x128x128xf32>
    %119 = vector.shape_cast %118 : vector<1x128x128xf32> to vector<128x128xf32>
    %cst_129 = arith.constant dense<0.000000e+00> : vector<256x128xf32>
    %120 = tpu.matmul %117, %119, %cst_129 {dimension_numbers = #tpu.dot_dimension_numbers<[1], [0], [0], [1], [0, 0, 1, 1], [], []>} : vector<256x128xf32>, vector<128x128xf32>, vector<256x128xf32> -> vector<256x128xf32>
    %121 = arith.addf %115, %120 : vector<256x128xf32>
    %c2_130 = arith.constant 2 : index
    %c2_131 = arith.constant 2 : index
    %c0_132 = arith.constant 0 : index
    %122 = vector.load %arg7[%c2_130, %c2_131, %c0_132] : memref<18x18x128xf32, #tpu.memory_space<vmem>>, vector<16x16x128xf32>
    %123 = vector.shape_cast %122 : vector<16x16x128xf32> to vector<256x128xf32>
    %c8_133 = arith.constant 8 : index
    %c0_134 = arith.constant 0 : index
    %c0_135 = arith.constant 0 : index
    %124 = vector.load %arg4[%c8_133, %c0_134, %c0_135] : memref<9x128x128xf32, #tpu.memory_space<vmem>>, vector<1x128x128xf32>
    %125 = vector.shape_cast %124 : vector<1x128x128xf32> to vector<128x128xf32>
    %cst_136 = arith.constant dense<0.000000e+00> : vector<256x128xf32>
    %126 = tpu.matmul %123, %125, %cst_136 {dimension_numbers = #tpu.dot_dimension_numbers<[1], [0], [0], [1], [0, 0, 1, 1], [], []>} : vector<256x128xf32>, vector<128x128xf32>, vector<256x128xf32> -> vector<256x128xf32>
    %127 = arith.addf %121, %126 : vector<256x128xf32>
    %c0_137 = arith.constant 0 : index
    %c0_138 = arith.constant 0 : index
    %128 = vector.load %arg5[%c0_137, %c0_138] : memref<1x128xf32, #tpu.memory_space<vmem>>, vector<1x128xf32>
    %129 = vector.broadcast %128 : vector<1x128xf32> to vector<256x128xf32>
    %130 = arith.addf %127, %129 : vector<256x128xf32>
    %c0_139 = arith.constant 0 : index
    %c1_140 = arith.constant 1 : index
    %c1_141 = arith.constant 1 : index
    %c0_142 = arith.constant 0 : index
    %131 = vector.load %arg1[%c0_139, %c1_140, %c1_141, %c0_142] : memref<1x18x18x128xf32, #tpu.memory_space<vmem>>, vector<1x16x16x128xf32>
    %132 = vector.shape_cast %131 : vector<1x16x16x128xf32> to vector<16x16x128xf32>
    %133 = vector.shape_cast %132 : vector<16x16x128xf32> to vector<256x128xf32>
    %134 = arith.addf %130, %133 : vector<256x128xf32>
    %cst_143 = arith.constant 0.000000e+00 : f32
    %135 = vector.broadcast %cst_143 : f32 to vector<256x128xf32>
    %136 = arith.maximumf %134, %135 : vector<256x128xf32>
    %137 = vector.shape_cast %136 : vector<256x128xf32> to vector<16x16x128xf32>
    %c0_144 = arith.constant 0 : index
    %c0_145 = arith.constant 0 : index
    %c0_146 = arith.constant 0 : index
    %c0_147 = arith.constant 0 : index
    %138 = vector.load %arg6[%c0_144, %c0_145, %c0_146, %c0_147] : memref<1x16x16x128xf32, #tpu.memory_space<vmem>>, vector<1x16x16x128xf32>
    %139 = vector.shape_cast %138 : vector<1x16x16x128xf32> to vector<16x16x128xf32>
    %140 = vector.shape_cast %137 : vector<16x16x128xf32> to vector<1x16x16x128xf32>
    tpu.vector_store %arg6[%c0_144, %c0_145, %c0_146, %c0_147], %140 {strides = array<i32>} : memref<1x16x16x128xf32, #tpu.memory_space<vmem>>, vector<1x16x16x128xf32>,
    return
  }
  func.func @transform_0(%arg0: i32) -> (i32, i32, i32, i32) {
    %c0_i32 = arith.constant 0 : i32
    %c0_i32_0 = arith.constant 0 : i32
    %c0_i32_1 = arith.constant 0 : i32
    %c0_i32_2 = arith.constant 0 : i32
    return %arg0, %c0_i32, %c0_i32_0, %c0_i32_1 : i32, i32, i32, i32
  }
  func.func @transform_1(%arg0: i32) -> (i32, i32, i32) {
    %c0_i32 = arith.constant 0 : i32
    %c0_i32_0 = arith.constant 0 : i32
    %c0_i32_1 = arith.constant 0 : i32
    %c0_i32_2 = arith.constant 0 : i32
    return %c0_i32, %c0_i32_0, %c0_i32_1 : i32, i32, i32
  }
  func.func @transform_2(%arg0: i32) -> (i32, i32) {
    %c0_i32 = arith.constant 0 : i32
    %c0_i32_0 = arith.constant 0 : i32
    %c0_i32_1 = arith.constant 0 : i32
    return %c0_i32, %c0_i32_0 : i32, i32
  }
  func.func @transform_3(%arg0: i32) -> (i32, i32, i32) {
    %c0_i32 = arith.constant 0 : i32
    %c0_i32_0 = arith.constant 0 : i32
    %c0_i32_1 = arith.constant 0 : i32
    %c0_i32_2 = arith.constant 0 : i32
    return %c0_i32, %c0_i32_0, %c0_i32_1 : i32, i32, i32
  }
  func.func @transform_4(%arg0: i32) -> (i32, i32) {
    %c0_i32 = arith.constant 0 : i32
    %c0_i32_0 = arith.constant 0 : i32
    %c0_i32_1 = arith.constant 0 : i32
    return %c0_i32, %c0_i32_0 : i32, i32
  }
  func.func @transform_5(%arg0: i32) -> (i32, i32, i32, i32) {
    %c0_i32 = arith.constant 0 : i32
    %c0_i32_0 = arith.constant 0 : i32
    %c0_i32_1 = arith.constant 0 : i32
    %c0_i32_2 = arith.constant 0 : i32
    return %arg0, %c0_i32, %c0_i32_0, %c0_i32_1 : i32, i32, i32, i32
  }
}

</mosaic_0001>

<llo_original>
// kernel: tpu_custom_call.1
$region0: #{tpu_custom_call.1}
  #allocation0 [shape = 'u32[]', space=smem, size = 0x4, offset = 0x4, fixed_abs, tag = 'smem constant byte address 0x4 - core index']
  #allocation1 [shape = 'u32[72,128]{1,0:T(1,128)}', space=vmem, size = 0x9000, scoped, tag = 'internal scratch']
  #allocation2 [shape = 'f32[18,18,128]{2,1,0:T(8,128)}', space=vmem, size = 0x36000, scoped, tag = 'scratch operand']
  %s0 = inlined_call_operand.vmem [shape: f32[2,18,18,128], index: 0, kind: input, shape index: {}]
  %s1 = inlined_call_operand.vmem [shape: f32[9,128,128], index: 1, kind: input, shape index: {}]
  %s2 = inlined_call_operand.vmem [shape: f32[1,128], index: 2, kind: input, shape index: {}]
  %s3 = inlined_call_operand.hbm [shape: f32[9,128,128], index: 3, kind: input, shape index: {}]
  %s4 = inlined_call_operand.vmem [shape: f32[1,128], index: 4, kind: input, shape index: {}]
  %s5 = inlined_call_operand.hbm [shape: f32[2,16,16,128], index: 5, kind: output, shape index: {}]
  %s6 = sld [smem:[#allocation0]]
  $region57: #{tpu_custom_call.1} parent=0
    _
  %s8 = ssub.s32 1, %s6
  %s9 = scalar_select 0, %s8, %s6
  $region1: #{tpu_custom_call.1} parent=0
    #allocation3 [shape = 'u8[589824]{0}', space=vmem, size = 0x90000, scoped, tag = 'input window, operand 3, single buffered']
    #allocation4 [shape = 's32[2]{0}', space=sflag, size = 0x8, scoped, tag = 'scoped memory for tpu_custom_call.1']
    #allocation5 [shape = 's32[2]{0}', space=sflag, size = 0x8, scoped, tag = 'scoped memory for tpu_custom_call.1']
    #allocation6 [shape = 'u8[262144]{0}', space=vmem, size = 0x40000, scoped, tag = 'output window, operand 0']
    %10 = vsyncpa [#allocation4], 0
    %11 = vsyncpa [#allocation5], 0
    %s12 = scalar_lea.sflag [#allocation5], 1
    %13 = vsyncpa %s12, 0
    loop: start=0, step=1, limit=4
    $region2: #{tpu_custom_call.1} parent=1 // loop_pre_header
      _
    $region3: #{tpu_custom_call.1} parent=1 // loop_header
      %s15 = sphi 0, %s19
      %p16 = scmp.ge.s32.totalorder %s15, 4
      %s25 = sphi 0, %s27
      %s28 = sphi 0, %s25
      %s29 = sphi 0, %s28
      %s45 = sphi 0, %s29
      %s49 = sphi 0, %s49
      %s51 = sphi 0, %s49
      %s52 = sphi 0, %s51
      %s66 = sphi 0, %s52
      %s70 = sphi 0, %s70
      %s72 = sphi 0, %s70
      %s73 = sphi 0, %s72
      %s87 = sphi 0, %s73
      %s91 = sphi 0, %s91
      %s93 = sphi 0, %s91
      %s94 = sphi 0, %s93
      %s108 = sphi 0, %s94
      %s112 = sphi 0, %s112
      %s114 = sphi 0, %s112
      %s115 = sphi 0, %s114
      %s129 = sphi 0, %s115
      %s135 = sphi 0, %s137
      %s138 = sphi 0, %s135
      %s139 = sphi 0, %s138
      %s155 = sphi 0, %s139
    $region4: #{tpu_custom_call.1} parent=1 // loop_header_branch
      %18 = sbr.rel (%p16) target = $region8
    $region5: #{tpu_custom_call.1} parent=1 // loop_body
      %s20 = ssub.s32 %s15, 1
      %s21 = ssub.s32 %s15, 2
      %s22 = sadd.s32 %s15, 1
      %s23 = ssub.s32 %s15, %s22
      %p24 = scmp.eq.s32.totalorder %s23, 0
      %s26 = sadd.s32 %s25, 1
      %s27 = scalar_select %p24, %s25, %s26
      %p30 = pneg %p24
      %p31 = scmp.eq.s32.totalorder %s15, 1
      %p32 = por %p30, %p31
      %p33 = scmp.ne.s32.totalorder %s25, %s28
      %p34 = scmp.eq.s32.totalorder %s15, 0
      %p35 = por %p33, %p34
      %p36 = scmp.ne.s32.totalorder %s25, %s28
      %p37 = scmp.eq.s32.totalorder %s20, 1
      %p38 = por %p36, %p37
      %p39 = scmp.ne.s32.totalorder %s28, %s29
      %p40 = scmp.eq.s32.totalorder %s20, 0
      %p41 = por %p39, %p40
      %p42 = scmp.ne.s32.totalorder %s28, %s29
      %p43 = scmp.eq.s32.totalorder %s21, 1
      %p44 = por %p42, %p43
      %p46 = scmp.ne.s32.totalorder %s29, %s45
      %p47 = scmp.eq.s32.totalorder %s21, 0
      %p48 = por %p46, %p47
      %s50 = sadd.s32 %s49, 1
      %p53 = scmp.eq.s32.totalorder %s15, 1
      %p54 = scmp.ne.s32.totalorder %s49, %s51
      %p55 = scmp.eq.s32.totalorder %s15, 0
      %p56 = por %p54, %p55
      %p57 = scmp.ne.s32.totalorder %s49, %s51
      %p58 = scmp.eq.s32.totalorder %s20, 1
      %p59 = por %p57, %p58
      %p60 = scmp.ne.s32.totalorder %s51, %s52
      %p61 = scmp.eq.s32.totalorder %s20, 0
      %p62 = por %p60, %p61
      %p63 = scmp.ne.s32.totalorder %s51, %s52
      %p64 = scmp.eq.s32.totalorder %s21, 1
      %p65 = por %p63, %p64
      %p67 = scmp.ne.s32.totalorder %s52, %s66
      %p68 = scmp.eq.s32.totalorder %s21, 0
      %p69 = por %p67, %p68
      %s71 = sadd.s32 %s70, 1
      %p74 = scmp.eq.s32.totalorder %s15, 1
      %p75 = scmp.ne.s32.totalorder %s70, %s72
      %p76 = scmp.eq.s32.totalorder %s15, 0
      %p77 = por %p75, %p76
      %p78 = scmp.ne.s32.totalorder %s70, %s72
      %p79 = scmp.eq.s32.totalorder %s20, 1
      %p80 = por %p78, %p79
      %p81 = scmp.ne.s32.totalorder %s72, %s73
      %p82 = scmp.eq.s32.totalorder %s20, 0
      %p83 = por %p81, %p82
      %p84 = scmp.ne.s32.totalorder %s72, %s73
      %p85 = scmp.eq.s32.totalorder %s21, 1
      %p86 = por %p84, %p85
      %p88 = scmp.ne.s32.totalorder %s73, %s87
      %p89 = scmp.eq.s32.totalorder %s21, 0
      %p90 = por %p88, %p89
      %s92 = sadd.s32 %s91, 1
      %p95 = scmp.eq.s32.totalorder %s15, 1
      %p96 = scmp.ne.s32.totalorder %s91, %s93
      %p97 = scmp.eq.s32.totalorder %s15, 0
      %p98 = por %p96, %p97
      %p99 = scmp.ne.s32.totalorder %s91, %s93
      %p100 = scmp.eq.s32.totalorder %s20, 1
      %p101 = por %p99, %p100
      %p102 = scmp.ne.s32.totalorder %s93, %s94
      %p103 = scmp.eq.s32.totalorder %s20, 0
      %p104 = por %p102, %p103
      %p105 = scmp.ne.s32.totalorder %s93, %s94
      %p106 = scmp.eq.s32.totalorder %s21, 1
      %p107 = por %p105, %p106
      %p109 = scmp.ne.s32.totalorder %s94, %s108
      %p110 = scmp.eq.s32.totalorder %s21, 0
      %p111 = por %p109, %p110
      %s113 = sadd.s32 %s112, 1
      %p116 = scmp.eq.s32.totalorder %s15, 1
      %p117 = scmp.ne.s32.totalorder %s112, %s114
      %p118 = scmp.eq.s32.totalorder %s15, 0
      %p119 = por %p117, %p118
      %p120 = scmp.ne.s32.totalorder %s112, %s114
      %p121 = scmp.eq.s32.totalorder %s20, 1
      %p122 = por %p120, %p121
      %p123 = scmp.ne.s32.totalorder %s114, %s115
      %p124 = scmp.eq.s32.totalorder %s20, 0
      %p125 = por %p123, %p124
      %p126 = scmp.ne.s32.totalorder %s114, %s115
      %p127 = scmp.eq.s32.totalorder %s21, 1
      %p128 = por %p126, %p127
      %p130 = scmp.ne.s32.totalorder %s115, %s129
      %p131 = scmp.eq.s32.totalorder %s21, 0
      %p132 = por %p130, %p131
      %s133 = ssub.s32 %s15, %s22
      %p134 = scmp.eq.s32.totalorder %s133, 0
      %s136 = sadd.s32 %s135, 1
      %s137 = scalar_select %p134, %s135, %s136
      %p140 = pneg %p134
      %p141 = scmp.eq.s32.totalorder %s15, 1
      %p142 = por %p140, %p141
      %p143 = scmp.ne.s32.totalorder %s135, %s138
      %p144 = scmp.eq.s32.totalorder %s15, 0
      %p145 = por %p143, %p144
      %p146 = scmp.ne.s32.totalorder %s135, %s138
      %p147 = scmp.eq.s32.totalorder %s20, 1
      %p148 = por %p146, %p147
      %p149 = scmp.ne.s32.totalorder %s138, %s139
      %p150 = scmp.eq.s32.totalorder %s20, 0
      %p151 = por %p149, %p150
      %p152 = scmp.ne.s32.totalorder %s138, %s139
      %p153 = scmp.eq.s32.totalorder %s21, 1
      %p154 = por %p152, %p153
      %p156 = scmp.ne.s32.totalorder %s139, %s155
      %p157 = scmp.eq.s32.totalorder %s21, 0
      %p158 = por %p156, %p157
      %p159 = scmp.le.s32.totalorder 1, %s15
      %p160 = scmp.lt.s32.totalorder %s15, 3
      %p161 = pnand %p159, %p160
      %p162 = pneg %p161
      // Predicated region
      $region9: #{tpu_custom_call.1} parent=5 // pred_check
        _
      $region10: #{tpu_custom_call.1} parent=5 // pred_check_branch
        %164 = sbr.rel (%p161) target = $region12
      $region11: #{tpu_custom_call.1} parent=5 // pred_region
        %s165 = ssub.s32 %s15, 1
        // Predicated region
        $region13: #{tpu_custom_call.1} parent=11 // pred_check
          %p166 = pneg %p62
        $region14: #{tpu_custom_call.1} parent=11 // pred_check_branch
          %168 = sbr.rel (%p166) target = $region16
        $region15: #{tpu_custom_call.1} parent=11 // pred_region
          _
        $region16: #{tpu_custom_call.1} parent=11 // pred_fallthru
          _
        // Predicated region
        $region17: #{tpu_custom_call.1} parent=11 // pred_check
          %p169 = pneg %p83
        $region18: #{tpu_custom_call.1} parent=11 // pred_check_branch
          %171 = sbr.rel (%p169) target = $region20
        $region19: #{tpu_custom_call.1} parent=11 // pred_region
          _
        $region20: #{tpu_custom_call.1} parent=11 // pred_fallthru
          _
        // Predicated region
        $region21: #{tpu_custom_call.1} parent=11 // pred_check
          %p172 = pneg %p104
        $region22: #{tpu_custom_call.1} parent=11 // pred_check_branch
          %174 = sbr.rel (%p172) target = $region24
        $region23: #{tpu_custom_call.1} parent=11 // pred_region
          %176 = vsyncadd [#allocation4], 0
          %s177 = sshll.u32 %s3, 4
          %s178 = int_to_ptr.hbm [resolvable:$true] %s177
          %s179 = sshll.u32 [#allocation3], 4
          %s180 = int_to_ptr.vmem [resolvable:$true] %s179
          %185 = dma.hbm_to_vmem [thread:$0]  %s178, 18432, %s180, [#allocation4], 128, 128, 8
        $region24: #{tpu_custom_call.1} parent=11 // pred_fallthru
          _
        // Predicated region
        $region25: #{tpu_custom_call.1} parent=11 // pred_check
          %p186 = pneg %p125
        $region26: #{tpu_custom_call.1} parent=11 // pred_check_branch
          %188 = sbr.rel (%p186) target = $region28
        $region27: #{tpu_custom_call.1} parent=11 // pred_region
          _
        $region28: #{tpu_custom_call.1} parent=11 // pred_fallthru
          _
      $region12: #{tpu_custom_call.1} parent=5 // pred_fallthru
        _
      %p189 = scmp.lt.s32.totalorder %s15, 2
      // Predicated region
      $region29: #{tpu_custom_call.1} parent=5 // pred_check
        %p190 = pneg %p189
      $region30: #{tpu_custom_call.1} parent=5 // pred_check_branch
        %192 = sbr.rel (%p190) target = $region32
      $region31: #{tpu_custom_call.1} parent=5 // pred_region
        // Predicated region
        $region33: #{tpu_custom_call.1} parent=31 // pred_check
          %p193 = pneg %p35
        $region34: #{tpu_custom_call.1} parent=31 // pred_check_branch
          %195 = sbr.rel (%p193) target = $region36
        $region35: #{tpu_custom_call.1} parent=31 // pred_region
          %p196 = scmp.lt.s32.totalorder %s15, 1
          %s197 = scalar_select %p196, %s15, 1
          %s198 = smul.addr %s197, 54
          %s199 = smul.addr %s198, 8
          %s200 = scalar_lea.vmem %s0, %s199
        $region36: #{tpu_custom_call.1} parent=31 // pred_fallthru
          _
      $region32: #{tpu_custom_call.1} parent=5 // pred_fallthru
        _
      %p201 = scmp.le.s32.totalorder 1, %s15
      %p202 = scmp.lt.s32.totalorder %s15, 3
      %p203 = pnand %p201, %p202
      %p204 = pneg %p203
      // Predicated region
      $region37: #{tpu_custom_call.1} parent=5 // pred_check
        _
      $region38: #{tpu_custom_call.1} parent=5 // pred_check_branch
        %206 = sbr.rel (%p203) target = $region40
      $region39: #{tpu_custom_call.1} parent=5 // pred_region
        %s207 = ssub.s32 %s15, 1
        // Predicated region
        $region41: #{tpu_custom_call.1} parent=39 // pred_check
          %p208 = pneg %p104
        $region42: #{tpu_custom_call.1} parent=39 // pred_check_branch
          %210 = sbr.rel (%p208) target = $region44
        $region43: #{tpu_custom_call.1} parent=39 // pred_region
          %212 = dma.done [#allocation4], 18432
        $region44: #{tpu_custom_call.1} parent=39 // pred_fallthru
          _
        %p213 = scmp.lt.s32.totalorder %s20, 1
        %s214 = scalar_select %p213, %s20, 1
        %s215 = smul.addr %s214, 54
        %s216 = smul.addr %s215, 8
        %s217 = scalar_lea.vmem %s0, %s216
        %p218 = pneg %p41
        %p219 = pneg %p38
        %p220 = pneg %p62
        %p221 = pneg %p59
        %p222 = pneg %p83
        %p223 = pneg %p80
        %p224 = pneg %p104
        %p225 = pneg %p101
        %p226 = pneg %p125
        %p227 = pneg %p122
        %p228 = pneg %p151
        %p229 = pneg %p148
        %s230 = sand.u32 %s138, 1
        %s231 = scalar_lea.sflag [#allocation5], %s230
        %s232 = sand.u32 %s138, 1
        %s233 = smul.addr %s232, 256
        %s234 = scalar_lea.vmem [#allocation6], %s233
        %p235 = scmp.lt.s32.totalorder %s20, 1
        %s236 = scalar_select %p235, %s20, 1
        %s237 = smul.addr %s236, 54
        %s238 = smul.addr %s237, 8
        %s239 = scalar_lea.vmem %s0, %s238
        %v240 = vld [vmem:[%s239] sm:$0xff]
        %v241 = vld [vmem:[%s239 + $0x8] sm:$0xff]
        %v242 = vld [vmem:[%s239 + $0x18] sm:$0xff]
        %v243 = vld [vmem:[%s239 + $0x20] sm:$0xff]
        %v244 = vld [vmem:[%s239 + $0x30] sm:$0xff]
        %v245 = vld [vmem:[%s239 + $0x38] sm:$0xff]
        %v246 = vld [vmem:[%s239 + $0x48] sm:$0xff]
        %v247 = vld [vmem:[%s239 + $0x50] sm:$0xff]
        %v248 = vld [vmem:[%s239 + $0x60] sm:$0xff]
        %v249 = vld [vmem:[%s239 + $0x68] sm:$0xff]
        %v250 = vld [vmem:[%s239 + $0x78] sm:$0xff]
        %v251 = vld [vmem:[%s239 + $0x80] sm:$0xff]
        %v252 = vld [vmem:[%s239 + $0x90] sm:$0xff]
        %v253 = vld [vmem:[%s239 + $0x98] sm:$0xff]
        %v254 = vld [vmem:[%s239 + $0xa8] sm:$0xff]
        %v255 = vld [vmem:[%s239 + $0xb0] sm:$0xff]
        %v256 = vld [vmem:[%s239 + $0xc0] sm:$0xff]
        %v257 = vld [vmem:[%s239 + $0xc8] sm:$0xff]
        %v258 = vld [vmem:[%s239 + $0xd8] sm:$0xff]
        %v259 = vld [vmem:[%s239 + $0xe0] sm:$0xff]
        %v260 = vld [vmem:[%s239 + $0xf0] sm:$0xff]
        %v261 = vld [vmem:[%s239 + $0xf8] sm:$0xff]
        %v262 = vld [vmem:[%s239 + $0x108] sm:$0xff]
        %v263 = vld [vmem:[%s239 + $0x110] sm:$0xff]
        %v264 = vld [vmem:[%s239 + $0x120] sm:$0xff]
        %v265 = vld [vmem:[%s239 + $0x128] sm:$0xff]
        %v266 = vld [vmem:[%s239 + $0x138] sm:$0xff]
        %v267 = vld [vmem:[%s239 + $0x140] sm:$0xff]
        %v268 = vld [vmem:[%s239 + $0x150] sm:$0xff]
        %v269 = vld [vmem:[%s239 + $0x158] sm:$0xff]
        %v270 = vld [vmem:[%s239 + $0x168] sm:$0xff]
        %v271 = vld [vmem:[%s239 + $0x170] sm:$0xff]
        %v272 = vld [vmem:[%s1] sm:$0xff]
        %v273 = vld [vmem:[%s1 + $0x8] sm:$0xff]
        %v274 = vld [vmem:[%s1 + $0x10] sm:$0xff]
        %v275 = vld [vmem:[%s1 + $0x18] sm:$0xff]
        %v276 = vld [vmem:[%s1 + $0x20] sm:$0xff]
        %v277 = vld [vmem:[%s1 + $0x28] sm:$0xff]
        %v278 = vld [vmem:[%s1 + $0x30] sm:$0xff]
        %v279 = vld [vmem:[%s1 + $0x38] sm:$0xff]
        %v280 = vld [vmem:[%s1 + $0x40] sm:$0xff]
        %v281 = vld [vmem:[%s1 + $0x48] sm:$0xff]
        %v282 = vld [vmem:[%s1 + $0x50] sm:$0xff]
        %v283 = vld [vmem:[%s1 + $0x58] sm:$0xff]
        %v284 = vld [vmem:[%s1 + $0x60] sm:$0xff]
        %v285 = vld [vmem:[%s1 + $0x68] sm:$0xff]
        %v286 = vld [vmem:[%s1 + $0x70] sm:$0xff]
        %v287 = vld [vmem:[%s1 + $0x78] sm:$0xff]
        %v288 = vld [vmem:[%s239 + $0x1] sm:$0xff]
        %v289 = vld [vmem:[%s239 + $0x9] sm:$0xff]
        %v290 = vld [vmem:[%s239 + $0x19] sm:$0xff]
        %v291 = vld [vmem:[%s239 + $0x21] sm:$0xff]
        %v292 = vld [vmem:[%s239 + $0x31] sm:$0xff]
        %v293 = vld [vmem:[%s239 + $0x39] sm:$0xff]
        %v294 = vld [vmem:[%s239 + $0x49] sm:$0xff]
        %v295 = vld [vmem:[%s239 + $0x51] sm:$0xff]
        %v296 = vld [vmem:[%s239 + $0x61] sm:$0xff]
        %v297 = vld [vmem:[%s239 + $0x69] sm:$0xff]
        %v298 = vld [vmem:[%s239 + $0x79] sm:$0xff]
        %v299 = vld [vmem:[%s239 + $0x81] sm:$0xff]
        %v300 = vld [vmem:[%s239 + $0x91] sm:$0xff]
        %v301 = vld [vmem:[%s239 + $0x99] sm:$0xff]
        %v302 = vld [vmem:[%s239 + $0xa9] sm:$0xff]
        %v303 = vld [vmem:[%s239 + $0xb1] sm:$0xff]
        %v304 = vld [vmem:[%s239 + $0xc1] sm:$0xff]
        %v305 = vld [vmem:[%s239 + $0xc9] sm:$0xff]
        %v306 = vld [vmem:[%s239 + $0xd9] sm:$0xff]
        %v307 = vld [vmem:[%s239 + $0xe1] sm:$0xff]
        %v308 = vld [vmem:[%s239 + $0xf1] sm:$0xff]
        %v309 = vld [vmem:[%s239 + $0xf9] sm:$0xff]
        %v310 = vld [vmem:[%s239 + $0x109] sm:$0xff]
        %v311 = vld [vmem:[%s239 + $0x111] sm:$0xff]
        %v312 = vld [vmem:[%s239 + $0x121] sm:$0xff]
        %v313 = vld [vmem:[%s239 + $0x129] sm:$0xff]
        %v314 = vld [vmem:[%s239 + $0x139] sm:$0xff]
        %v315 = vld [vmem:[%s239 + $0x141] sm:$0xff]
        %v316 = vld [vmem:[%s239 + $0x151] sm:$0xff]
        %v317 = vld [vmem:[%s239 + $0x159] sm:$0xff]
        %v318 = vld [vmem:[%s239 + $0x169] sm:$0xff]
        %v319 = vld [vmem:[%s239 + $0x171] sm:$0xff]
        %s320 = scalar_lea.vmem %s1, 128
        %v321 = vld [vmem:[%s320] sm:$0xff]
        %v322 = vld [vmem:[%s320 + $0x8] sm:$0xff]
        %v323 = vld [vmem:[%s320 + $0x10] sm:$0xff]
        %v324 = vld [vmem:[%s320 + $0x18] sm:$0xff]
        %v325 = vld [vmem:[%s320 + $0x20] sm:$0xff]
        %v326 = vld [vmem:[%s320 + $0x28] sm:$0xff]
        %v327 = vld [vmem:[%s320 + $0x30] sm:$0xff]
        %v328 = vld [vmem:[%s320 + $0x38] sm:$0xff]
        %v329 = vld [vmem:[%s320 + $0x40] sm:$0xff]
        %v330 = vld [vmem:[%s320 + $0x48] sm:$0xff]
        %v331 = vld [vmem:[%s320 + $0x50] sm:$0xff]
        %v332 = vld [vmem:[%s320 + $0x58] sm:$0xff]
        %v333 = vld [vmem:[%s320 + $0x60] sm:$0xff]
        %v334 = vld [vmem:[%s320 + $0x68] sm:$0xff]
        %v335 = vld [vmem:[%s320 + $0x70] sm:$0xff]
        %v336 = vld [vmem:[%s320 + $0x78] sm:$0xff]
        %337 = vmatpush.msra.mxu0 %v336
        %338 = vmatpush.msra.mxu0 %v335
        %339 = vmatpush.msra.mxu0 %v334
        %340 = vmatpush.msra.mxu0 %v333
        %341 = vmatpush.msra.mxu0 %v332
        %342 = vmatpush.msra.mxu0 %v331
        %343 = vmatpush.msra.mxu0 %v330
        %344 = vmatpush.msra.mxu0 %v329
        %345 = vmatpush.msra.mxu0 %v328
        %346 = vmatpush.msra.mxu0 %v327
        %347 = vmatpush.msra.mxu0 %v326
        %348 = vmatpush.msra.mxu0 %v325
        %349 = vmatpush.msra.mxu0 %v324
        %350 = vmatpush.msra.mxu0 %v323
        %351 = vmatpush.msra.mxu0 %v322
        %352 = vmatpush.msra.mxu0 %v321
        %353 = vmatmul.f32.gmra.mxu0 %v288
        %v354 = vpop.f32.mrf.mxu0
        %v355 = vadd.f32 0.0, %v354
        %356 = vmatmul.f32.gmra.mxu0 %v289
        %v357 = vpop.f32.mrf.mxu0
        %v358 = vadd.f32 0.0, %v357
        %359 = vmatmul.f32.gmra.mxu0 %v290
        %v360 = vpop.f32.mrf.mxu0
        %v361 = vadd.f32 0.0, %v360
        %362 = vmatmul.f32.gmra.mxu0 %v291
        %v363 = vpop.f32.mrf.mxu0
        %v364 = vadd.f32 0.0, %v363
        %365 = vmatmul.f32.gmra.mxu0 %v292
        %v366 = vpop.f32.mrf.mxu0
        %v367 = vadd.f32 0.0, %v366
        %368 = vmatmul.f32.gmra.mxu0 %v293
        %v369 = vpop.f32.mrf.mxu0
        %v370 = vadd.f32 0.0, %v369
        %371 = vmatmul.f32.gmra.mxu0 %v294
        %v372 = vpop.f32.mrf.mxu0
        %v373 = vadd.f32 0.0, %v372
        %374 = vmatmul.f32.gmra.mxu0 %v295
        %v375 = vpop.f32.mrf.mxu0
        %v376 = vadd.f32 0.0, %v375
        %377 = vmatmul.f32.gmra.mxu0 %v296
        %v378 = vpop.f32.mrf.mxu0
        %v379 = vadd.f32 0.0, %v378
        %380 = vmatmul.f32.gmra.mxu0 %v297
        %v381 = vpop.f32.mrf.mxu0
        %v382 = vadd.f32 0.0, %v381
        %383 = vmatmul.f32.gmra.mxu0 %v298
        %v384 = vpop.f32.mrf.mxu0
        %v385 = vadd.f32 0.0, %v384
        %386 = vmatmul.f32.gmra.mxu0 %v299
        %v387 = vpop.f32.mrf.mxu0
        %v388 = vadd.f32 0.0, %v387
        %389 = vmatmul.f32.gmra.mxu0 %v300
        %v390 = vpop.f32.mrf.mxu0
        %v391 = vadd.f32 0.0, %v390
        %392 = vmatmul.f32.gmra.mxu0 %v301
        %v393 = vpop.f32.mrf.mxu0
        %v394 = vadd.f32 0.0, %v393
        %395 = vmatmul.f32.gmra.mxu0 %v302
        %v396 = vpop.f32.mrf.mxu0
        %v397 = vadd.f32 0.0, %v396
        %398 = vmatmul.f32.gmra.mxu0 %v303
        %v399 = vpop.f32.mrf.mxu0
        %v400 = vadd.f32 0.0, %v399
        %401 = vmatmul.f32.gmra.mxu0 %v304
        %v402 = vpop.f32.mrf.mxu0
        %v403 = vadd.f32 0.0, %v402
        %404 = vmatmul.f32.gmra.mxu0 %v305
        %v405 = vpop.f32.mrf.mxu0
        %v406 = vadd.f32 0.0, %v405
        %407 = vmatmul.f32.gmra.mxu0 %v306
        %v408 = vpop.f32.mrf.mxu0
        %v409 = vadd.f32 0.0, %v408
        %410 = vmatmul.f32.gmra.mxu0 %v307
        %v411 = vpop.f32.mrf.mxu0
        %v412 = vadd.f32 0.0, %v411
        %413 = vmatmul.f32.gmra.mxu0 %v308
        %v414 = vpop.f32.mrf.mxu0
        %v415 = vadd.f32 0.0, %v414
        %416 = vmatmul.f32.gmra.mxu0 %v309
        %v417 = vpop.f32.mrf.mxu0
        %v418 = vadd.f32 0.0, %v417
        %419 = vmatmul.f32.gmra.mxu0 %v310
        %v420 = vpop.f32.mrf.mxu0
        %v421 = vadd.f32 0.0, %v420
        %422 = vmatmul.f32.gmra.mxu0 %v311
        %v423 = vpop.f32.mrf.mxu0
        %v424 = vadd.f32 0.0, %v423
        %425 = vmatmul.f32.gmra.mxu0 %v312
        %v426 = vpop.f32.mrf.mxu0
        %v427 = vadd.f32 0.0, %v426
        %428 = vmatmul.f32.gmra.mxu0 %v313
        %v429 = vpop.f32.mrf.mxu0
        %v430 = vadd.f32 0.0, %v429
        %431 = vmatmul.f32.gmra.mxu0 %v314
        %v432 = vpop.f32.mrf.mxu0
        %v433 = vadd.f32 0.0, %v432
        %434 = vmatmul.f32.gmra.mxu0 %v315
        %v435 = vpop.f32.mrf.mxu0
        %v436 = vadd.f32 0.0, %v435
        %437 = vmatmul.f32.gmra.mxu0 %v316
        %v438 = vpop.f32.mrf.mxu0
        %v439 = vadd.f32 0.0, %v438
        %440 = vmatmul.f32.gmra.mxu0 %v317
        %v441 = vpop.f32.mrf.mxu0
        %v442 = vadd.f32 0.0, %v441
        %443 = vmatmul.f32.gmra.mxu0 %v318
        %v444 = vpop.f32.mrf.mxu0
        %v445 = vadd.f32 0.0, %v444
        %446 = vmatmul.f32.gmra.mxu0 %v319
        %v447 = vpop.f32.mrf.mxu0
        %v448 = vadd.f32 0.0, %v447
        %449 = vdwg.mxu0
        %450 = vmatpush.msra.mxu0 %v287
        %451 = vmatpush.msra.mxu0 %v286
        %452 = vmatpush.msra.mxu0 %v285
        %453 = vmatpush.msra.mxu0 %v284
        %454 = vmatpush.msra.mxu0 %v283
        %455 = vmatpush.msra.mxu0 %v282
        %456 = vmatpush.msra.mxu0 %v281
        %457 = vmatpush.msra.mxu0 %v280
        %458 = vmatpush.msra.mxu0 %v279
        %459 = vmatpush.msra.mxu0 %v278
        %460 = vmatpush.msra.mxu0 %v277
        %461 = vmatpush.msra.mxu0 %v276
        %462 = vmatpush.msra.mxu0 %v275
        %463 = vmatpush.msra.mxu0 %v274
        %464 = vmatpush.msra.mxu0 %v273
        %465 = vmatpush.msra.mxu0 %v272
        %466 = vmatmul.f32.gmra.mxu0 %v240
        %v467 = vpop.f32.mrf.mxu0
        %v468 = vadd.f32 %v355, %v467
        %469 = vmatmul.f32.gmra.mxu0 %v241
        %v470 = vpop.f32.mrf.mxu0
        %v471 = vadd.f32 %v358, %v470
        %472 = vmatmul.f32.gmra.mxu0 %v242
        %v473 = vpop.f32.mrf.mxu0
        %v474 = vadd.f32 %v361, %v473
        %475 = vmatmul.f32.gmra.mxu0 %v243
        %v476 = vpop.f32.mrf.mxu0
        %v477 = vadd.f32 %v364, %v476
        %478 = vmatmul.f32.gmra.mxu0 %v244
        %v479 = vpop.f32.mrf.mxu0
        %v480 = vadd.f32 %v367, %v479
        %481 = vmatmul.f32.gmra.mxu0 %v245
        %v482 = vpop.f32.mrf.mxu0
        %v483 = vadd.f32 %v370, %v482
        %484 = vmatmul.f32.gmra.mxu0 %v246
        %v485 = vpop.f32.mrf.mxu0
        %v486 = vadd.f32 %v373, %v485
        %487 = vmatmul.f32.gmra.mxu0 %v247
        %v488 = vpop.f32.mrf.mxu0
        %v489 = vadd.f32 %v376, %v488
        %490 = vmatmul.f32.gmra.mxu0 %v248
        %v491 = vpop.f32.mrf.mxu0
        %v492 = vadd.f32 %v379, %v491
        %493 = vmatmul.f32.gmra.mxu0 %v249
        %v494 = vpop.f32.mrf.mxu0
        %v495 = vadd.f32 %v382, %v494
        %496 = vmatmul.f32.gmra.mxu0 %v250
        %v497 = vpop.f32.mrf.mxu0
        %v498 = vadd.f32 %v385, %v497
        %499 = vmatmul.f32.gmra.mxu0 %v251
        %v500 = vpop.f32.mrf.mxu0
        %v501 = vadd.f32 %v388, %v500
        %502 = vmatmul.f32.gmra.mxu0 %v252
        %v503 = vpop.f32.mrf.mxu0
        %v504 = vadd.f32 %v391, %v503
        %505 = vmatmul.f32.gmra.mxu0 %v253
        %v506 = vpop.f32.mrf.mxu0
        %v507 = vadd.f32 %v394, %v506
        %508 = vmatmul.f32.gmra.mxu0 %v254
        %v509 = vpop.f32.mrf.mxu0
        %v510 = vadd.f32 %v397, %v509
        %511 = vmatmul.f32.gmra.mxu0 %v255
        %v512 = vpop.f32.mrf.mxu0
        %v513 = vadd.f32 %v400, %v512
        %514 = vmatmul.f32.gmra.mxu0 %v256
        %v515 = vpop.f32.mrf.mxu0
        %v516 = vadd.f32 %v403, %v515
        %517 = vmatmul.f32.gmra.mxu0 %v257
        %v518 = vpop.f32.mrf.mxu0
        %v519 = vadd.f32 %v406, %v518
        %520 = vmatmul.f32.gmra.mxu0 %v258
        %v521 = vpop.f32.mrf.mxu0
        %v522 = vadd.f32 %v409, %v521
        %523 = vmatmul.f32.gmra.mxu0 %v259
        %v524 = vpop.f32.mrf.mxu0
        %v525 = vadd.f32 %v412, %v524
        %526 = vmatmul.f32.gmra.mxu0 %v260
        %v527 = vpop.f32.mrf.mxu0
        %v528 = vadd.f32 %v415, %v527
        %529 = vmatmul.f32.gmra.mxu0 %v261
        %v530 = vpop.f32.mrf.mxu0
        %v531 = vadd.f32 %v418, %v530
        %532 = vmatmul.f32.gmra.mxu0 %v262
        %v533 = vpop.f32.mrf.mxu0
        %v534 = vadd.f32 %v421, %v533
        %535 = vmatmul.f32.gmra.mxu0 %v263
        %v536 = vpop.f32.mrf.mxu0
        %v537 = vadd.f32 %v424, %v536
        %538 = vmatmul.f32.gmra.mxu0 %v264
        %v539 = vpop.f32.mrf.mxu0
        %v540 = vadd.f32 %v427, %v539
        %541 = vmatmul.f32.gmra.mxu0 %v265
        %v542 = vpop.f32.mrf.mxu0
        %v543 = vadd.f32 %v430, %v542
        %544 = vmatmul.f32.gmra.mxu0 %v266
        %v545 = vpop.f32.mrf.mxu0
        %v546 = vadd.f32 %v433, %v545
        %547 = vmatmul.f32.gmra.mxu0 %v267
        %v548 = vpop.f32.mrf.mxu0
        %v549 = vadd.f32 %v436, %v548
        %550 = vmatmul.f32.gmra.mxu0 %v268
        %v551 = vpop.f32.mrf.mxu0
        %v552 = vadd.f32 %v439, %v551
        %553 = vmatmul.f32.gmra.mxu0 %v269
        %v554 = vpop.f32.mrf.mxu0
        %v555 = vadd.f32 %v442, %v554
        %556 = vmatmul.f32.gmra.mxu0 %v270
        %v557 = vpop.f32.mrf.mxu0
        %v558 = vadd.f32 %v445, %v557
        %559 = vmatmul.f32.gmra.mxu0 %v271
        %v560 = vpop.f32.mrf.mxu0
        %v561 = vadd.f32 %v448, %v560
        %562 = vdwg.mxu0
        %v563 = vld [vmem:[%s239 + $0x2] sm:$0xff]
        %v564 = vld [vmem:[%s239 + $0xa] sm:$0xff]
        %v565 = vld [vmem:[%s239 + $0x1a] sm:$0xff]
        %v566 = vld [vmem:[%s239 + $0x22] sm:$0xff]
        %v567 = vld [vmem:[%s239 + $0x32] sm:$0xff]
        %v568 = vld [vmem:[%s239 + $0x3a] sm:$0xff]
        %v569 = vld [vmem:[%s239 + $0x4a] sm:$0xff]
        %v570 = vld [vmem:[%s239 + $0x52] sm:$0xff]
        %v571 = vld [vmem:[%s239 + $0x62] sm:$0xff]
        %v572 = vld [vmem:[%s239 + $0x6a] sm:$0xff]
        %v573 = vld [vmem:[%s239 + $0x7a] sm:$0xff]
        %v574 = vld [vmem:[%s239 + $0x82] sm:$0xff]
        %v575 = vld [vmem:[%s239 + $0x92] sm:$0xff]
        %v576 = vld [vmem:[%s239 + $0x9a] sm:$0xff]
        %v577 = vld [vmem:[%s239 + $0xaa] sm:$0xff]
        %v578 = vld [vmem:[%s239 + $0xb2] sm:$0xff]
        %v579 = vld [vmem:[%s239 + $0xc2] sm:$0xff]
        %v580 = vld [vmem:[%s239 + $0xca] sm:$0xff]
        %v581 = vld [vmem:[%s239 + $0xda] sm:$0xff]
        %v582 = vld [vmem:[%s239 + $0xe2] sm:$0xff]
        %v583 = vld [vmem:[%s239 + $0xf2] sm:$0xff]
        %v584 = vld [vmem:[%s239 + $0xfa] sm:$0xff]
        %v585 = vld [vmem:[%s239 + $0x10a] sm:$0xff]
        %v586 = vld [vmem:[%s239 + $0x112] sm:$0xff]
        %v587 = vld [vmem:[%s239 + $0x122] sm:$0xff]
        %v588 = vld [vmem:[%s239 + $0x12a] sm:$0xff]
        %v589 = vld [vmem:[%s239 + $0x13a] sm:$0xff]
        %v590 = vld [vmem:[%s239 + $0x142] sm:$0xff]
        %v591 = vld [vmem:[%s239 + $0x152] sm:$0xff]
        %v592 = vld [vmem:[%s239 + $0x15a] sm:$0xff]
        %v593 = vld [vmem:[%s239 + $0x16a] sm:$0xff]
        %v594 = vld [vmem:[%s239 + $0x172] sm:$0xff]
        %s595 = scalar_lea.vmem %s1, 256
        %v596 = vld [vmem:[%s595] sm:$0xff]
        %v597 = vld [vmem:[%s595 + $0x8] sm:$0xff]
        %v598 = vld [vmem:[%s595 + $0x10] sm:$0xff]
        %v599 = vld [vmem:[%s595 + $0x18] sm:$0xff]
        %v600 = vld [vmem:[%s595 + $0x20] sm:$0xff]
        %v601 = vld [vmem:[%s595 + $0x28] sm:$0xff]
        %v602 = vld [vmem:[%s595 + $0x30] sm:$0xff]
        %v603 = vld [vmem:[%s595 + $0x38] sm:$0xff]
        %v604 = vld [vmem:[%s595 + $0x40] sm:$0xff]
        %v605 = vld [vmem:[%s595 + $0x48] sm:$0xff]
        %v606 = vld [vmem:[%s595 + $0x50] sm:$0xff]
        %v607 = vld [vmem:[%s595 + $0x58] sm:$0xff]
        %v608 = vld [vmem:[%s595 + $0x60] sm:$0xff]
        %v609 = vld [vmem:[%s595 + $0x68] sm:$0xff]
        %v610 = vld [vmem:[%s595 + $0x70] sm:$0xff]
        %v611 = vld [vmem:[%s595 + $0x78] sm:$0xff]
        %612 = vmatpush.msra.mxu0 %v611
        %613 = vmatpush.msra.mxu0 %v610
        %614 = vmatpush.msra.mxu0 %v609
        %615 = vmatpush.msra.mxu0 %v608
        %616 = vmatpush.msra.mxu0 %v607
        %617 = vmatpush.msra.mxu0 %v606
        %618 = vmatpush.msra.mxu0 %v605
        %619 = vmatpush.msra.mxu0 %v604
        %620 = vmatpush.msra.mxu0 %v603
        %621 = vmatpush.msra.mxu0 %v602
        %622 = vmatpush.msra.mxu0 %v601
        %623 = vmatpush.msra.mxu0 %v600
        %624 = vmatpush.msra.mxu0 %v599
        %625 = vmatpush.msra.mxu0 %v598
        %626 = vmatpush.msra.mxu0 %v597
        %627 = vmatpush.msra.mxu0 %v596
        %628 = vmatmul.f32.gmra.mxu0 %v563
        %v629 = vpop.f32.mrf.mxu0
        %v630 = vadd.f32 0.0, %v629
        %631 = vmatmul.f32.gmra.mxu0 %v564
        %v632 = vpop.f32.mrf.mxu0
        %v633 = vadd.f32 0.0, %v632
        %634 = vmatmul.f32.gmra.mxu0 %v565
        %v635 = vpop.f32.mrf.mxu0
        %v636 = vadd.f32 0.0, %v635
        %637 = vmatmul.f32.gmra.mxu0 %v566
        %v638 = vpop.f32.mrf.mxu0
        %v639 = vadd.f32 0.0, %v638
        %640 = vmatmul.f32.gmra.mxu0 %v567
        %v641 = vpop.f32.mrf.mxu0
        %v642 = vadd.f32 0.0, %v641
        %643 = vmatmul.f32.gmra.mxu0 %v568
        %v644 = vpop.f32.mrf.mxu0
        %v645 = vadd.f32 0.0, %v644
        %646 = vmatmul.f32.gmra.mxu0 %v569
        %v647 = vpop.f32.mrf.mxu0
        %v648 = vadd.f32 0.0, %v647
        %649 = vmatmul.f32.gmra.mxu0 %v570
        %v650 = vpop.f32.mrf.mxu0
        %v651 = vadd.f32 0.0, %v650
        %652 = vmatmul.f32.gmra.mxu0 %v571
        %v653 = vpop.f32.mrf.mxu0
        %v654 = vadd.f32 0.0, %v653
        %655 = vmatmul.f32.gmra.mxu0 %v572
        %v656 = vpop.f32.mrf.mxu0
        %v657 = vadd.f32 0.0, %v656
        %658 = vmatmul.f32.gmra.mxu0 %v573
        %v659 = vpop.f32.mrf.mxu0
        %v660 = vadd.f32 0.0, %v659
        %661 = vmatmul.f32.gmra.mxu0 %v574
        %v662 = vpop.f32.mrf.mxu0
        %v663 = vadd.f32 0.0, %v662
        %664 = vmatmul.f32.gmra.mxu0 %v575
        %v665 = vpop.f32.mrf.mxu0
        %v666 = vadd.f32 0.0, %v665
        %667 = vmatmul.f32.gmra.mxu0 %v576
        %v668 = vpop.f32.mrf.mxu0
        %v669 = vadd.f32 0.0, %v668
        %670 = vmatmul.f32.gmra.mxu0 %v577
        %v671 = vpop.f32.mrf.mxu0
        %v672 = vadd.f32 0.0, %v671
        %673 = vmatmul.f32.gmra.mxu0 %v578
        %v674 = vpop.f32.mrf.mxu0
        %v675 = vadd.f32 0.0, %v674
        %676 = vmatmul.f32.gmra.mxu0 %v579
        %v677 = vpop.f32.mrf.mxu0
        %v678 = vadd.f32 0.0, %v677
        %679 = vmatmul.f32.gmra.mxu0 %v580
        %v680 = vpop.f32.mrf.mxu0
        %v681 = vadd.f32 0.0, %v680
        %682 = vmatmul.f32.gmra.mxu0 %v581
        %v683 = vpop.f32.mrf.mxu0
        %v684 = vadd.f32 0.0, %v683
        %685 = vmatmul.f32.gmra.mxu0 %v582
        %v686 = vpop.f32.mrf.mxu0
        %v687 = vadd.f32 0.0, %v686
        %688 = vmatmul.f32.gmra.mxu0 %v583
        %v689 = vpop.f32.mrf.mxu0
        %v690 = vadd.f32 0.0, %v689
        %691 = vmatmul.f32.gmra.mxu0 %v584
        %v692 = vpop.f32.mrf.mxu0
        %v693 = vadd.f32 0.0, %v692
        %694 = vmatmul.f32.gmra.mxu0 %v585
        %v695 = vpop.f32.mrf.mxu0
        %v696 = vadd.f32 0.0, %v695
        %697 = vmatmul.f32.gmra.mxu0 %v586
        %v698 = vpop.f32.mrf.mxu0
        %v699 = vadd.f32 0.0, %v698
        %700 = vmatmul.f32.gmra.mxu0 %v587
        %v701 = vpop.f32.mrf.mxu0
        %v702 = vadd.f32 0.0, %v701
        %703 = vmatmul.f32.gmra.mxu0 %v588
        %v704 = vpop.f32.mrf.mxu0
        %v705 = vadd.f32 0.0, %v704
        %706 = vmatmul.f32.gmra.mxu0 %v589
        %v707 = vpop.f32.mrf.mxu0
        %v708 = vadd.f32 0.0, %v707
        %709 = vmatmul.f32.gmra.mxu0 %v590
        %v710 = vpop.f32.mrf.mxu0
        %v711 = vadd.f32 0.0, %v710
        %712 = vmatmul.f32.gmra.mxu0 %v591
        %v713 = vpop.f32.mrf.mxu0
        %v714 = vadd.f32 0.0, %v713
        %715 = vmatmul.f32.gmra.mxu0 %v592
        %v716 = vpop.f32.mrf.mxu0
        %v717 = vadd.f32 0.0, %v716
        %718 = vmatmul.f32.gmra.mxu0 %v593
        %v719 = vpop.f32.mrf.mxu0
        %v720 = vadd.f32 0.0, %v719
        %721 = vmatmul.f32.gmra.mxu0 %v594
        %v722 = vpop.f32.mrf.mxu0
        %v723 = vadd.f32 0.0, %v722
        %724 = vdwg.mxu0
        %v725 = vadd.f32 %v468, %v630
        %v726 = vadd.f32 %v471, %v633
        %v727 = vadd.f32 %v474, %v636
        %v728 = vadd.f32 %v477, %v639
        %v729 = vadd.f32 %v480, %v642
        %v730 = vadd.f32 %v483, %v645
        %v731 = vadd.f32 %v486, %v648
        %v732 = vadd.f32 %v489, %v651
        %v733 = vadd.f32 %v492, %v654
        %v734 = vadd.f32 %v495, %v657
        %v735 = vadd.f32 %v498, %v660
        %v736 = vadd.f32 %v501, %v663
        %v737 = vadd.f32 %v504, %v666
        %v738 = vadd.f32 %v507, %v669
        %v739 = vadd.f32 %v510, %v672
        %v740 = vadd.f32 %v513, %v675
        %v741 = vadd.f32 %v516, %v678
        %v742 = vadd.f32 %v519, %v681
        %v743 = vadd.f32 %v522, %v684
        %v744 = vadd.f32 %v525, %v687
        %v745 = vadd.f32 %v528, %v690
        %v746 = vadd.f32 %v531, %v693
        %v747 = vadd.f32 %v534, %v696
        %v748 = vadd.f32 %v537, %v699
        %v749 = vadd.f32 %v540, %v702
        %v750 = vadd.f32 %v543, %v705
        %v751 = vadd.f32 %v546, %v708
        %v752 = vadd.f32 %v549, %v711
        %v753 = vadd.f32 %v552, %v714
        %v754 = vadd.f32 %v555, %v717
        %v755 = vadd.f32 %v558, %v720
        %v756 = vadd.f32 %v561, %v723
        %s757 = scalar_lea.vmem %s239, 24
        %v758 = vld [vmem:[%s757] sm:$0xff]
        %v759 = vld [vmem:[%s757 + $0x8] sm:$0xff]
        %v760 = vld [vmem:[%s757 + $0x18] sm:$0xff]
        %v761 = vld [vmem:[%s757 + $0x20] sm:$0xff]
        %v762 = vld [vmem:[%s757 + $0x30] sm:$0xff]
        %v763 = vld [vmem:[%s757 + $0x38] sm:$0xff]
        %v764 = vld [vmem:[%s757 + $0x48] sm:$0xff]
        %v765 = vld [vmem:[%s757 + $0x50] sm:$0xff]
        %v766 = vld [vmem:[%s757 + $0x60] sm:$0xff]
        %v767 = vld [vmem:[%s757 + $0x68] sm:$0xff]
        %v768 = vld [vmem:[%s757 + $0x78] sm:$0xff]
        %v769 = vld [vmem:[%s757 + $0x80] sm:$0xff]
        %v770 = vld [vmem:[%s757 + $0x90] sm:$0xff]
        %v771 = vld [vmem:[%s757 + $0x98] sm:$0xff]
        %v772 = vld [vmem:[%s757 + $0xa8] sm:$0xff]
        %v773 = vld [vmem:[%s757 + $0xb0] sm:$0xff]
        %v774 = vld [vmem:[%s757 + $0xc0] sm:$0xff]
        %v775 = vld [vmem:[%s757 + $0xc8] sm:$0xff]
        %v776 = vld [vmem:[%s757 + $0xd8] sm:$0xff]
        %v777 = vld [vmem:[%s757 + $0xe0] sm:$0xff]
        %v778 = vld [vmem:[%s757 + $0xf0] sm:$0xff]
        %v779 = vld [vmem:[%s757 + $0xf8] sm:$0xff]
        %v780 = vld [vmem:[%s757 + $0x108] sm:$0xff]
        %v781 = vld [vmem:[%s757 + $0x110] sm:$0xff]
        %v782 = vld [vmem:[%s757 + $0x120] sm:$0xff]
        %v783 = vld [vmem:[%s757 + $0x128] sm:$0xff]
        %v784 = vld [vmem:[%s757 + $0x138] sm:$0xff]
        %v785 = vld [vmem:[%s757 + $0x140] sm:$0xff]
        %v786 = vld [vmem:[%s757 + $0x150] sm:$0xff]
        %v787 = vld [vmem:[%s757 + $0x158] sm:$0xff]
        %v788 = vld [vmem:[%s757 + $0x168] sm:$0xff]
        %v789 = vld [vmem:[%s757 + $0x170] sm:$0xff]
        %s790 = scalar_lea.vmem %s1, 384
        %v791 = vld [vmem:[%s790] sm:$0xff]
        %v792 = vld [vmem:[%s790 + $0x8] sm:$0xff]
        %v793 = vld [vmem:[%s790 + $0x10] sm:$0xff]
        %v794 = vld [vmem:[%s790 + $0x18] sm:$0xff]
        %v795 = vld [vmem:[%s790 + $0x20] sm:$0xff]
        %v796 = vld [vmem:[%s790 + $0x28] sm:$0xff]
        %v797 = vld [vmem:[%s790 + $0x30] sm:$0xff]
        %v798 = vld [vmem:[%s790 + $0x38] sm:$0xff]
        %v799 = vld [vmem:[%s790 + $0x40] sm:$0xff]
        %v800 = vld [vmem:[%s790 + $0x48] sm:$0xff]
        %v801 = vld [vmem:[%s790 + $0x50] sm:$0xff]
        %v802 = vld [vmem:[%s790 + $0x58] sm:$0xff]
        %v803 = vld [vmem:[%s790 + $0x60] sm:$0xff]
        %v804 = vld [vmem:[%s790 + $0x68] sm:$0xff]
        %v805 = vld [vmem:[%s790 + $0x70] sm:$0xff]
        %v806 = vld [vmem:[%s790 + $0x78] sm:$0xff]
        %807 = vmatpush.msra.mxu0 %v806
        %808 = vmatpush.msra.mxu0 %v805
        %809 = vmatpush.msra.mxu0 %v804
        %810 = vmatpush.msra.mxu0 %v803
        %811 = vmatpush.msra.mxu0 %v802
        %812 = vmatpush.msra.mxu0 %v801
        %813 = vmatpush.msra.mxu0 %v800
        %814 = vmatpush.msra.mxu0 %v799
        %815 = vmatpush.msra.mxu0 %v798
        %816 = vmatpush.msra.mxu0 %v797
        %817 = vmatpush.msra.mxu0 %v796
        %818 = vmatpush.msra.mxu0 %v795
        %819 = vmatpush.msra.mxu0 %v794
        %820 = vmatpush.msra.mxu0 %v793
        %821 = vmatpush.msra.mxu0 %v792
        %822 = vmatpush.msra.mxu0 %v791
        %823 = vmatmul.f32.gmra.mxu0 %v758
        %v824 = vpop.f32.mrf.mxu0
        %v825 = vadd.f32 0.0, %v824
        %826 = vmatmul.f32.gmra.mxu0 %v759
        %v827 = vpop.f32.mrf.mxu0
        %v828 = vadd.f32 0.0, %v827
        %829 = vmatmul.f32.gmra.mxu0 %v760
        %v830 = vpop.f32.mrf.mxu0
        %v831 = vadd.f32 0.0, %v830
        %832 = vmatmul.f32.gmra.mxu0 %v761
        %v833 = vpop.f32.mrf.mxu0
        %v834 = vadd.f32 0.0, %v833
        %835 = vmatmul.f32.gmra.mxu0 %v762
        %v836 = vpop.f32.mrf.mxu0
        %v837 = vadd.f32 0.0, %v836
        %838 = vmatmul.f32.gmra.mxu0 %v763
        %v839 = vpop.f32.mrf.mxu0
        %v840 = vadd.f32 0.0, %v839
        %841 = vmatmul.f32.gmra.mxu0 %v764
        %v842 = vpop.f32.mrf.mxu0
        %v843 = vadd.f32 0.0, %v842
        %844 = vmatmul.f32.gmra.mxu0 %v765
        %v845 = vpop.f32.mrf.mxu0
        %v846 = vadd.f32 0.0, %v845
        %847 = vmatmul.f32.gmra.mxu0 %v766
        %v848 = vpop.f32.mrf.mxu0
        %v849 = vadd.f32 0.0, %v848
        %850 = vmatmul.f32.gmra.mxu0 %v767
        %v851 = vpop.f32.mrf.mxu0
        %v852 = vadd.f32 0.0, %v851
        %853 = vmatmul.f32.gmra.mxu0 %v768
        %v854 = vpop.f32.mrf.mxu0
        %v855 = vadd.f32 0.0, %v854
        %856 = vmatmul.f32.gmra.mxu0 %v769
        %v857 = vpop.f32.mrf.mxu0
        %v858 = vadd.f32 0.0, %v857
        %859 = vmatmul.f32.gmra.mxu0 %v770
        %v860 = vpop.f32.mrf.mxu0
        %v861 = vadd.f32 0.0, %v860
        %862 = vmatmul.f32.gmra.mxu0 %v771
        %v863 = vpop.f32.mrf.mxu0
        %v864 = vadd.f32 0.0, %v863
        %865 = vmatmul.f32.gmra.mxu0 %v772
        %v866 = vpop.f32.mrf.mxu0
        %v867 = vadd.f32 0.0, %v866
        %868 = vmatmul.f32.gmra.mxu0 %v773
        %v869 = vpop.f32.mrf.mxu0
        %v870 = vadd.f32 0.0, %v869
        %871 = vmatmul.f32.gmra.mxu0 %v774
        %v872 = vpop.f32.mrf.mxu0
        %v873 = vadd.f32 0.0, %v872
        %874 = vmatmul.f32.gmra.mxu0 %v775
        %v875 = vpop.f32.mrf.mxu0
        %v876 = vadd.f32 0.0, %v875
        %877 = vmatmul.f32.gmra.mxu0 %v776
        %v878 = vpop.f32.mrf.mxu0
        %v879 = vadd.f32 0.0, %v878
        %880 = vmatmul.f32.gmra.mxu0 %v777
        %v881 = vpop.f32.mrf.mxu0
        %v882 = vadd.f32 0.0, %v881
        %883 = vmatmul.f32.gmra.mxu0 %v778
        %v884 = vpop.f32.mrf.mxu0
        %v885 = vadd.f32 0.0, %v884
        %886 = vmatmul.f32.gmra.mxu0 %v779
        %v887 = vpop.f32.mrf.mxu0
        %v888 = vadd.f32 0.0, %v887
        %889 = vmatmul.f32.gmra.mxu0 %v780
        %v890 = vpop.f32.mrf.mxu0
        %v891 = vadd.f32 0.0, %v890
        %892 = vmatmul.f32.gmra.mxu0 %v781
        %v893 = vpop.f32.mrf.mxu0
        %v894 = vadd.f32 0.0, %v893
        %895 = vmatmul.f32.gmra.mxu0 %v782
        %v896 = vpop.f32.mrf.mxu0
        %v897 = vadd.f32 0.0, %v896
        %898 = vmatmul.f32.gmra.mxu0 %v783
        %v899 = vpop.f32.mrf.mxu0
        %v900 = vadd.f32 0.0, %v899
        %901 = vmatmul.f32.gmra.mxu0 %v784
        %v902 = vpop.f32.mrf.mxu0
        %v903 = vadd.f32 0.0, %v902
        %904 = vmatmul.f32.gmra.mxu0 %v785
        %v905 = vpop.f32.mrf.mxu0
        %v906 = vadd.f32 0.0, %v905
        %907 = vmatmul.f32.gmra.mxu0 %v786
        %v908 = vpop.f32.mrf.mxu0
        %v909 = vadd.f32 0.0, %v908
        %910 = vmatmul.f32.gmra.mxu0 %v787
        %v911 = vpop.f32.mrf.mxu0
        %v912 = vadd.f32 0.0, %v911
        %913 = vmatmul.f32.gmra.mxu0 %v788
        %v914 = vpop.f32.mrf.mxu0
        %v915 = vadd.f32 0.0, %v914
        %916 = vmatmul.f32.gmra.mxu0 %v789
        %v917 = vpop.f32.mrf.mxu0
        %v918 = vadd.f32 0.0, %v917
        %919 = vdwg.mxu0
        %v920 = vadd.f32 %v725, %v825
        %v921 = vadd.f32 %v726, %v828
        %v922 = vadd.f32 %v727, %v831
        %v923 = vadd.f32 %v728, %v834
        %v924 = vadd.f32 %v729, %v837
        %v925 = vadd.f32 %v730, %v840
        %v926 = vadd.f32 %v731, %v843
        %v927 = vadd.f32 %v732, %v846
        %v928 = vadd.f32 %v733, %v849
        %v929 = vadd.f32 %v734, %v852
        %v930 = vadd.f32 %v735, %v855
        %v931 = vadd.f32 %v736, %v858
        %v932 = vadd.f32 %v737, %v861
        %v933 = vadd.f32 %v738, %v864
        %v934 = vadd.f32 %v739, %v867
        %v935 = vadd.f32 %v740, %v870
        %v936 = vadd.f32 %v741, %v873
        %v937 = vadd.f32 %v742, %v876
        %v938 = vadd.f32 %v743, %v879
        %v939 = vadd.f32 %v744, %v882
        %v940 = vadd.f32 %v745, %v885
        %v941 = vadd.f32 %v746, %v888
        %v942 = vadd.f32 %v747, %v891
        %v943 = vadd.f32 %v748, %v894
        %v944 = vadd.f32 %v749, %v897
        %v945 = vadd.f32 %v750, %v900
        %v946 = vadd.f32 %v751, %v903
        %v947 = vadd.f32 %v752, %v906
        %v948 = vadd.f32 %v753, %v909
        %v949 = vadd.f32 %v754, %v912
        %v950 = vadd.f32 %v755, %v915
        %v951 = vadd.f32 %v756, %v918
        %v952 = vld [vmem:[%s757 + $0x1] sm:$0xff]
        %v953 = vld [vmem:[%s757 + $0x9] sm:$0xff]
        %v954 = vld [vmem:[%s757 + $0x19] sm:$0xff]
        %v955 = vld [vmem:[%s757 + $0x21] sm:$0xff]
        %v956 = vld [vmem:[%s757 + $0x31] sm:$0xff]
        %v957 = vld [vmem:[%s757 + $0x39] sm:$0xff]
        %v958 = vld [vmem:[%s757 + $0x49] sm:$0xff]
        %v959 = vld [vmem:[%s757 + $0x51] sm:$0xff]
        %v960 = vld [vmem:[%s757 + $0x61] sm:$0xff]
        %v961 = vld [vmem:[%s757 + $0x69] sm:$0xff]
        %v962 = vld [vmem:[%s757 + $0x79] sm:$0xff]
        %v963 = vld [vmem:[%s757 + $0x81] sm:$0xff]
        %v964 = vld [vmem:[%s757 + $0x91] sm:$0xff]
        %v965 = vld [vmem:[%s757 + $0x99] sm:$0xff]
        %v966 = vld [vmem:[%s757 + $0xa9] sm:$0xff]
        %v967 = vld [vmem:[%s757 + $0xb1] sm:$0xff]
        %v968 = vld [vmem:[%s757 + $0xc1] sm:$0xff]
        %v969 = vld [vmem:[%s757 + $0xc9] sm:$0xff]
        %v970 = vld [vmem:[%s757 + $0xd9] sm:$0xff]
        %v971 = vld [vmem:[%s757 + $0xe1] sm:$0xff]
        %v972 = vld [vmem:[%s757 + $0xf1] sm:$0xff]
        %v973 = vld [vmem:[%s757 + $0xf9] sm:$0xff]
        %v974 = vld [vmem:[%s757 + $0x109] sm:$0xff]
        %v975 = vld [vmem:[%s757 + $0x111] sm:$0xff]
        %v976 = vld [vmem:[%s757 + $0x121] sm:$0xff]
        %v977 = vld [vmem:[%s757 + $0x129] sm:$0xff]
        %v978 = vld [vmem:[%s757 + $0x139] sm:$0xff]
        %v979 = vld [vmem:[%s757 + $0x141] sm:$0xff]
        %v980 = vld [vmem:[%s757 + $0x151] sm:$0xff]
        %v981 = vld [vmem:[%s757 + $0x159] sm:$0xff]
        %v982 = vld [vmem:[%s757 + $0x169] sm:$0xff]
        %v983 = vld [vmem:[%s757 + $0x171] sm:$0xff]
        %s984 = scalar_lea.vmem %s1, 512
        %v985 = vld [vmem:[%s984] sm:$0xff]
        %v986 = vld [vmem:[%s984 + $0x8] sm:$0xff]
        %v987 = vld [vmem:[%s984 + $0x10] sm:$0xff]
        %v988 = vld [vmem:[%s984 + $0x18] sm:$0xff]
        %v989 = vld [vmem:[%s984 + $0x20] sm:$0xff]
        %v990 = vld [vmem:[%s984 + $0x28] sm:$0xff]
        %v991 = vld [vmem:[%s984 + $0x30] sm:$0xff]
        %v992 = vld [vmem:[%s984 + $0x38] sm:$0xff]
        %v993 = vld [vmem:[%s984 + $0x40] sm:$0xff]
        %v994 = vld [vmem:[%s984 + $0x48] sm:$0xff]
        %v995 = vld [vmem:[%s984 + $0x50] sm:$0xff]
        %v996 = vld [vmem:[%s984 + $0x58] sm:$0xff]
        %v997 = vld [vmem:[%s984 + $0x60] sm:$0xff]
        %v998 = vld [vmem:[%s984 + $0x68] sm:$0xff]
        %v999 = vld [vmem:[%s984 + $0x70] sm:$0xff]
        %v1000 = vld [vmem:[%s984 + $0x78] sm:$0xff]
        %1001 = vmatpush.msra.mxu0 %v1000
        %1002 = vmatpush.msra.mxu0 %v999
        %1003 = vmatpush.msra.mxu0 %v998
        %1004 = vmatpush.msra.mxu0 %v997
        %1005 = vmatpush.msra.mxu0 %v996
        %1006 = vmatpush.msra.mxu0 %v995
        %1007 = vmatpush.msra.mxu0 %v994
        %1008 = vmatpush.msra.mxu0 %v993
        %1009 = vmatpush.msra.mxu0 %v992
        %1010 = vmatpush.msra.mxu0 %v991
        %1011 = vmatpush.msra.mxu0 %v990
        %1012 = vmatpush.msra.mxu0 %v989
        %1013 = vmatpush.msra.mxu0 %v988
        %1014 = vmatpush.msra.mxu0 %v987
        %1015 = vmatpush.msra.mxu0 %v986
        %1016 = vmatpush.msra.mxu0 %v985
        %1017 = vmatmul.f32.gmra.mxu0 %v952
        %v1018 = vpop.f32.mrf.mxu0
        %v1019 = vadd.f32 0.0, %v1018
        %1020 = vmatmul.f32.gmra.mxu0 %v953
        %v1021 = vpop.f32.mrf.mxu0
        %v1022 = vadd.f32 0.0, %v1021
        %1023 = vmatmul.f32.gmra.mxu0 %v954
        %v1024 = vpop.f32.mrf.mxu0
        %v1025 = vadd.f32 0.0, %v1024
        %1026 = vmatmul.f32.gmra.mxu0 %v955
        %v1027 = vpop.f32.mrf.mxu0
        %v1028 = vadd.f32 0.0, %v1027
        %1029 = vmatmul.f32.gmra.mxu0 %v956
        %v1030 = vpop.f32.mrf.mxu0
        %v1031 = vadd.f32 0.0, %v1030
        %1032 = vmatmul.f32.gmra.mxu0 %v957
        %v1033 = vpop.f32.mrf.mxu0
        %v1034 = vadd.f32 0.0, %v1033
        %1035 = vmatmul.f32.gmra.mxu0 %v958
        %v1036 = vpop.f32.mrf.mxu0
        %v1037 = vadd.f32 0.0, %v1036
        %1038 = vmatmul.f32.gmra.mxu0 %v959
        %v1039 = vpop.f32.mrf.mxu0
        %v1040 = vadd.f32 0.0, %v1039
        %1041 = vmatmul.f32.gmra.mxu0 %v960
        %v1042 = vpop.f32.mrf.mxu0
        %v1043 = vadd.f32 0.0, %v1042
        %1044 = vmatmul.f32.gmra.mxu0 %v961
        %v1045 = vpop.f32.mrf.mxu0
        %v1046 = vadd.f32 0.0, %v1045
        %1047 = vmatmul.f32.gmra.mxu0 %v962
        %v1048 = vpop.f32.mrf.mxu0
        %v1049 = vadd.f32 0.0, %v1048
        %1050 = vmatmul.f32.gmra.mxu0 %v963
        %v1051 = vpop.f32.mrf.mxu0
        %v1052 = vadd.f32 0.0, %v1051
        %1053 = vmatmul.f32.gmra.mxu0 %v964
        %v1054 = vpop.f32.mrf.mxu0
        %v1055 = vadd.f32 0.0, %v1054
        %1056 = vmatmul.f32.gmra.mxu0 %v965
        %v1057 = vpop.f32.mrf.mxu0
        %v1058 = vadd.f32 0.0, %v1057
        %1059 = vmatmul.f32.gmra.mxu0 %v966
        %v1060 = vpop.f32.mrf.mxu0
        %v1061 = vadd.f32 0.0, %v1060
        %1062 = vmatmul.f32.gmra.mxu0 %v967
        %v1063 = vpop.f32.mrf.mxu0
        %v1064 = vadd.f32 0.0, %v1063
        %1065 = vmatmul.f32.gmra.mxu0 %v968
        %v1066 = vpop.f32.mrf.mxu0
        %v1067 = vadd.f32 0.0, %v1066
        %1068 = vmatmul.f32.gmra.mxu0 %v969
        %v1069 = vpop.f32.mrf.mxu0
        %v1070 = vadd.f32 0.0, %v1069
        %1071 = vmatmul.f32.gmra.mxu0 %v970
        %v1072 = vpop.f32.mrf.mxu0
        %v1073 = vadd.f32 0.0, %v1072
        %1074 = vmatmul.f32.gmra.mxu0 %v971
        %v1075 = vpop.f32.mrf.mxu0
        %v1076 = vadd.f32 0.0, %v1075
        %1077 = vmatmul.f32.gmra.mxu0 %v972
        %v1078 = vpop.f32.mrf.mxu0
        %v1079 = vadd.f32 0.0, %v1078
        %1080 = vmatmul.f32.gmra.mxu0 %v973
        %v1081 = vpop.f32.mrf.mxu0
        %v1082 = vadd.f32 0.0, %v1081
        %1083 = vmatmul.f32.gmra.mxu0 %v974
        %v1084 = vpop.f32.mrf.mxu0
        %v1085 = vadd.f32 0.0, %v1084
        %1086 = vmatmul.f32.gmra.mxu0 %v975
        %v1087 = vpop.f32.mrf.mxu0
        %v1088 = vadd.f32 0.0, %v1087
        %1089 = vmatmul.f32.gmra.mxu0 %v976
        %v1090 = vpop.f32.mrf.mxu0
        %v1091 = vadd.f32 0.0, %v1090
        %1092 = vmatmul.f32.gmra.mxu0 %v977
        %v1093 = vpop.f32.mrf.mxu0
        %v1094 = vadd.f32 0.0, %v1093
        %1095 = vmatmul.f32.gmra.mxu0 %v978
        %v1096 = vpop.f32.mrf.mxu0
        %v1097 = vadd.f32 0.0, %v1096
        %1098 = vmatmul.f32.gmra.mxu0 %v979
        %v1099 = vpop.f32.mrf.mxu0
        %v1100 = vadd.f32 0.0, %v1099
        %1101 = vmatmul.f32.gmra.mxu0 %v980
        %v1102 = vpop.f32.mrf.mxu0
        %v1103 = vadd.f32 0.0, %v1102
        %1104 = vmatmul.f32.gmra.mxu0 %v981
        %v1105 = vpop.f32.mrf.mxu0
        %v1106 = vadd.f32 0.0, %v1105
        %1107 = vmatmul.f32.gmra.mxu0 %v982
        %v1108 = vpop.f32.mrf.mxu0
        %v1109 = vadd.f32 0.0, %v1108
        %1110 = vmatmul.f32.gmra.mxu0 %v983
        %v1111 = vpop.f32.mrf.mxu0
        %v1112 = vadd.f32 0.0, %v1111
        %1113 = vdwg.mxu0
        %v1114 = vadd.f32 %v920, %v1019
        %v1115 = vadd.f32 %v921, %v1022
        %v1116 = vadd.f32 %v922, %v1025
        %v1117 = vadd.f32 %v923, %v1028
        %v1118 = vadd.f32 %v924, %v1031
        %v1119 = vadd.f32 %v925, %v1034
        %v1120 = vadd.f32 %v926, %v1037
        %v1121 = vadd.f32 %v927, %v1040
        %v1122 = vadd.f32 %v928, %v1043
        %v1123 = vadd.f32 %v929, %v1046
        %v1124 = vadd.f32 %v930, %v1049
        %v1125 = vadd.f32 %v931, %v1052
        %v1126 = vadd.f32 %v932, %v1055
        %v1127 = vadd.f32 %v933, %v1058
        %v1128 = vadd.f32 %v934, %v1061
        %v1129 = vadd.f32 %v935, %v1064
        %v1130 = vadd.f32 %v936, %v1067
        %v1131 = vadd.f32 %v937, %v1070
        %v1132 = vadd.f32 %v938, %v1073
        %v1133 = vadd.f32 %v939, %v1076
        %v1134 = vadd.f32 %v940, %v1079
        %v1135 = vadd.f32 %v941, %v1082
        %v1136 = vadd.f32 %v942, %v1085
        %v1137 = vadd.f32 %v943, %v1088
        %v1138 = vadd.f32 %v944, %v1091
        %v1139 = vadd.f32 %v945, %v1094
        %v1140 = vadd.f32 %v946, %v1097
        %v1141 = vadd.f32 %v947, %v1100
        %v1142 = vadd.f32 %v948, %v1103
        %v1143 = vadd.f32 %v949, %v1106
        %v1144 = vadd.f32 %v950, %v1109
        %v1145 = vadd.f32 %v951, %v1112
        %v1146 = vld [vmem:[%s757 + $0x2] sm:$0xff]
        %v1147 = vld [vmem:[%s757 + $0xa] sm:$0xff]
        %v1148 = vld [vmem:[%s757 + $0x1a] sm:$0xff]
        %v1149 = vld [vmem:[%s757 + $0x22] sm:$0xff]
        %v1150 = vld [vmem:[%s757 + $0x32] sm:$0xff]
        %v1151 = vld [vmem:[%s757 + $0x3a] sm:$0xff]
        %v1152 = vld [vmem:[%s757 + $0x4a] sm:$0xff]
        %v1153 = vld [vmem:[%s757 + $0x52] sm:$0xff]
        %v1154 = vld [vmem:[%s757 + $0x62] sm:$0xff]
        %v1155 = vld [vmem:[%s757 + $0x6a] sm:$0xff]
        %v1156 = vld [vmem:[%s757 + $0x7a] sm:$0xff]
        %v1157 = vld [vmem:[%s757 + $0x82] sm:$0xff]
        %v1158 = vld [vmem:[%s757 + $0x92] sm:$0xff]
        %v1159 = vld [vmem:[%s757 + $0x9a] sm:$0xff]
        %v1160 = vld [vmem:[%s757 + $0xaa] sm:$0xff]
        %v1161 = vld [vmem:[%s757 + $0xb2] sm:$0xff]
        %v1162 = vld [vmem:[%s757 + $0xc2] sm:$0xff]
        %v1163 = vld [vmem:[%s757 + $0xca] sm:$0xff]
        %v1164 = vld [vmem:[%s757 + $0xda] sm:$0xff]
        %v1165 = vld [vmem:[%s757 + $0xe2] sm:$0xff]
        %v1166 = vld [vmem:[%s757 + $0xf2] sm:$0xff]
        %v1167 = vld [vmem:[%s757 + $0xfa] sm:$0xff]
        %v1168 = vld [vmem:[%s757 + $0x10a] sm:$0xff]
        %v1169 = vld [vmem:[%s757 + $0x112] sm:$0xff]
        %v1170 = vld [vmem:[%s757 + $0x122] sm:$0xff]
        %v1171 = vld [vmem:[%s757 + $0x12a] sm:$0xff]
        %v1172 = vld [vmem:[%s757 + $0x13a] sm:$0xff]
        %v1173 = vld [vmem:[%s757 + $0x142] sm:$0xff]
        %v1174 = vld [vmem:[%s757 + $0x152] sm:$0xff]
        %v1175 = vld [vmem:[%s757 + $0x15a] sm:$0xff]
        %v1176 = vld [vmem:[%s757 + $0x16a] sm:$0xff]
        %v1177 = vld [vmem:[%s757 + $0x172] sm:$0xff]
        %s1178 = scalar_lea.vmem %s1, 640
        %v1179 = vld [vmem:[%s1178] sm:$0xff]
        %v1180 = vld [vmem:[%s1178 + $0x8] sm:$0xff]
        %v1181 = vld [vmem:[%s1178 + $0x10] sm:$0xff]
        %v1182 = vld [vmem:[%s1178 + $0x18] sm:$0xff]
        %v1183 = vld [vmem:[%s1178 + $0x20] sm:$0xff]
        %v1184 = vld [vmem:[%s1178 + $0x28] sm:$0xff]
        %v1185 = vld [vmem:[%s1178 + $0x30] sm:$0xff]
        %v1186 = vld [vmem:[%s1178 + $0x38] sm:$0xff]
        %v1187 = vld [vmem:[%s1178 + $0x40] sm:$0xff]
        %v1188 = vld [vmem:[%s1178 + $0x48] sm:$0xff]
        %v1189 = vld [vmem:[%s1178 + $0x50] sm:$0xff]
        %v1190 = vld [vmem:[%s1178 + $0x58] sm:$0xff]
        %v1191 = vld [vmem:[%s1178 + $0x60] sm:$0xff]
        %v1192 = vld [vmem:[%s1178 + $0x68] sm:$0xff]
        %v1193 = vld [vmem:[%s1178 + $0x70] sm:$0xff]
        %v1194 = vld [vmem:[%s1178 + $0x78] sm:$0xff]
        %1195 = vmatpush.msra.mxu0 %v1194
        %1196 = vmatpush.msra.mxu0 %v1193
        %1197 = vmatpush.msra.mxu0 %v1192
        %1198 = vmatpush.msra.mxu0 %v1191
        %1199 = vmatpush.msra.mxu0 %v1190
        %1200 = vmatpush.msra.mxu0 %v1189
        %1201 = vmatpush.msra.mxu0 %v1188
        %1202 = vmatpush.msra.mxu0 %v1187
        %1203 = vmatpush.msra.mxu0 %v1186
        %1204 = vmatpush.msra.mxu0 %v1185
        %1205 = vmatpush.msra.mxu0 %v1184
        %1206 = vmatpush.msra.mxu0 %v1183
        %1207 = vmatpush.msra.mxu0 %v1182
        %1208 = vmatpush.msra.mxu0 %v1181
        %1209 = vmatpush.msra.mxu0 %v1180
        %1210 = vmatpush.msra.mxu0 %v1179
        %1211 = vmatmul.f32.gmra.mxu0 %v1146
        %v1212 = vpop.f32.mrf.mxu0
        %v1213 = vadd.f32 0.0, %v1212
        %1214 = vmatmul.f32.gmra.mxu0 %v1147
        %v1215 = vpop.f32.mrf.mxu0
        %v1216 = vadd.f32 0.0, %v1215
        %1217 = vmatmul.f32.gmra.mxu0 %v1148
        %v1218 = vpop.f32.mrf.mxu0
        %v1219 = vadd.f32 0.0, %v1218
        %1220 = vmatmul.f32.gmra.mxu0 %v1149
        %v1221 = vpop.f32.mrf.mxu0
        %v1222 = vadd.f32 0.0, %v1221
        %1223 = vmatmul.f32.gmra.mxu0 %v1150
        %v1224 = vpop.f32.mrf.mxu0
        %v1225 = vadd.f32 0.0, %v1224
        %1226 = vmatmul.f32.gmra.mxu0 %v1151
        %v1227 = vpop.f32.mrf.mxu0
        %v1228 = vadd.f32 0.0, %v1227
        %1229 = vmatmul.f32.gmra.mxu0 %v1152
        %v1230 = vpop.f32.mrf.mxu0
        %v1231 = vadd.f32 0.0, %v1230
        %1232 = vmatmul.f32.gmra.mxu0 %v1153
        %v1233 = vpop.f32.mrf.mxu0
        %v1234 = vadd.f32 0.0, %v1233
        %1235 = vmatmul.f32.gmra.mxu0 %v1154
        %v1236 = vpop.f32.mrf.mxu0
        %v1237 = vadd.f32 0.0, %v1236
        %1238 = vmatmul.f32.gmra.mxu0 %v1155
        %v1239 = vpop.f32.mrf.mxu0
        %v1240 = vadd.f32 0.0, %v1239
        %1241 = vmatmul.f32.gmra.mxu0 %v1156
        %v1242 = vpop.f32.mrf.mxu0
        %v1243 = vadd.f32 0.0, %v1242
        %1244 = vmatmul.f32.gmra.mxu0 %v1157
        %v1245 = vpop.f32.mrf.mxu0
        %v1246 = vadd.f32 0.0, %v1245
        %1247 = vmatmul.f32.gmra.mxu0 %v1158
        %v1248 = vpop.f32.mrf.mxu0
        %v1249 = vadd.f32 0.0, %v1248
        %1250 = vmatmul.f32.gmra.mxu0 %v1159
        %v1251 = vpop.f32.mrf.mxu0
        %v1252 = vadd.f32 0.0, %v1251
        %1253 = vmatmul.f32.gmra.mxu0 %v1160
        %v1254 = vpop.f32.mrf.mxu0
        %v1255 = vadd.f32 0.0, %v1254
        %1256 = vmatmul.f32.gmra.mxu0 %v1161
        %v1257 = vpop.f32.mrf.mxu0
        %v1258 = vadd.f32 0.0, %v1257
        %1259 = vmatmul.f32.gmra.mxu0 %v1162
        %v1260 = vpop.f32.mrf.mxu0
        %v1261 = vadd.f32 0.0, %v1260
        %1262 = vmatmul.f32.gmra.mxu0 %v1163
        %v1263 = vpop.f32.mrf.mxu0
        %v1264 = vadd.f32 0.0, %v1263
        %1265 = vmatmul.f32.gmra.mxu0 %v1164
        %v1266 = vpop.f32.mrf.mxu0
        %v1267 = vadd.f32 0.0, %v1266
        %1268 = vmatmul.f32.gmra.mxu0 %v1165
        %v1269 = vpop.f32.mrf.mxu0
        %v1270 = vadd.f32 0.0, %v1269
        %1271 = vmatmul.f32.gmra.mxu0 %v1166
        %v1272 = vpop.f32.mrf.mxu0
        %v1273 = vadd.f32 0.0, %v1272
        %1274 = vmatmul.f32.gmra.mxu0 %v1167
        %v1275 = vpop.f32.mrf.mxu0
        %v1276 = vadd.f32 0.0, %v1275
        %1277 = vmatmul.f32.gmra.mxu0 %v1168
        %v1278 = vpop.f32.mrf.mxu0
        %v1279 = vadd.f32 0.0, %v1278
        %1280 = vmatmul.f32.gmra.mxu0 %v1169
        %v1281 = vpop.f32.mrf.mxu0
        %v1282 = vadd.f32 0.0, %v1281
        %1283 = vmatmul.f32.gmra.mxu0 %v1170
        %v1284 = vpop.f32.mrf.mxu0
        %v1285 = vadd.f32 0.0, %v1284
        %1286 = vmatmul.f32.gmra.mxu0 %v1171
        %v1287 = vpop.f32.mrf.mxu0
        %v1288 = vadd.f32 0.0, %v1287
        %1289 = vmatmul.f32.gmra.mxu0 %v1172
        %v1290 = vpop.f32.mrf.mxu0
        %v1291 = vadd.f32 0.0, %v1290
        %1292 = vmatmul.f32.gmra.mxu0 %v1173
        %v1293 = vpop.f32.mrf.mxu0
        %v1294 = vadd.f32 0.0, %v1293
        %1295 = vmatmul.f32.gmra.mxu0 %v1174
        %v1296 = vpop.f32.mrf.mxu0
        %v1297 = vadd.f32 0.0, %v1296
        %1298 = vmatmul.f32.gmra.mxu0 %v1175
        %v1299 = vpop.f32.mrf.mxu0
        %v1300 = vadd.f32 0.0, %v1299
        %1301 = vmatmul.f32.gmra.mxu0 %v1176
        %v1302 = vpop.f32.mrf.mxu0
        %v1303 = vadd.f32 0.0, %v1302
        %1304 = vmatmul.f32.gmra.mxu0 %v1177
        %v1305 = vpop.f32.mrf.mxu0
        %v1306 = vadd.f32 0.0, %v1305
        %1307 = vdwg.mxu0
        %v1308 = vadd.f32 %v1114, %v1213
        %v1309 = vadd.f32 %v1115, %v1216
        %v1310 = vadd.f32 %v1116, %v1219
        %v1311 = vadd.f32 %v1117, %v1222
        %v1312 = vadd.f32 %v1118, %v1225
        %v1313 = vadd.f32 %v1119, %v1228
        %v1314 = vadd.f32 %v1120, %v1231
        %v1315 = vadd.f32 %v1121, %v1234
        %v1316 = vadd.f32 %v1122, %v1237
        %v1317 = vadd.f32 %v1123, %v1240
        %v1318 = vadd.f32 %v1124, %v1243
        %v1319 = vadd.f32 %v1125, %v1246
        %v1320 = vadd.f32 %v1126, %v1249
        %v1321 = vadd.f32 %v1127, %v1252
        %v1322 = vadd.f32 %v1128, %v1255
        %v1323 = vadd.f32 %v1129, %v1258
        %v1324 = vadd.f32 %v1130, %v1261
        %v1325 = vadd.f32 %v1131, %v1264
        %v1326 = vadd.f32 %v1132, %v1267
        %v1327 = vadd.f32 %v1133, %v1270
        %v1328 = vadd.f32 %v1134, %v1273
        %v1329 = vadd.f32 %v1135, %v1276
        %v1330 = vadd.f32 %v1136, %v1279
        %v1331 = vadd.f32 %v1137, %v1282
        %v1332 = vadd.f32 %v1138, %v1285
        %v1333 = vadd.f32 %v1139, %v1288
        %v1334 = vadd.f32 %v1140, %v1291
        %v1335 = vadd.f32 %v1141, %v1294
        %v1336 = vadd.f32 %v1142, %v1297
        %v1337 = vadd.f32 %v1143, %v1300
        %v1338 = vadd.f32 %v1144, %v1303
        %v1339 = vadd.f32 %v1145, %v1306
        %s1340 = scalar_lea.vmem %s239, 48
        %v1341 = vld [vmem:[%s1340] sm:$0xff]
        %v1342 = vld [vmem:[%s1340 + $0x8] sm:$0xff]
        %v1343 = vld [vmem:[%s1340 + $0x18] sm:$0xff]
        %v1344 = vld [vmem:[%s1340 + $0x20] sm:$0xff]
        %v1345 = vld [vmem:[%s1340 + $0x30] sm:$0xff]
        %v1346 = vld [vmem:[%s1340 + $0x38] sm:$0xff]
        %v1347 = vld [vmem:[%s1340 + $0x48] sm:$0xff]
        %v1348 = vld [vmem:[%s1340 + $0x50] sm:$0xff]
        %v1349 = vld [vmem:[%s1340 + $0x60] sm:$0xff]
        %v1350 = vld [vmem:[%s1340 + $0x68] sm:$0xff]
        %v1351 = vld [vmem:[%s1340 + $0x78] sm:$0xff]
        %v1352 = vld [vmem:[%s1340 + $0x80] sm:$0xff]
        %v1353 = vld [vmem:[%s1340 + $0x90] sm:$0xff]
        %v1354 = vld [vmem:[%s1340 + $0x98] sm:$0xff]
        %v1355 = vld [vmem:[%s1340 + $0xa8] sm:$0xff]
        %v1356 = vld [vmem:[%s1340 + $0xb0] sm:$0xff]
        %v1357 = vld [vmem:[%s1340 + $0xc0] sm:$0xff]
        %v1358 = vld [vmem:[%s1340 + $0xc8] sm:$0xff]
        %v1359 = vld [vmem:[%s1340 + $0xd8] sm:$0xff]
        %v1360 = vld [vmem:[%s1340 + $0xe0] sm:$0xff]
        %v1361 = vld [vmem:[%s1340 + $0xf0] sm:$0xff]
        %v1362 = vld [vmem:[%s1340 + $0xf8] sm:$0xff]
        %v1363 = vld [vmem:[%s1340 + $0x108] sm:$0xff]
        %v1364 = vld [vmem:[%s1340 + $0x110] sm:$0xff]
        %v1365 = vld [vmem:[%s1340 + $0x120] sm:$0xff]
        %v1366 = vld [vmem:[%s1340 + $0x128] sm:$0xff]
        %v1367 = vld [vmem:[%s1340 + $0x138] sm:$0xff]
        %v1368 = vld [vmem:[%s1340 + $0x140] sm:$0xff]
        %v1369 = vld [vmem:[%s1340 + $0x150] sm:$0xff]
        %v1370 = vld [vmem:[%s1340 + $0x158] sm:$0xff]
        %v1371 = vld [vmem:[%s1340 + $0x168] sm:$0xff]
        %v1372 = vld [vmem:[%s1340 + $0x170] sm:$0xff]
        %s1373 = scalar_lea.vmem %s1, 768
        %v1374 = vld [vmem:[%s1373] sm:$0xff]
        %v1375 = vld [vmem:[%s1373 + $0x8] sm:$0xff]
        %v1376 = vld [vmem:[%s1373 + $0x10] sm:$0xff]
        %v1377 = vld [vmem:[%s1373 + $0x18] sm:$0xff]
        %v1378 = vld [vmem:[%s1373 + $0x20] sm:$0xff]
        %v1379 = vld [vmem:[%s1373 + $0x28] sm:$0xff]
        %v1380 = vld [vmem:[%s1373 + $0x30] sm:$0xff]
        %v1381 = vld [vmem:[%s1373 + $0x38] sm:$0xff]
        %v1382 = vld [vmem:[%s1373 + $0x40] sm:$0xff]
        %v1383 = vld [vmem:[%s1373 + $0x48] sm:$0xff]
        %v1384 = vld [vmem:[%s1373 + $0x50] sm:$0xff]
        %v1385 = vld [vmem:[%s1373 + $0x58] sm:$0xff]
        %v1386 = vld [vmem:[%s1373 + $0x60] sm:$0xff]
        %v1387 = vld [vmem:[%s1373 + $0x68] sm:$0xff]
        %v1388 = vld [vmem:[%s1373 + $0x70] sm:$0xff]
        %v1389 = vld [vmem:[%s1373 + $0x78] sm:$0xff]
        %1390 = vmatpush.msra.mxu0 %v1389
        %1391 = vmatpush.msra.mxu0 %v1388
        %1392 = vmatpush.msra.mxu0 %v1387
        %1393 = vmatpush.msra.mxu0 %v1386
        %1394 = vmatpush.msra.mxu0 %v1385
        %1395 = vmatpush.msra.mxu0 %v1384
        %1396 = vmatpush.msra.mxu0 %v1383
        %1397 = vmatpush.msra.mxu0 %v1382
        %1398 = vmatpush.msra.mxu0 %v1381
        %1399 = vmatpush.msra.mxu0 %v1380
        %1400 = vmatpush.msra.mxu0 %v1379
        %1401 = vmatpush.msra.mxu0 %v1378
        %1402 = vmatpush.msra.mxu0 %v1377
        %1403 = vmatpush.msra.mxu0 %v1376
        %1404 = vmatpush.msra.mxu0 %v1375
        %1405 = vmatpush.msra.mxu0 %v1374
        %1406 = vmatmul.f32.gmra.mxu0 %v1341
        %v1407 = vpop.f32.mrf.mxu0
        %v1408 = vadd.f32 0.0, %v1407
        %1409 = vmatmul.f32.gmra.mxu0 %v1342
        %v1410 = vpop.f32.mrf.mxu0
        %v1411 = vadd.f32 0.0, %v1410
        %1412 = vmatmul.f32.gmra.mxu0 %v1343
        %v1413 = vpop.f32.mrf.mxu0
        %v1414 = vadd.f32 0.0, %v1413
        %1415 = vmatmul.f32.gmra.mxu0 %v1344
        %v1416 = vpop.f32.mrf.mxu0
        %v1417 = vadd.f32 0.0, %v1416
        %1418 = vmatmul.f32.gmra.mxu0 %v1345
        %v1419 = vpop.f32.mrf.mxu0
        %v1420 = vadd.f32 0.0, %v1419
        %1421 = vmatmul.f32.gmra.mxu0 %v1346
        %v1422 = vpop.f32.mrf.mxu0
        %v1423 = vadd.f32 0.0, %v1422
        %1424 = vmatmul.f32.gmra.mxu0 %v1347
        %v1425 = vpop.f32.mrf.mxu0
        %v1426 = vadd.f32 0.0, %v1425
        %1427 = vmatmul.f32.gmra.mxu0 %v1348
        %v1428 = vpop.f32.mrf.mxu0
        %v1429 = vadd.f32 0.0, %v1428
        %1430 = vmatmul.f32.gmra.mxu0 %v1349
        %v1431 = vpop.f32.mrf.mxu0
        %v1432 = vadd.f32 0.0, %v1431
        %1433 = vmatmul.f32.gmra.mxu0 %v1350
        %v1434 = vpop.f32.mrf.mxu0
        %v1435 = vadd.f32 0.0, %v1434
        %1436 = vmatmul.f32.gmra.mxu0 %v1351
        %v1437 = vpop.f32.mrf.mxu0
        %v1438 = vadd.f32 0.0, %v1437
        %1439 = vmatmul.f32.gmra.mxu0 %v1352
        %v1440 = vpop.f32.mrf.mxu0
        %v1441 = vadd.f32 0.0, %v1440
        %1442 = vmatmul.f32.gmra.mxu0 %v1353
        %v1443 = vpop.f32.mrf.mxu0
        %v1444 = vadd.f32 0.0, %v1443
        %1445 = vmatmul.f32.gmra.mxu0 %v1354
        %v1446 = vpop.f32.mrf.mxu0
        %v1447 = vadd.f32 0.0, %v1446
        %1448 = vmatmul.f32.gmra.mxu0 %v1355
        %v1449 = vpop.f32.mrf.mxu0
        %v1450 = vadd.f32 0.0, %v1449
        %1451 = vmatmul.f32.gmra.mxu0 %v1356
        %v1452 = vpop.f32.mrf.mxu0
        %v1453 = vadd.f32 0.0, %v1452
        %1454 = vmatmul.f32.gmra.mxu0 %v1357
        %v1455 = vpop.f32.mrf.mxu0
        %v1456 = vadd.f32 0.0, %v1455
        %1457 = vmatmul.f32.gmra.mxu0 %v1358
        %v1458 = vpop.f32.mrf.mxu0
        %v1459 = vadd.f32 0.0, %v1458
        %1460 = vmatmul.f32.gmra.mxu0 %v1359
        %v1461 = vpop.f32.mrf.mxu0
        %v1462 = vadd.f32 0.0, %v1461
        %1463 = vmatmul.f32.gmra.mxu0 %v1360
        %v1464 = vpop.f32.mrf.mxu0
        %v1465 = vadd.f32 0.0, %v1464
        %1466 = vmatmul.f32.gmra.mxu0 %v1361
        %v1467 = vpop.f32.mrf.mxu0
        %v1468 = vadd.f32 0.0, %v1467
        %1469 = vmatmul.f32.gmra.mxu0 %v1362
        %v1470 = vpop.f32.mrf.mxu0
        %v1471 = vadd.f32 0.0, %v1470
        %1472 = vmatmul.f32.gmra.mxu0 %v1363
        %v1473 = vpop.f32.mrf.mxu0
        %v1474 = vadd.f32 0.0, %v1473
        %1475 = vmatmul.f32.gmra.mxu0 %v1364
        %v1476 = vpop.f32.mrf.mxu0
        %v1477 = vadd.f32 0.0, %v1476
        %1478 = vmatmul.f32.gmra.mxu0 %v1365
        %v1479 = vpop.f32.mrf.mxu0
        %v1480 = vadd.f32 0.0, %v1479
        %1481 = vmatmul.f32.gmra.mxu0 %v1366
        %v1482 = vpop.f32.mrf.mxu0
        %v1483 = vadd.f32 0.0, %v1482
        %1484 = vmatmul.f32.gmra.mxu0 %v1367
        %v1485 = vpop.f32.mrf.mxu0
        %v1486 = vadd.f32 0.0, %v1485
        %1487 = vmatmul.f32.gmra.mxu0 %v1368
        %v1488 = vpop.f32.mrf.mxu0
        %v1489 = vadd.f32 0.0, %v1488
        %1490 = vmatmul.f32.gmra.mxu0 %v1369
        %v1491 = vpop.f32.mrf.mxu0
        %v1492 = vadd.f32 0.0, %v1491
        %1493 = vmatmul.f32.gmra.mxu0 %v1370
        %v1494 = vpop.f32.mrf.mxu0
        %v1495 = vadd.f32 0.0, %v1494
        %1496 = vmatmul.f32.gmra.mxu0 %v1371
        %v1497 = vpop.f32.mrf.mxu0
        %v1498 = vadd.f32 0.0, %v1497
        %1499 = vmatmul.f32.gmra.mxu0 %v1372
        %v1500 = vpop.f32.mrf.mxu0
        %v1501 = vadd.f32 0.0, %v1500
        %1502 = vdwg.mxu0
        %v1503 = vadd.f32 %v1308, %v1408
        %v1504 = vadd.f32 %v1309, %v1411
        %v1505 = vadd.f32 %v1310, %v1414
        %v1506 = vadd.f32 %v1311, %v1417
        %v1507 = vadd.f32 %v1312, %v1420
        %v1508 = vadd.f32 %v1313, %v1423
        %v1509 = vadd.f32 %v1314, %v1426
        %v1510 = vadd.f32 %v1315, %v1429
        %v1511 = vadd.f32 %v1316, %v1432
        %v1512 = vadd.f32 %v1317, %v1435
        %v1513 = vadd.f32 %v1318, %v1438
        %v1514 = vadd.f32 %v1319, %v1441
        %v1515 = vadd.f32 %v1320, %v1444
        %v1516 = vadd.f32 %v1321, %v1447
        %v1517 = vadd.f32 %v1322, %v1450
        %v1518 = vadd.f32 %v1323, %v1453
        %v1519 = vadd.f32 %v1324, %v1456
        %v1520 = vadd.f32 %v1325, %v1459
        %v1521 = vadd.f32 %v1326, %v1462
        %v1522 = vadd.f32 %v1327, %v1465
        %v1523 = vadd.f32 %v1328, %v1468
        %v1524 = vadd.f32 %v1329, %v1471
        %v1525 = vadd.f32 %v1330, %v1474
        %v1526 = vadd.f32 %v1331, %v1477
        %v1527 = vadd.f32 %v1332, %v1480
        %v1528 = vadd.f32 %v1333, %v1483
        %v1529 = vadd.f32 %v1334, %v1486
        %v1530 = vadd.f32 %v1335, %v1489
        %v1531 = vadd.f32 %v1336, %v1492
        %v1532 = vadd.f32 %v1337, %v1495
        %v1533 = vadd.f32 %v1338, %v1498
        %v1534 = vadd.f32 %v1339, %v1501
        %v1535 = vld [vmem:[%s1340 + $0x1] sm:$0xff]
        %v1536 = vld [vmem:[%s1340 + $0x9] sm:$0xff]
        %v1537 = vld [vmem:[%s1340 + $0x19] sm:$0xff]
        %v1538 = vld [vmem:[%s1340 + $0x21] sm:$0xff]
        %v1539 = vld [vmem:[%s1340 + $0x31] sm:$0xff]
        %v1540 = vld [vmem:[%s1340 + $0x39] sm:$0xff]
        %v1541 = vld [vmem:[%s1340 + $0x49] sm:$0xff]
        %v1542 = vld [vmem:[%s1340 + $0x51] sm:$0xff]
        %v1543 = vld [vmem:[%s1340 + $0x61] sm:$0xff]
        %v1544 = vld [vmem:[%s1340 + $0x69] sm:$0xff]
        %v1545 = vld [vmem:[%s1340 + $0x79] sm:$0xff]
        %v1546 = vld [vmem:[%s1340 + $0x81] sm:$0xff]
        %v1547 = vld [vmem:[%s1340 + $0x91] sm:$0xff]
        %v1548 = vld [vmem:[%s1340 + $0x99] sm:$0xff]
        %v1549 = vld [vmem:[%s1340 + $0xa9] sm:$0xff]
        %v1550 = vld [vmem:[%s1340 + $0xb1] sm:$0xff]
        %v1551 = vld [vmem:[%s1340 + $0xc1] sm:$0xff]
        %v1552 = vld [vmem:[%s1340 + $0xc9] sm:$0xff]
        %v1553 = vld [vmem:[%s1340 + $0xd9] sm:$0xff]
        %v1554 = vld [vmem:[%s1340 + $0xe1] sm:$0xff]
        %v1555 = vld [vmem:[%s1340 + $0xf1] sm:$0xff]
        %v1556 = vld [vmem:[%s1340 + $0xf9] sm:$0xff]
        %v1557 = vld [vmem:[%s1340 + $0x109] sm:$0xff]
        %v1558 = vld [vmem:[%s1340 + $0x111] sm:$0xff]
        %v1559 = vld [vmem:[%s1340 + $0x121] sm:$0xff]
        %v1560 = vld [vmem:[%s1340 + $0x129] sm:$0xff]
        %v1561 = vld [vmem:[%s1340 + $0x139] sm:$0xff]
        %v1562 = vld [vmem:[%s1340 + $0x141] sm:$0xff]
        %v1563 = vld [vmem:[%s1340 + $0x151] sm:$0xff]
        %v1564 = vld [vmem:[%s1340 + $0x159] sm:$0xff]
        %v1565 = vld [vmem:[%s1340 + $0x169] sm:$0xff]
        %v1566 = vld [vmem:[%s1340 + $0x171] sm:$0xff]
        %s1567 = scalar_lea.vmem %s1, 896
        %v1568 = vld [vmem:[%s1567] sm:$0xff]
        %v1569 = vld [vmem:[%s1567 + $0x8] sm:$0xff]
        %v1570 = vld [vmem:[%s1567 + $0x10] sm:$0xff]
        %v1571 = vld [vmem:[%s1567 + $0x18] sm:$0xff]
        %v1572 = vld [vmem:[%s1567 + $0x20] sm:$0xff]
        %v1573 = vld [vmem:[%s1567 + $0x28] sm:$0xff]
        %v1574 = vld [vmem:[%s1567 + $0x30] sm:$0xff]
        %v1575 = vld [vmem:[%s1567 + $0x38] sm:$0xff]
        %v1576 = vld [vmem:[%s1567 + $0x40] sm:$0xff]
        %v1577 = vld [vmem:[%s1567 + $0x48] sm:$0xff]
        %v1578 = vld [vmem:[%s1567 + $0x50] sm:$0xff]
        %v1579 = vld [vmem:[%s1567 + $0x58] sm:$0xff]
        %v1580 = vld [vmem:[%s1567 + $0x60] sm:$0xff]
        %v1581 = vld [vmem:[%s1567 + $0x68] sm:$0xff]
        %v1582 = vld [vmem:[%s1567 + $0x70] sm:$0xff]
        %v1583 = vld [vmem:[%s1567 + $0x78] sm:$0xff]
        %1584 = vmatpush.msra.mxu0 %v1583
        %1585 = vmatpush.msra.mxu0 %v1582
        %1586 = vmatpush.msra.mxu0 %v1581
        %1587 = vmatpush.msra.mxu0 %v1580
        %1588 = vmatpush.msra.mxu0 %v1579
        %1589 = vmatpush.msra.mxu0 %v1578
        %1590 = vmatpush.msra.mxu0 %v1577
        %1591 = vmatpush.msra.mxu0 %v1576
        %1592 = vmatpush.msra.mxu0 %v1575
        %1593 = vmatpush.msra.mxu0 %v1574
        %1594 = vmatpush.msra.mxu0 %v1573
        %1595 = vmatpush.msra.mxu0 %v1572
        %1596 = vmatpush.msra.mxu0 %v1571
        %1597 = vmatpush.msra.mxu0 %v1570
        %1598 = vmatpush.msra.mxu0 %v1569
        %1599 = vmatpush.msra.mxu0 %v1568
        %1600 = vmatmul.f32.gmra.mxu0 %v1535
        %v1601 = vpop.f32.mrf.mxu0
        %v1602 = vadd.f32 0.0, %v1601
        %1603 = vmatmul.f32.gmra.mxu0 %v1536
        %v1604 = vpop.f32.mrf.mxu0
        %v1605 = vadd.f32 0.0, %v1604
        %1606 = vmatmul.f32.gmra.mxu0 %v1537
        %v1607 = vpop.f32.mrf.mxu0
        %v1608 = vadd.f32 0.0, %v1607
        %1609 = vmatmul.f32.gmra.mxu0 %v1538
        %v1610 = vpop.f32.mrf.mxu0
        %v1611 = vadd.f32 0.0, %v1610
        %1612 = vmatmul.f32.gmra.mxu0 %v1539
        %v1613 = vpop.f32.mrf.mxu0
        %v1614 = vadd.f32 0.0, %v1613
        %1615 = vmatmul.f32.gmra.mxu0 %v1540
        %v1616 = vpop.f32.mrf.mxu0
        %v1617 = vadd.f32 0.0, %v1616
        %1618 = vmatmul.f32.gmra.mxu0 %v1541
        %v1619 = vpop.f32.mrf.mxu0
        %v1620 = vadd.f32 0.0, %v1619
        %1621 = vmatmul.f32.gmra.mxu0 %v1542
        %v1622 = vpop.f32.mrf.mxu0
        %v1623 = vadd.f32 0.0, %v1622
        %1624 = vmatmul.f32.gmra.mxu0 %v1543
        %v1625 = vpop.f32.mrf.mxu0
        %v1626 = vadd.f32 0.0, %v1625
        %1627 = vmatmul.f32.gmra.mxu0 %v1544
        %v1628 = vpop.f32.mrf.mxu0
        %v1629 = vadd.f32 0.0, %v1628
        %1630 = vmatmul.f32.gmra.mxu0 %v1545
        %v1631 = vpop.f32.mrf.mxu0
        %v1632 = vadd.f32 0.0, %v1631
        %1633 = vmatmul.f32.gmra.mxu0 %v1546
        %v1634 = vpop.f32.mrf.mxu0
        %v1635 = vadd.f32 0.0, %v1634
        %1636 = vmatmul.f32.gmra.mxu0 %v1547
        %v1637 = vpop.f32.mrf.mxu0
        %v1638 = vadd.f32 0.0, %v1637
        %1639 = vmatmul.f32.gmra.mxu0 %v1548
        %v1640 = vpop.f32.mrf.mxu0
        %v1641 = vadd.f32 0.0, %v1640
        %1642 = vmatmul.f32.gmra.mxu0 %v1549
        %v1643 = vpop.f32.mrf.mxu0
        %v1644 = vadd.f32 0.0, %v1643
        %1645 = vmatmul.f32.gmra.mxu0 %v1550
        %v1646 = vpop.f32.mrf.mxu0
        %v1647 = vadd.f32 0.0, %v1646
        %1648 = vmatmul.f32.gmra.mxu0 %v1551
        %v1649 = vpop.f32.mrf.mxu0
        %v1650 = vadd.f32 0.0, %v1649
        %1651 = vmatmul.f32.gmra.mxu0 %v1552
        %v1652 = vpop.f32.mrf.mxu0
        %v1653 = vadd.f32 0.0, %v1652
        %1654 = vmatmul.f32.gmra.mxu0 %v1553
        %v1655 = vpop.f32.mrf.mxu0
        %v1656 = vadd.f32 0.0, %v1655
        %1657 = vmatmul.f32.gmra.mxu0 %v1554
        %v1658 = vpop.f32.mrf.mxu0
        %v1659 = vadd.f32 0.0, %v1658
        %1660 = vmatmul.f32.gmra.mxu0 %v1555
        %v1661 = vpop.f32.mrf.mxu0
        %v1662 = vadd.f32 0.0, %v1661
        %1663 = vmatmul.f32.gmra.mxu0 %v1556
        %v1664 = vpop.f32.mrf.mxu0
        %v1665 = vadd.f32 0.0, %v1664
        %1666 = vmatmul.f32.gmra.mxu0 %v1557
        %v1667 = vpop.f32.mrf.mxu0
        %v1668 = vadd.f32 0.0, %v1667
        %1669 = vmatmul.f32.gmra.mxu0 %v1558
        %v1670 = vpop.f32.mrf.mxu0
        %v1671 = vadd.f32 0.0, %v1670
        %1672 = vmatmul.f32.gmra.mxu0 %v1559
        %v1673 = vpop.f32.mrf.mxu0
        %v1674 = vadd.f32 0.0, %v1673
        %1675 = vmatmul.f32.gmra.mxu0 %v1560
        %v1676 = vpop.f32.mrf.mxu0
        %v1677 = vadd.f32 0.0, %v1676
        %1678 = vmatmul.f32.gmra.mxu0 %v1561
        %v1679 = vpop.f32.mrf.mxu0
        %v1680 = vadd.f32 0.0, %v1679
        %1681 = vmatmul.f32.gmra.mxu0 %v1562
        %v1682 = vpop.f32.mrf.mxu0
        %v1683 = vadd.f32 0.0, %v1682
        %1684 = vmatmul.f32.gmra.mxu0 %v1563
        %v1685 = vpop.f32.mrf.mxu0
        %v1686 = vadd.f32 0.0, %v1685
        %1687 = vmatmul.f32.gmra.mxu0 %v1564
        %v1688 = vpop.f32.mrf.mxu0
        %v1689 = vadd.f32 0.0, %v1688
        %1690 = vmatmul.f32.gmra.mxu0 %v1565
        %v1691 = vpop.f32.mrf.mxu0
        %v1692 = vadd.f32 0.0, %v1691
        %1693 = vmatmul.f32.gmra.mxu0 %v1566
        %v1694 = vpop.f32.mrf.mxu0
        %v1695 = vadd.f32 0.0, %v1694
        %1696 = vdwg.mxu0
        %v1697 = vadd.f32 %v1503, %v1602
        %v1698 = vadd.f32 %v1504, %v1605
        %v1699 = vadd.f32 %v1505, %v1608
        %v1700 = vadd.f32 %v1506, %v1611
        %v1701 = vadd.f32 %v1507, %v1614
        %v1702 = vadd.f32 %v1508, %v1617
        %v1703 = vadd.f32 %v1509, %v1620
        %v1704 = vadd.f32 %v1510, %v1623
        %v1705 = vadd.f32 %v1511, %v1626
        %v1706 = vadd.f32 %v1512, %v1629
        %v1707 = vadd.f32 %v1513, %v1632
        %v1708 = vadd.f32 %v1514, %v1635
        %v1709 = vadd.f32 %v1515, %v1638
        %v1710 = vadd.f32 %v1516, %v1641
        %v1711 = vadd.f32 %v1517, %v1644
        %v1712 = vadd.f32 %v1518, %v1647
        %v1713 = vadd.f32 %v1519, %v1650
        %v1714 = vadd.f32 %v1520, %v1653
        %v1715 = vadd.f32 %v1521, %v1656
        %v1716 = vadd.f32 %v1522, %v1659
        %v1717 = vadd.f32 %v1523, %v1662
        %v1718 = vadd.f32 %v1524, %v1665
        %v1719 = vadd.f32 %v1525, %v1668
        %v1720 = vadd.f32 %v1526, %v1671
        %v1721 = vadd.f32 %v1527, %v1674
        %v1722 = vadd.f32 %v1528, %v1677
        %v1723 = vadd.f32 %v1529, %v1680
        %v1724 = vadd.f32 %v1530, %v1683
        %v1725 = vadd.f32 %v1531, %v1686
        %v1726 = vadd.f32 %v1532, %v1689
        %v1727 = vadd.f32 %v1533, %v1692
        %v1728 = vadd.f32 %v1534, %v1695
        %v1729 = vld [vmem:[%s1340 + $0x2] sm:$0xff]
        %v1730 = vld [vmem:[%s1340 + $0xa] sm:$0xff]
        %v1731 = vld [vmem:[%s1340 + $0x1a] sm:$0xff]
        %v1732 = vld [vmem:[%s1340 + $0x22] sm:$0xff]
        %v1733 = vld [vmem:[%s1340 + $0x32] sm:$0xff]
        %v1734 = vld [vmem:[%s1340 + $0x3a] sm:$0xff]
        %v1735 = vld [vmem:[%s1340 + $0x4a] sm:$0xff]
        %v1736 = vld [vmem:[%s1340 + $0x52] sm:$0xff]
        %v1737 = vld [vmem:[%s1340 + $0x62] sm:$0xff]
        %v1738 = vld [vmem:[%s1340 + $0x6a] sm:$0xff]
        %v1739 = vld [vmem:[%s1340 + $0x7a] sm:$0xff]
        %v1740 = vld [vmem:[%s1340 + $0x82] sm:$0xff]
        %v1741 = vld [vmem:[%s1340 + $0x92] sm:$0xff]
        %v1742 = vld [vmem:[%s1340 + $0x9a] sm:$0xff]
        %v1743 = vld [vmem:[%s1340 + $0xaa] sm:$0xff]
        %v1744 = vld [vmem:[%s1340 + $0xb2] sm:$0xff]
        %v1745 = vld [vmem:[%s1340 + $0xc2] sm:$0xff]
        %v1746 = vld [vmem:[%s1340 + $0xca] sm:$0xff]
        %v1747 = vld [vmem:[%s1340 + $0xda] sm:$0xff]
        %v1748 = vld [vmem:[%s1340 + $0xe2] sm:$0xff]
        %v1749 = vld [vmem:[%s1340 + $0xf2] sm:$0xff]
        %v1750 = vld [vmem:[%s1340 + $0xfa] sm:$0xff]
        %v1751 = vld [vmem:[%s1340 + $0x10a] sm:$0xff]
        %v1752 = vld [vmem:[%s1340 + $0x112] sm:$0xff]
        %v1753 = vld [vmem:[%s1340 + $0x122] sm:$0xff]
        %v1754 = vld [vmem:[%s1340 + $0x12a] sm:$0xff]
        %v1755 = vld [vmem:[%s1340 + $0x13a] sm:$0xff]
        %v1756 = vld [vmem:[%s1340 + $0x142] sm:$0xff]
        %v1757 = vld [vmem:[%s1340 + $0x152] sm:$0xff]
        %v1758 = vld [vmem:[%s1340 + $0x15a] sm:$0xff]
        %v1759 = vld [vmem:[%s1340 + $0x16a] sm:$0xff]
        %v1760 = vld [vmem:[%s1340 + $0x172] sm:$0xff]
        %s1761 = scalar_lea.vmem %s1, 1024
        %v1762 = vld [vmem:[%s1761] sm:$0xff]
        %v1763 = vld [vmem:[%s1761 + $0x8] sm:$0xff]
        %v1764 = vld [vmem:[%s1761 + $0x10] sm:$0xff]
        %v1765 = vld [vmem:[%s1761 + $0x18] sm:$0xff]
        %v1766 = vld [vmem:[%s1761 + $0x20] sm:$0xff]
        %v1767 = vld [vmem:[%s1761 + $0x28] sm:$0xff]
        %v1768 = vld [vmem:[%s1761 + $0x30] sm:$0xff]
        %v1769 = vld [vmem:[%s1761 + $0x38] sm:$0xff]
        %v1770 = vld [vmem:[%s1761 + $0x40] sm:$0xff]
        %v1771 = vld [vmem:[%s1761 + $0x48] sm:$0xff]
        %v1772 = vld [vmem:[%s1761 + $0x50] sm:$0xff]
        %v1773 = vld [vmem:[%s1761 + $0x58] sm:$0xff]
        %v1774 = vld [vmem:[%s1761 + $0x60] sm:$0xff]
        %v1775 = vld [vmem:[%s1761 + $0x68] sm:$0xff]
        %v1776 = vld [vmem:[%s1761 + $0x70] sm:$0xff]
        %v1777 = vld [vmem:[%s1761 + $0x78] sm:$0xff]
        %1778 = vmatpush.msra.mxu0 %v1777
        %1779 = vmatpush.msra.mxu0 %v1776
        %1780 = vmatpush.msra.mxu0 %v1775
        %1781 = vmatpush.msra.mxu0 %v1774
        %1782 = vmatpush.msra.mxu0 %v1773
        %1783 = vmatpush.msra.mxu0 %v1772
        %1784 = vmatpush.msra.mxu0 %v1771
        %1785 = vmatpush.msra.mxu0 %v1770
        %1786 = vmatpush.msra.mxu0 %v1769
        %1787 = vmatpush.msra.mxu0 %v1768
        %1788 = vmatpush.msra.mxu0 %v1767
        %1789 = vmatpush.msra.mxu0 %v1766
        %1790 = vmatpush.msra.mxu0 %v1765
        %1791 = vmatpush.msra.mxu0 %v1764
        %1792 = vmatpush.msra.mxu0 %v1763
        %1793 = vmatpush.msra.mxu0 %v1762
        %1794 = vmatmul.f32.gmra.mxu0 %v1729
        %v1795 = vpop.f32.mrf.mxu0
        %v1796 = vadd.f32 0.0, %v1795
        %1797 = vmatmul.f32.gmra.mxu0 %v1730
        %v1798 = vpop.f32.mrf.mxu0
        %v1799 = vadd.f32 0.0, %v1798
        %1800 = vmatmul.f32.gmra.mxu0 %v1731
        %v1801 = vpop.f32.mrf.mxu0
        %v1802 = vadd.f32 0.0, %v1801
        %1803 = vmatmul.f32.gmra.mxu0 %v1732
        %v1804 = vpop.f32.mrf.mxu0
        %v1805 = vadd.f32 0.0, %v1804
        %1806 = vmatmul.f32.gmra.mxu0 %v1733
        %v1807 = vpop.f32.mrf.mxu0
        %v1808 = vadd.f32 0.0, %v1807
        %1809 = vmatmul.f32.gmra.mxu0 %v1734
        %v1810 = vpop.f32.mrf.mxu0
        %v1811 = vadd.f32 0.0, %v1810
        %1812 = vmatmul.f32.gmra.mxu0 %v1735
        %v1813 = vpop.f32.mrf.mxu0
        %v1814 = vadd.f32 0.0, %v1813
        %1815 = vmatmul.f32.gmra.mxu0 %v1736
        %v1816 = vpop.f32.mrf.mxu0
        %v1817 = vadd.f32 0.0, %v1816
        %1818 = vmatmul.f32.gmra.mxu0 %v1737
        %v1819 = vpop.f32.mrf.mxu0
        %v1820 = vadd.f32 0.0, %v1819
        %1821 = vmatmul.f32.gmra.mxu0 %v1738
        %v1822 = vpop.f32.mrf.mxu0
        %v1823 = vadd.f32 0.0, %v1822
        %1824 = vmatmul.f32.gmra.mxu0 %v1739
        %v1825 = vpop.f32.mrf.mxu0
        %v1826 = vadd.f32 0.0, %v1825
        %1827 = vmatmul.f32.gmra.mxu0 %v1740
        %v1828 = vpop.f32.mrf.mxu0
        %v1829 = vadd.f32 0.0, %v1828
        %1830 = vmatmul.f32.gmra.mxu0 %v1741
        %v1831 = vpop.f32.mrf.mxu0
        %v1832 = vadd.f32 0.0, %v1831
        %1833 = vmatmul.f32.gmra.mxu0 %v1742
        %v1834 = vpop.f32.mrf.mxu0
        %v1835 = vadd.f32 0.0, %v1834
        %1836 = vmatmul.f32.gmra.mxu0 %v1743
        %v1837 = vpop.f32.mrf.mxu0
        %v1838 = vadd.f32 0.0, %v1837
        %1839 = vmatmul.f32.gmra.mxu0 %v1744
        %v1840 = vpop.f32.mrf.mxu0
        %v1841 = vadd.f32 0.0, %v1840
        %1842 = vmatmul.f32.gmra.mxu0 %v1745
        %v1843 = vpop.f32.mrf.mxu0
        %v1844 = vadd.f32 0.0, %v1843
        %1845 = vmatmul.f32.gmra.mxu0 %v1746
        %v1846 = vpop.f32.mrf.mxu0
        %v1847 = vadd.f32 0.0, %v1846
        %1848 = vmatmul.f32.gmra.mxu0 %v1747
        %v1849 = vpop.f32.mrf.mxu0
        %v1850 = vadd.f32 0.0, %v1849
        %1851 = vmatmul.f32.gmra.mxu0 %v1748
        %v1852 = vpop.f32.mrf.mxu0
        %v1853 = vadd.f32 0.0, %v1852
        %1854 = vmatmul.f32.gmra.mxu0 %v1749
        %v1855 = vpop.f32.mrf.mxu0
        %v1856 = vadd.f32 0.0, %v1855
        %1857 = vmatmul.f32.gmra.mxu0 %v1750
        %v1858 = vpop.f32.mrf.mxu0
        %v1859 = vadd.f32 0.0, %v1858
        %1860 = vmatmul.f32.gmra.mxu0 %v1751
        %v1861 = vpop.f32.mrf.mxu0
        %v1862 = vadd.f32 0.0, %v1861
        %1863 = vmatmul.f32.gmra.mxu0 %v1752
        %v1864 = vpop.f32.mrf.mxu0
        %v1865 = vadd.f32 0.0, %v1864
        %1866 = vmatmul.f32.gmra.mxu0 %v1753
        %v1867 = vpop.f32.mrf.mxu0
        %v1868 = vadd.f32 0.0, %v1867
        %1869 = vmatmul.f32.gmra.mxu0 %v1754
        %v1870 = vpop.f32.mrf.mxu0
        %v1871 = vadd.f32 0.0, %v1870
        %1872 = vmatmul.f32.gmra.mxu0 %v1755
        %v1873 = vpop.f32.mrf.mxu0
        %v1874 = vadd.f32 0.0, %v1873
        %1875 = vmatmul.f32.gmra.mxu0 %v1756
        %v1876 = vpop.f32.mrf.mxu0
        %v1877 = vadd.f32 0.0, %v1876
        %1878 = vmatmul.f32.gmra.mxu0 %v1757
        %v1879 = vpop.f32.mrf.mxu0
        %v1880 = vadd.f32 0.0, %v1879
        %1881 = vmatmul.f32.gmra.mxu0 %v1758
        %v1882 = vpop.f32.mrf.mxu0
        %v1883 = vadd.f32 0.0, %v1882
        %1884 = vmatmul.f32.gmra.mxu0 %v1759
        %v1885 = vpop.f32.mrf.mxu0
        %v1886 = vadd.f32 0.0, %v1885
        %1887 = vmatmul.f32.gmra.mxu0 %v1760
        %v1888 = vpop.f32.mrf.mxu0
        %v1889 = vadd.f32 0.0, %v1888
        %1890 = vdwg.mxu0
        %v1891 = vadd.f32 %v1697, %v1796
        %v1892 = vadd.f32 %v1698, %v1799
        %v1893 = vadd.f32 %v1699, %v1802
        %v1894 = vadd.f32 %v1700, %v1805
        %v1895 = vadd.f32 %v1701, %v1808
        %v1896 = vadd.f32 %v1702, %v1811
        %v1897 = vadd.f32 %v1703, %v1814
        %v1898 = vadd.f32 %v1704, %v1817
        %v1899 = vadd.f32 %v1705, %v1820
        %v1900 = vadd.f32 %v1706, %v1823
        %v1901 = vadd.f32 %v1707, %v1826
        %v1902 = vadd.f32 %v1708, %v1829
        %v1903 = vadd.f32 %v1709, %v1832
        %v1904 = vadd.f32 %v1710, %v1835
        %v1905 = vadd.f32 %v1711, %v1838
        %v1906 = vadd.f32 %v1712, %v1841
        %v1907 = vadd.f32 %v1713, %v1844
        %v1908 = vadd.f32 %v1714, %v1847
        %v1909 = vadd.f32 %v1715, %v1850
        %v1910 = vadd.f32 %v1716, %v1853
        %v1911 = vadd.f32 %v1717, %v1856
        %v1912 = vadd.f32 %v1718, %v1859
        %v1913 = vadd.f32 %v1719, %v1862
        %v1914 = vadd.f32 %v1720, %v1865
        %v1915 = vadd.f32 %v1721, %v1868
        %v1916 = vadd.f32 %v1722, %v1871
        %v1917 = vadd.f32 %v1723, %v1874
        %v1918 = vadd.f32 %v1724, %v1877
        %v1919 = vadd.f32 %v1725, %v1880
        %v1920 = vadd.f32 %v1726, %v1883
        %v1921 = vadd.f32 %v1727, %v1886
        %v1922 = vadd.f32 %v1728, %v1889
        %v1923 = vld [vmem:[%s2] sm:$0x1]
        %v1925 = vperm.slane %v1923, 0
        %v1927 = vadd.f32 %v1891, %v1925
        %v1928 = vadd.f32 %v1892, %v1925
        %v1929 = vadd.f32 %v1893, %v1925
        %v1930 = vadd.f32 %v1894, %v1925
        %v1931 = vadd.f32 %v1895, %v1925
        %v1932 = vadd.f32 %v1896, %v1925
        %v1933 = vadd.f32 %v1897, %v1925
        %v1934 = vadd.f32 %v1898, %v1925
        %v1935 = vadd.f32 %v1899, %v1925
        %v1936 = vadd.f32 %v1900, %v1925
        %v1937 = vadd.f32 %v1901, %v1925
        %v1938 = vadd.f32 %v1902, %v1925
        %v1939 = vadd.f32 %v1903, %v1925
        %v1940 = vadd.f32 %v1904, %v1925
        %v1941 = vadd.f32 %v1905, %v1925
        %v1942 = vadd.f32 %v1906, %v1925
        %v1943 = vadd.f32 %v1907, %v1925
        %v1944 = vadd.f32 %v1908, %v1925
        %v1945 = vadd.f32 %v1909, %v1925
        %v1946 = vadd.f32 %v1910, %v1925
        %v1947 = vadd.f32 %v1911, %v1925
        %v1948 = vadd.f32 %v1912, %v1925
        %v1949 = vadd.f32 %v1913, %v1925
        %v1950 = vadd.f32 %v1914, %v1925
        %v1951 = vadd.f32 %v1915, %v1925
        %v1952 = vadd.f32 %v1916, %v1925
        %v1953 = vadd.f32 %v1917, %v1925
        %v1954 = vadd.f32 %v1918, %v1925
        %v1955 = vadd.f32 %v1919, %v1925
        %v1956 = vadd.f32 %v1920, %v1925
        %v1957 = vadd.f32 %v1921, %v1925
        %v1958 = vadd.f32 %v1922, %v1925
        %v1959 = vmax.f32 %v1927, 0.0
        %v1960 = vmax.f32 %v1928, 0.0
        %v1961 = vmax.f32 %v1929, 0.0
        %v1962 = vmax.f32 %v1930, 0.0
        %v1963 = vmax.f32 %v1931, 0.0
        %v1964 = vmax.f32 %v1932, 0.0
        %v1965 = vmax.f32 %v1933, 0.0
        %v1966 = vmax.f32 %v1934, 0.0
        %v1967 = vmax.f32 %v1935, 0.0
        %v1968 = vmax.f32 %v1936, 0.0
        %v1969 = vmax.f32 %v1937, 0.0
        %v1970 = vmax.f32 %v1938, 0.0
        %v1971 = vmax.f32 %v1939, 0.0
        %v1972 = vmax.f32 %v1940, 0.0
        %v1973 = vmax.f32 %v1941, 0.0
        %v1974 = vmax.f32 %v1942, 0.0
        %v1975 = vmax.f32 %v1943, 0.0
        %v1976 = vmax.f32 %v1944, 0.0
        %v1977 = vmax.f32 %v1945, 0.0
        %v1978 = vmax.f32 %v1946, 0.0
        %v1979 = vmax.f32 %v1947, 0.0
        %v1980 = vmax.f32 %v1948, 0.0
        %v1981 = vmax.f32 %v1949, 0.0
        %v1982 = vmax.f32 %v1950, 0.0
        %v1983 = vmax.f32 %v1951, 0.0
        %v1984 = vmax.f32 %v1952, 0.0
        %v1985 = vmax.f32 %v1953, 0.0
        %v1986 = vmax.f32 %v1954, 0.0
        %v1987 = vmax.f32 %v1955, 0.0
        %v1988 = vmax.f32 %v1956, 0.0
        %v1989 = vmax.f32 %v1957, 0.0
        %v1990 = vmax.f32 %v1958, 0.0
        %1991 = vst [vmem:[#allocation2] sm:$0xff] 0.0
        %1992 = vst [vmem:[#allocation2 + $0x8] sm:$0xff] 0.0
        %1993 = vst [vmem:[#allocation2 + $0x10] sm:$0x3] 0.0
        %1994 = vst [vmem:[#allocation2 + $0x18] sm:$0xff] 0.0
        %1995 = vst [vmem:[#allocation2 + $0x20] sm:$0xff] 0.0
        %1996 = vst [vmem:[#allocation2 + $0x28] sm:$0x3] 0.0
        %1997 = vst [vmem:[#allocation2 + $0x30] sm:$0xff] 0.0
        %1998 = vst [vmem:[#allocation2 + $0x38] sm:$0xff] 0.0
        %1999 = vst [vmem:[#allocation2 + $0x40] sm:$0x3] 0.0
        %2000 = vst [vmem:[#allocation2 + $0x48] sm:$0xff] 0.0
        %2001 = vst [vmem:[#allocation2 + $0x50] sm:$0xff] 0.0
        %2002 = vst [vmem:[#allocation2 + $0x58] sm:$0x3] 0.0
        %2003 = vst [vmem:[#allocation2 + $0x60] sm:$0xff] 0.0
        %2004 = vst [vmem:[#allocation2 + $0x68] sm:$0xff] 0.0
        %2005 = vst [vmem:[#allocation2 + $0x70] sm:$0x3] 0.0
        %2006 = vst [vmem:[#allocation2 + $0x78] sm:$0xff] 0.0
        %2007 = vst [vmem:[#allocation2 + $0x80] sm:$0xff] 0.0
        %2008 = vst [vmem:[#allocation2 + $0x88] sm:$0x3] 0.0
        %2009 = vst [vmem:[#allocation2 + $0x90] sm:$0xff] 0.0
        %2010 = vst [vmem:[#allocation2 + $0x98] sm:$0xff] 0.0
        %2011 = vst [vmem:[#allocation2 + $0xa0] sm:$0x3] 0.0
        %2012 = vst [vmem:[#allocation2 + $0xa8] sm:$0xff] 0.0
        %2013 = vst [vmem:[#allocation2 + $0xb0] sm:$0xff] 0.0
        %2014 = vst [vmem:[#allocation2 + $0xb8] sm:$0x3] 0.0
        %2015 = vst [vmem:[#allocation2 + $0xc0] sm:$0xff] 0.0
        %2016 = vst [vmem:[#allocation2 + $0xc8] sm:$0xff] 0.0
        %2017 = vst [vmem:[#allocation2 + $0xd0] sm:$0x3] 0.0
        %2018 = vst [vmem:[#allocation2 + $0xd8] sm:$0xff] 0.0
        %2019 = vst [vmem:[#allocation2 + $0xe0] sm:$0xff] 0.0
        %2020 = vst [vmem:[#allocation2 + $0xe8] sm:$0x3] 0.0
        %2021 = vst [vmem:[#allocation2 + $0xf0] sm:$0xff] 0.0
        %2022 = vst [vmem:[#allocation2 + $0xf8] sm:$0xff] 0.0
        %2023 = vst [vmem:[#allocation2 + $0x100] sm:$0x3] 0.0
        %2024 = vst [vmem:[#allocation2 + $0x108] sm:$0xff] 0.0
        %2025 = vst [vmem:[#allocation2 + $0x110] sm:$0xff] 0.0
        %2026 = vst [vmem:[#allocation2 + $0x118] sm:$0x3] 0.0
        %2027 = vst [vmem:[#allocation2 + $0x120] sm:$0xff] 0.0
        %2028 = vst [vmem:[#allocation2 + $0x128] sm:$0xff] 0.0
        %2029 = vst [vmem:[#allocation2 + $0x130] sm:$0x3] 0.0
        %2030 = vst [vmem:[#allocation2 + $0x138] sm:$0xff] 0.0
        %2031 = vst [vmem:[#allocation2 + $0x140] sm:$0xff] 0.0
        %2032 = vst [vmem:[#allocation2 + $0x148] sm:$0x3] 0.0
        %2033 = vst [vmem:[#allocation2 + $0x150] sm:$0xff] 0.0
        %2034 = vst [vmem:[#allocation2 + $0x158] sm:$0xff] 0.0
        %2035 = vst [vmem:[#allocation2 + $0x160] sm:$0x3] 0.0
        %2036 = vst [vmem:[#allocation2 + $0x168] sm:$0xff] 0.0
        %2037 = vst [vmem:[#allocation2 + $0x170] sm:$0xff] 0.0
        %2038 = vst [vmem:[#allocation2 + $0x178] sm:$0x3] 0.0
        %2039 = vst [vmem:[#allocation2 + $0x180] sm:$0xff] 0.0
        %2040 = vst [vmem:[#allocation2 + $0x188] sm:$0xff] 0.0
        %2041 = vst [vmem:[#allocation2 + $0x190] sm:$0x3] 0.0
        %2042 = vst [vmem:[#allocation2 + $0x198] sm:$0xff] 0.0
        %2043 = vst [vmem:[#allocation2 + $0x1a0] sm:$0xff] 0.0
        %2044 = vst [vmem:[#allocation2 + $0x1a8] sm:$0x3] 0.0
        %s2045 = scalar_lea.vmem [#allocation2], 24
        %2046 = vst [vmem:[%s2045 + $0x1] sm:$0xff] %v1959
        %2047 = vst [vmem:[%s2045 + $0x9] sm:$0xff] %v1960
        %2048 = vst [vmem:[%s2045 + $0x19] sm:$0xff] %v1961
        %2049 = vst [vmem:[%s2045 + $0x21] sm:$0xff] %v1962
        %2050 = vst [vmem:[%s2045 + $0x31] sm:$0xff] %v1963
        %2051 = vst [vmem:[%s2045 + $0x39] sm:$0xff] %v1964
        %2052 = vst [vmem:[%s2045 + $0x49] sm:$0xff] %v1965
        %2053 = vst [vmem:[%s2045 + $0x51] sm:$0xff] %v1966
        %2054 = vst [vmem:[%s2045 + $0x61] sm:$0xff] %v1967
        %2055 = vst [vmem:[%s2045 + $0x69] sm:$0xff] %v1968
        %2056 = vst [vmem:[%s2045 + $0x79] sm:$0xff] %v1969
        %2057 = vst [vmem:[%s2045 + $0x81] sm:$0xff] %v1970
        %2058 = vst [vmem:[%s2045 + $0x91] sm:$0xff] %v1971
        %2059 = vst [vmem:[%s2045 + $0x99] sm:$0xff] %v1972
        %2060 = vst [vmem:[%s2045 + $0xa9] sm:$0xff] %v1973
        %2061 = vst [vmem:[%s2045 + $0xb1] sm:$0xff] %v1974
        %2062 = vst [vmem:[%s2045 + $0xc1] sm:$0xff] %v1975
        %2063 = vst [vmem:[%s2045 + $0xc9] sm:$0xff] %v1976
        %2064 = vst [vmem:[%s2045 + $0xd9] sm:$0xff] %v1977
        %2065 = vst [vmem:[%s2045 + $0xe1] sm:$0xff] %v1978
        %2066 = vst [vmem:[%s2045 + $0xf1] sm:$0xff] %v1979
        %2067 = vst [vmem:[%s2045 + $0xf9] sm:$0xff] %v1980
        %2068 = vst [vmem:[%s2045 + $0x109] sm:$0xff] %v1981
        %2069 = vst [vmem:[%s2045 + $0x111] sm:$0xff] %v1982
        %2070 = vst [vmem:[%s2045 + $0x121] sm:$0xff] %v1983
        %2071 = vst [vmem:[%s2045 + $0x129] sm:$0xff] %v1984
        %2072 = vst [vmem:[%s2045 + $0x139] sm:$0xff] %v1985
        %2073 = vst [vmem:[%s2045 + $0x141] sm:$0xff] %v1986
        %2074 = vst [vmem:[%s2045 + $0x151] sm:$0xff] %v1987
        %2075 = vst [vmem:[%s2045 + $0x159] sm:$0xff] %v1988
        %2076 = vst [vmem:[%s2045 + $0x169] sm:$0xff] %v1989
        %2077 = vst [vmem:[%s2045 + $0x171] sm:$0xff] %v1990
        %v2078 = vld [vmem:[#allocation2] sm:$0xff]
        %v2079 = vld [vmem:[#allocation2 + $0x8] sm:$0xff]
        %v2080 = vld [vmem:[#allocation2 + $0x18] sm:$0xff]
        %v2081 = vld [vmem:[#allocation2 + $0x20] sm:$0xff]
        %v2082 = vld [vmem:[#allocation2 + $0x30] sm:$0xff]
        %v2083 = vld [vmem:[#allocation2 + $0x38] sm:$0xff]
        %v2084 = vld [vmem:[#allocation2 + $0x48] sm:$0xff]
        %v2085 = vld [vmem:[#allocation2 + $0x50] sm:$0xff]
        %v2086 = vld [vmem:[#allocation2 + $0x60] sm:$0xff]
        %v2087 = vld [vmem:[#allocation2 + $0x68] sm:$0xff]
        %v2088 = vld [vmem:[#allocation2 + $0x78] sm:$0xff]
        %v2089 = vld [vmem:[#allocation2 + $0x80] sm:$0xff]
        %v2090 = vld [vmem:[#allocation2 + $0x90] sm:$0xff]
        %v2091 = vld [vmem:[#allocation2 + $0x98] sm:$0xff]
        %v2092 = vld [vmem:[#allocation2 + $0xa8] sm:$0xff]
        %v2093 = vld [vmem:[#allocation2 + $0xb0] sm:$0xff]
        %v2094 = vld [vmem:[#allocation2 + $0xc0] sm:$0xff]
        %v2095 = vld [vmem:[#allocation2 + $0xc8] sm:$0xff]
        %v2096 = vld [vmem:[#allocation2 + $0xd8] sm:$0xff]
        %v2097 = vld [vmem:[#allocation2 + $0xe0] sm:$0xff]
        %v2098 = vld [vmem:[#allocation2 + $0xf0] sm:$0xff]
        %v2099 = vld [vmem:[#allocation2 + $0xf8] sm:$0xff]
        %v2100 = vld [vmem:[#allocation2 + $0x108] sm:$0xff]
        %v2101 = vld [vmem:[#allocation2 + $0x110] sm:$0xff]
        %v2102 = vld [vmem:[#allocation2 + $0x120] sm:$0xff]
        %v2103 = vld [vmem:[#allocation2 + $0x128] sm:$0xff]
        %v2104 = vld [vmem:[#allocation2 + $0x138] sm:$0xff]
        %v2105 = vld [vmem:[#allocation2 + $0x140] sm:$0xff]
        %v2106 = vld [vmem:[#allocation2 + $0x150] sm:$0xff]
        %v2107 = vld [vmem:[#allocation2 + $0x158] sm:$0xff]
        %v2108 = vld [vmem:[#allocation2 + $0x168] sm:$0xff]
        %v2109 = vld [vmem:[#allocation2 + $0x170] sm:$0xff]
        %v2110 = vld [vmem:[#allocation3] sm:$0xff]
        %v2111 = vld [vmem:[#allocation3 + $0x8] sm:$0xff]
        %v2112 = vld [vmem:[#allocation3 + $0x10] sm:$0xff]
        %v2113 = vld [vmem:[#allocation3 + $0x18] sm:$0xff]
        %v2114 = vld [vmem:[#allocation3 + $0x20] sm:$0xff]
        %v2115 = vld [vmem:[#allocation3 + $0x28] sm:$0xff]
        %v2116 = vld [vmem:[#allocation3 + $0x30] sm:$0xff]
        %v2117 = vld [vmem:[#allocation3 + $0x38] sm:$0xff]
        %v2118 = vld [vmem:[#allocation3 + $0x40] sm:$0xff]
        %v2119 = vld [vmem:[#allocation3 + $0x48] sm:$0xff]
        %v2120 = vld [vmem:[#allocation3 + $0x50] sm:$0xff]
        %v2121 = vld [vmem:[#allocation3 + $0x58] sm:$0xff]
        %v2122 = vld [vmem:[#allocation3 + $0x60] sm:$0xff]
        %v2123 = vld [vmem:[#allocation3 + $0x68] sm:$0xff]
        %v2124 = vld [vmem:[#allocation3 + $0x70] sm:$0xff]
        %v2125 = vld [vmem:[#allocation3 + $0x78] sm:$0xff]
        %v2126 = vld [vmem:[#allocation2 + $0x1] sm:$0xff]
        %v2127 = vld [vmem:[#allocation2 + $0x9] sm:$0xff]
        %v2128 = vld [vmem:[#allocation2 + $0x19] sm:$0xff]
        %v2129 = vld [vmem:[#allocation2 + $0x21] sm:$0xff]
        %v2130 = vld [vmem:[#allocation2 + $0x31] sm:$0xff]
        %v2131 = vld [vmem:[#allocation2 + $0x39] sm:$0xff]
        %v2132 = vld [vmem:[#allocation2 + $0x49] sm:$0xff]
        %v2133 = vld [vmem:[#allocation2 + $0x51] sm:$0xff]
        %v2134 = vld [vmem:[#allocation2 + $0x61] sm:$0xff]
        %v2135 = vld [vmem:[#allocation2 + $0x69] sm:$0xff]
        %v2136 = vld [vmem:[#allocation2 + $0x79] sm:$0xff]
        %v2137 = vld [vmem:[#allocation2 + $0x81] sm:$0xff]
        %v2138 = vld [vmem:[#allocation2 + $0x91] sm:$0xff]
        %v2139 = vld [vmem:[#allocation2 + $0x99] sm:$0xff]
        %v2140 = vld [vmem:[#allocation2 + $0xa9] sm:$0xff]
        %v2141 = vld [vmem:[#allocation2 + $0xb1] sm:$0xff]
        %v2142 = vld [vmem:[#allocation2 + $0xc1] sm:$0xff]
        %v2143 = vld [vmem:[#allocation2 + $0xc9] sm:$0xff]
        %v2144 = vld [vmem:[#allocation2 + $0xd9] sm:$0xff]
        %v2145 = vld [vmem:[#allocation2 + $0xe1] sm:$0xff]
        %v2146 = vld [vmem:[#allocation2 + $0xf1] sm:$0xff]
        %v2147 = vld [vmem:[#allocation2 + $0xf9] sm:$0xff]
        %v2148 = vld [vmem:[#allocation2 + $0x109] sm:$0xff]
        %v2149 = vld [vmem:[#allocation2 + $0x111] sm:$0xff]
        %v2150 = vld [vmem:[#allocation2 + $0x121] sm:$0xff]
        %v2151 = vld [vmem:[#allocation2 + $0x129] sm:$0xff]
        %v2152 = vld [vmem:[#allocation2 + $0x139] sm:$0xff]
        %v2153 = vld [vmem:[#allocation2 + $0x141] sm:$0xff]
        %v2154 = vld [vmem:[#allocation2 + $0x151] sm:$0xff]
        %v2155 = vld [vmem:[#allocation2 + $0x159] sm:$0xff]
        %v2156 = vld [vmem:[#allocation2 + $0x169] sm:$0xff]
        %v2157 = vld [vmem:[#allocation2 + $0x171] sm:$0xff]
        %s2158 = scalar_lea.vmem [#allocation3], 128
        %v2159 = vld [vmem:[%s2158] sm:$0xff]
        %v2160 = vld [vmem:[%s2158 + $0x8] sm:$0xff]
        %v2161 = vld [vmem:[%s2158 + $0x10] sm:$0xff]
        %v2162 = vld [vmem:[%s2158 + $0x18] sm:$0xff]
        %v2163 = vld [vmem:[%s2158 + $0x20] sm:$0xff]
        %v2164 = vld [vmem:[%s2158 + $0x28] sm:$0xff]
        %v2165 = vld [vmem:[%s2158 + $0x30] sm:$0xff]
        %v2166 = vld [vmem:[%s2158 + $0x38] sm:$0xff]
        %v2167 = vld [vmem:[%s2158 + $0x40] sm:$0xff]
        %v2168 = vld [vmem:[%s2158 + $0x48] sm:$0xff]
        %v2169 = vld [vmem:[%s2158 + $0x50] sm:$0xff]
        %v2170 = vld [vmem:[%s2158 + $0x58] sm:$0xff]
        %v2171 = vld [vmem:[%s2158 + $0x60] sm:$0xff]
        %v2172 = vld [vmem:[%s2158 + $0x68] sm:$0xff]
        %v2173 = vld [vmem:[%s2158 + $0x70] sm:$0xff]
        %v2174 = vld [vmem:[%s2158 + $0x78] sm:$0xff]
        %2175 = vmatpush.msra.mxu0 %v2174
        %2176 = vmatpush.msra.mxu0 %v2173
        %2177 = vmatpush.msra.mxu0 %v2172
        %2178 = vmatpush.msra.mxu0 %v2171
        %2179 = vmatpush.msra.mxu0 %v2170
        %2180 = vmatpush.msra.mxu0 %v2169
        %2181 = vmatpush.msra.mxu0 %v2168
        %2182 = vmatpush.msra.mxu0 %v2167
        %2183 = vmatpush.msra.mxu0 %v2166
        %2184 = vmatpush.msra.mxu0 %v2165
        %2185 = vmatpush.msra.mxu0 %v2164
        %2186 = vmatpush.msra.mxu0 %v2163
        %2187 = vmatpush.msra.mxu0 %v2162
        %2188 = vmatpush.msra.mxu0 %v2161
        %2189 = vmatpush.msra.mxu0 %v2160
        %2190 = vmatpush.msra.mxu0 %v2159
        %2191 = vmatmul.f32.gmra.mxu0 %v2126
        %v2192 = vpop.f32.mrf.mxu0
        %v2193 = vadd.f32 0.0, %v2192
        %2194 = vmatmul.f32.gmra.mxu0 %v2127
        %v2195 = vpop.f32.mrf.mxu0
        %v2196 = vadd.f32 0.0, %v2195
        %2197 = vmatmul.f32.gmra.mxu0 %v2128
        %v2198 = vpop.f32.mrf.mxu0
        %v2199 = vadd.f32 0.0, %v2198
        %2200 = vmatmul.f32.gmra.mxu0 %v2129
        %v2201 = vpop.f32.mrf.mxu0
        %v2202 = vadd.f32 0.0, %v2201
        %2203 = vmatmul.f32.gmra.mxu0 %v2130
        %v2204 = vpop.f32.mrf.mxu0
        %v2205 = vadd.f32 0.0, %v2204
        %2206 = vmatmul.f32.gmra.mxu0 %v2131
        %v2207 = vpop.f32.mrf.mxu0
        %v2208 = vadd.f32 0.0, %v2207
        %2209 = vmatmul.f32.gmra.mxu0 %v2132
        %v2210 = vpop.f32.mrf.mxu0
        %v2211 = vadd.f32 0.0, %v2210
        %2212 = vmatmul.f32.gmra.mxu0 %v2133
        %v2213 = vpop.f32.mrf.mxu0
        %v2214 = vadd.f32 0.0, %v2213
        %2215 = vmatmul.f32.gmra.mxu0 %v2134
        %v2216 = vpop.f32.mrf.mxu0
        %v2217 = vadd.f32 0.0, %v2216
        %2218 = vmatmul.f32.gmra.mxu0 %v2135
        %v2219 = vpop.f32.mrf.mxu0
        %v2220 = vadd.f32 0.0, %v2219
        %2221 = vmatmul.f32.gmra.mxu0 %v2136
        %v2222 = vpop.f32.mrf.mxu0
        %v2223 = vadd.f32 0.0, %v2222
        %2224 = vmatmul.f32.gmra.mxu0 %v2137
        %v2225 = vpop.f32.mrf.mxu0
        %v2226 = vadd.f32 0.0, %v2225
        %2227 = vmatmul.f32.gmra.mxu0 %v2138
        %v2228 = vpop.f32.mrf.mxu0
        %v2229 = vadd.f32 0.0, %v2228
        %2230 = vmatmul.f32.gmra.mxu0 %v2139
        %v2231 = vpop.f32.mrf.mxu0
        %v2232 = vadd.f32 0.0, %v2231
        %2233 = vmatmul.f32.gmra.mxu0 %v2140
        %v2234 = vpop.f32.mrf.mxu0
        %v2235 = vadd.f32 0.0, %v2234
        %2236 = vmatmul.f32.gmra.mxu0 %v2141
        %v2237 = vpop.f32.mrf.mxu0
        %v2238 = vadd.f32 0.0, %v2237
        %2239 = vmatmul.f32.gmra.mxu0 %v2142
        %v2240 = vpop.f32.mrf.mxu0
        %v2241 = vadd.f32 0.0, %v2240
        %2242 = vmatmul.f32.gmra.mxu0 %v2143
        %v2243 = vpop.f32.mrf.mxu0
        %v2244 = vadd.f32 0.0, %v2243
        %2245 = vmatmul.f32.gmra.mxu0 %v2144
        %v2246 = vpop.f32.mrf.mxu0
        %v2247 = vadd.f32 0.0, %v2246
        %2248 = vmatmul.f32.gmra.mxu0 %v2145
        %v2249 = vpop.f32.mrf.mxu0
        %v2250 = vadd.f32 0.0, %v2249
        %2251 = vmatmul.f32.gmra.mxu0 %v2146
        %v2252 = vpop.f32.mrf.mxu0
        %v2253 = vadd.f32 0.0, %v2252
        %2254 = vmatmul.f32.gmra.mxu0 %v2147
        %v2255 = vpop.f32.mrf.mxu0
        %v2256 = vadd.f32 0.0, %v2255
        %2257 = vmatmul.f32.gmra.mxu0 %v2148
        %v2258 = vpop.f32.mrf.mxu0
        %v2259 = vadd.f32 0.0, %v2258
        %2260 = vmatmul.f32.gmra.mxu0 %v2149
        %v2261 = vpop.f32.mrf.mxu0
        %v2262 = vadd.f32 0.0, %v2261
        %2263 = vmatmul.f32.gmra.mxu0 %v2150
        %v2264 = vpop.f32.mrf.mxu0
        %v2265 = vadd.f32 0.0, %v2264
        %2266 = vmatmul.f32.gmra.mxu0 %v2151
        %v2267 = vpop.f32.mrf.mxu0
        %v2268 = vadd.f32 0.0, %v2267
        %2269 = vmatmul.f32.gmra.mxu0 %v2152
        %v2270 = vpop.f32.mrf.mxu0
        %v2271 = vadd.f32 0.0, %v2270
        %2272 = vmatmul.f32.gmra.mxu0 %v2153
        %v2273 = vpop.f32.mrf.mxu0
        %v2274 = vadd.f32 0.0, %v2273
        %2275 = vmatmul.f32.gmra.mxu0 %v2154
        %v2276 = vpop.f32.mrf.mxu0
        %v2277 = vadd.f32 0.0, %v2276
        %2278 = vmatmul.f32.gmra.mxu0 %v2155
        %v2279 = vpop.f32.mrf.mxu0
        %v2280 = vadd.f32 0.0, %v2279
        %2281 = vmatmul.f32.gmra.mxu0 %v2156
        %v2282 = vpop.f32.mrf.mxu0
        %v2283 = vadd.f32 0.0, %v2282
        %2284 = vmatmul.f32.gmra.mxu0 %v2157
        %v2285 = vpop.f32.mrf.mxu0
        %v2286 = vadd.f32 0.0, %v2285
        %2287 = vdwg.mxu0
        %2288 = vmatpush.msra.mxu0 %v2125
        %2289 = vmatpush.msra.mxu0 %v2124
        %2290 = vmatpush.msra.mxu0 %v2123
        %2291 = vmatpush.msra.mxu0 %v2122
        %2292 = vmatpush.msra.mxu0 %v2121
        %2293 = vmatpush.msra.mxu0 %v2120
        %2294 = vmatpush.msra.mxu0 %v2119
        %2295 = vmatpush.msra.mxu0 %v2118
        %2296 = vmatpush.msra.mxu0 %v2117
        %2297 = vmatpush.msra.mxu0 %v2116
        %2298 = vmatpush.msra.mxu0 %v2115
        %2299 = vmatpush.msra.mxu0 %v2114
        %2300 = vmatpush.msra.mxu0 %v2113
        %2301 = vmatpush.msra.mxu0 %v2112
        %2302 = vmatpush.msra.mxu0 %v2111
        %2303 = vmatpush.msra.mxu0 %v2110
        %2304 = vmatmul.f32.gmra.mxu0 %v2078
        %v2305 = vpop.f32.mrf.mxu0
        %v2306 = vadd.f32 %v2193, %v2305
        %2307 = vmatmul.f32.gmra.mxu0 %v2079
        %v2308 = vpop.f32.mrf.mxu0
        %v2309 = vadd.f32 %v2196, %v2308
        %2310 = vmatmul.f32.gmra.mxu0 %v2080
        %v2311 = vpop.f32.mrf.mxu0
        %v2312 = vadd.f32 %v2199, %v2311
        %2313 = vmatmul.f32.gmra.mxu0 %v2081
        %v2314 = vpop.f32.mrf.mxu0
        %v2315 = vadd.f32 %v2202, %v2314
        %2316 = vmatmul.f32.gmra.mxu0 %v2082
        %v2317 = vpop.f32.mrf.mxu0
        %v2318 = vadd.f32 %v2205, %v2317
        %2319 = vmatmul.f32.gmra.mxu0 %v2083
        %v2320 = vpop.f32.mrf.mxu0
        %v2321 = vadd.f32 %v2208, %v2320
        %2322 = vmatmul.f32.gmra.mxu0 %v2084
        %v2323 = vpop.f32.mrf.mxu0
        %v2324 = vadd.f32 %v2211, %v2323
        %2325 = vmatmul.f32.gmra.mxu0 %v2085
        %v2326 = vpop.f32.mrf.mxu0
        %v2327 = vadd.f32 %v2214, %v2326
        %2328 = vmatmul.f32.gmra.mxu0 %v2086
        %v2329 = vpop.f32.mrf.mxu0
        %v2330 = vadd.f32 %v2217, %v2329
        %2331 = vmatmul.f32.gmra.mxu0 %v2087
        %v2332 = vpop.f32.mrf.mxu0
        %v2333 = vadd.f32 %v2220, %v2332
        %2334 = vmatmul.f32.gmra.mxu0 %v2088
        %v2335 = vpop.f32.mrf.mxu0
        %v2336 = vadd.f32 %v2223, %v2335
        %2337 = vmatmul.f32.gmra.mxu0 %v2089
        %v2338 = vpop.f32.mrf.mxu0
        %v2339 = vadd.f32 %v2226, %v2338
        %2340 = vmatmul.f32.gmra.mxu0 %v2090
        %v2341 = vpop.f32.mrf.mxu0
        %v2342 = vadd.f32 %v2229, %v2341
        %2343 = vmatmul.f32.gmra.mxu0 %v2091
        %v2344 = vpop.f32.mrf.mxu0
        %v2345 = vadd.f32 %v2232, %v2344
        %2346 = vmatmul.f32.gmra.mxu0 %v2092
        %v2347 = vpop.f32.mrf.mxu0
        %v2348 = vadd.f32 %v2235, %v2347
        %2349 = vmatmul.f32.gmra.mxu0 %v2093
        %v2350 = vpop.f32.mrf.mxu0
        %v2351 = vadd.f32 %v2238, %v2350
        %2352 = vmatmul.f32.gmra.mxu0 %v2094
        %v2353 = vpop.f32.mrf.mxu0
        %v2354 = vadd.f32 %v2241, %v2353
        %2355 = vmatmul.f32.gmra.mxu0 %v2095
        %v2356 = vpop.f32.mrf.mxu0
        %v2357 = vadd.f32 %v2244, %v2356
        %2358 = vmatmul.f32.gmra.mxu0 %v2096
        %v2359 = vpop.f32.mrf.mxu0
        %v2360 = vadd.f32 %v2247, %v2359
        %2361 = vmatmul.f32.gmra.mxu0 %v2097
        %v2362 = vpop.f32.mrf.mxu0
        %v2363 = vadd.f32 %v2250, %v2362
        %2364 = vmatmul.f32.gmra.mxu0 %v2098
        %v2365 = vpop.f32.mrf.mxu0
        %v2366 = vadd.f32 %v2253, %v2365
        %2367 = vmatmul.f32.gmra.mxu0 %v2099
        %v2368 = vpop.f32.mrf.mxu0
        %v2369 = vadd.f32 %v2256, %v2368
        %2370 = vmatmul.f32.gmra.mxu0 %v2100
        %v2371 = vpop.f32.mrf.mxu0
        %v2372 = vadd.f32 %v2259, %v2371
        %2373 = vmatmul.f32.gmra.mxu0 %v2101
        %v2374 = vpop.f32.mrf.mxu0
        %v2375 = vadd.f32 %v2262, %v2374
        %2376 = vmatmul.f32.gmra.mxu0 %v2102
        %v2377 = vpop.f32.mrf.mxu0
        %v2378 = vadd.f32 %v2265, %v2377
        %2379 = vmatmul.f32.gmra.mxu0 %v2103
        %v2380 = vpop.f32.mrf.mxu0
        %v2381 = vadd.f32 %v2268, %v2380
        %2382 = vmatmul.f32.gmra.mxu0 %v2104
        %v2383 = vpop.f32.mrf.mxu0
        %v2384 = vadd.f32 %v2271, %v2383
        %2385 = vmatmul.f32.gmra.mxu0 %v2105
        %v2386 = vpop.f32.mrf.mxu0
        %v2387 = vadd.f32 %v2274, %v2386
        %2388 = vmatmul.f32.gmra.mxu0 %v2106
        %v2389 = vpop.f32.mrf.mxu0
        %v2390 = vadd.f32 %v2277, %v2389
        %2391 = vmatmul.f32.gmra.mxu0 %v2107
        %v2392 = vpop.f32.mrf.mxu0
        %v2393 = vadd.f32 %v2280, %v2392
        %2394 = vmatmul.f32.gmra.mxu0 %v2108
        %v2395 = vpop.f32.mrf.mxu0
        %v2396 = vadd.f32 %v2283, %v2395
        %2397 = vmatmul.f32.gmra.mxu0 %v2109
        %v2398 = vpop.f32.mrf.mxu0
        %v2399 = vadd.f32 %v2286, %v2398
        %2400 = vdwg.mxu0
        %v2401 = vld [vmem:[#allocation2 + $0x2] sm:$0xff]
        %v2402 = vld [vmem:[#allocation2 + $0xa] sm:$0xff]
        %v2403 = vld [vmem:[#allocation2 + $0x1a] sm:$0xff]
        %v2404 = vld [vmem:[#allocation2 + $0x22] sm:$0xff]
        %v2405 = vld [vmem:[#allocation2 + $0x32] sm:$0xff]
        %v2406 = vld [vmem:[#allocation2 + $0x3a] sm:$0xff]
        %v2407 = vld [vmem:[#allocation2 + $0x4a] sm:$0xff]
        %v2408 = vld [vmem:[#allocation2 + $0x52] sm:$0xff]
        %v2409 = vld [vmem:[#allocation2 + $0x62] sm:$0xff]
        %v2410 = vld [vmem:[#allocation2 + $0x6a] sm:$0xff]
        %v2411 = vld [vmem:[#allocation2 + $0x7a] sm:$0xff]
        %v2412 = vld [vmem:[#allocation2 + $0x82] sm:$0xff]
        %v2413 = vld [vmem:[#allocation2 + $0x92] sm:$0xff]
        %v2414 = vld [vmem:[#allocation2 + $0x9a] sm:$0xff]
        %v2415 = vld [vmem:[#allocation2 + $0xaa] sm:$0xff]
        %v2416 = vld [vmem:[#allocation2 + $0xb2] sm:$0xff]
        %v2417 = vld [vmem:[#allocation2 + $0xc2] sm:$0xff]
        %v2418 = vld [vmem:[#allocation2 + $0xca] sm:$0xff]
        %v2419 = vld [vmem:[#allocation2 + $0xda] sm:$0xff]
        %v2420 = vld [vmem:[#allocation2 + $0xe2] sm:$0xff]
        %v2421 = vld [vmem:[#allocation2 + $0xf2] sm:$0xff]
        %v2422 = vld [vmem:[#allocation2 + $0xfa] sm:$0xff]
        %v2423 = vld [vmem:[#allocation2 + $0x10a] sm:$0xff]
        %v2424 = vld [vmem:[#allocation2 + $0x112] sm:$0xff]
        %v2425 = vld [vmem:[#allocation2 + $0x122] sm:$0xff]
        %v2426 = vld [vmem:[#allocation2 + $0x12a] sm:$0xff]
        %v2427 = vld [vmem:[#allocation2 + $0x13a] sm:$0xff]
        %v2428 = vld [vmem:[#allocation2 + $0x142] sm:$0xff]
        %v2429 = vld [vmem:[#allocation2 + $0x152] sm:$0xff]
        %v2430 = vld [vmem:[#allocation2 + $0x15a] sm:$0xff]
        %v2431 = vld [vmem:[#allocation2 + $0x16a] sm:$0xff]
        %v2432 = vld [vmem:[#allocation2 + $0x172] sm:$0xff]
        %s2433 = scalar_lea.vmem [#allocation3], 256
        %v2434 = vld [vmem:[%s2433] sm:$0xff]
        %v2435 = vld [vmem:[%s2433 + $0x8] sm:$0xff]
        %v2436 = vld [vmem:[%s2433 + $0x10] sm:$0xff]
        %v2437 = vld [vmem:[%s2433 + $0x18] sm:$0xff]
        %v2438 = vld [vmem:[%s2433 + $0x20] sm:$0xff]
        %v2439 = vld [vmem:[%s2433 + $0x28] sm:$0xff]
        %v2440 = vld [vmem:[%s2433 + $0x30] sm:$0xff]
        %v2441 = vld [vmem:[%s2433 + $0x38] sm:$0xff]
        %v2442 = vld [vmem:[%s2433 + $0x40] sm:$0xff]
        %v2443 = vld [vmem:[%s2433 + $0x48] sm:$0xff]
        %v2444 = vld [vmem:[%s2433 + $0x50] sm:$0xff]
        %v2445 = vld [vmem:[%s2433 + $0x58] sm:$0xff]
        %v2446 = vld [vmem:[%s2433 + $0x60] sm:$0xff]
        %v2447 = vld [vmem:[%s2433 + $0x68] sm:$0xff]
        %v2448 = vld [vmem:[%s2433 + $0x70] sm:$0xff]
        %v2449 = vld [vmem:[%s2433 + $0x78] sm:$0xff]
        %2450 = vmatpush.msra.mxu0 %v2449
        %2451 = vmatpush.msra.mxu0 %v2448
        %2452 = vmatpush.msra.mxu0 %v2447
        %2453 = vmatpush.msra.mxu0 %v2446
        %2454 = vmatpush.msra.mxu0 %v2445
        %2455 = vmatpush.msra.mxu0 %v2444
        %2456 = vmatpush.msra.mxu0 %v2443
        %2457 = vmatpush.msra.mxu0 %v2442
        %2458 = vmatpush.msra.mxu0 %v2441
        %2459 = vmatpush.msra.mxu0 %v2440
        %2460 = vmatpush.msra.mxu0 %v2439
        %2461 = vmatpush.msra.mxu0 %v2438
        %2462 = vmatpush.msra.mxu0 %v2437
        %2463 = vmatpush.msra.mxu0 %v2436
        %2464 = vmatpush.msra.mxu0 %v2435
        %2465 = vmatpush.msra.mxu0 %v2434
        %2466 = vmatmul.f32.gmra.mxu0 %v2401
        %v2467 = vpop.f32.mrf.mxu0
        %v2468 = vadd.f32 0.0, %v2467
        %2469 = vmatmul.f32.gmra.mxu0 %v2402
        %v2470 = vpop.f32.mrf.mxu0
        %v2471 = vadd.f32 0.0, %v2470
        %2472 = vmatmul.f32.gmra.mxu0 %v2403
        %v2473 = vpop.f32.mrf.mxu0
        %v2474 = vadd.f32 0.0, %v2473
        %2475 = vmatmul.f32.gmra.mxu0 %v2404
        %v2476 = vpop.f32.mrf.mxu0
        %v2477 = vadd.f32 0.0, %v2476
        %2478 = vmatmul.f32.gmra.mxu0 %v2405
        %v2479 = vpop.f32.mrf.mxu0
        %v2480 = vadd.f32 0.0, %v2479
        %2481 = vmatmul.f32.gmra.mxu0 %v2406
        %v2482 = vpop.f32.mrf.mxu0
        %v2483 = vadd.f32 0.0, %v2482
        %2484 = vmatmul.f32.gmra.mxu0 %v2407
        %v2485 = vpop.f32.mrf.mxu0
        %v2486 = vadd.f32 0.0, %v2485
        %2487 = vmatmul.f32.gmra.mxu0 %v2408
        %v2488 = vpop.f32.mrf.mxu0
        %v2489 = vadd.f32 0.0, %v2488
        %2490 = vmatmul.f32.gmra.mxu0 %v2409
        %v2491 = vpop.f32.mrf.mxu0
        %v2492 = vadd.f32 0.0, %v2491
        %2493 = vmatmul.f32.gmra.mxu0 %v2410
        %v2494 = vpop.f32.mrf.mxu0
        %v2495 = vadd.f32 0.0, %v2494
        %2496 = vmatmul.f32.gmra.mxu0 %v2411
        %v2497 = vpop.f32.mrf.mxu0
        %v2498 = vadd.f32 0.0, %v2497
        %2499 = vmatmul.f32.gmra.mxu0 %v2412
        %v2500 = vpop.f32.mrf.mxu0
        %v2501 = vadd.f32 0.0, %v2500
        %2502 = vmatmul.f32.gmra.mxu0 %v2413
        %v2503 = vpop.f32.mrf.mxu0
        %v2504 = vadd.f32 0.0, %v2503
        %2505 = vmatmul.f32.gmra.mxu0 %v2414
        %v2506 = vpop.f32.mrf.mxu0
        %v2507 = vadd.f32 0.0, %v2506
        %2508 = vmatmul.f32.gmra.mxu0 %v2415
        %v2509 = vpop.f32.mrf.mxu0
        %v2510 = vadd.f32 0.0, %v2509
        %2511 = vmatmul.f32.gmra.mxu0 %v2416
        %v2512 = vpop.f32.mrf.mxu0
        %v2513 = vadd.f32 0.0, %v2512
        %2514 = vmatmul.f32.gmra.mxu0 %v2417
        %v2515 = vpop.f32.mrf.mxu0
        %v2516 = vadd.f32 0.0, %v2515
        %2517 = vmatmul.f32.gmra.mxu0 %v2418
        %v2518 = vpop.f32.mrf.mxu0
        %v2519 = vadd.f32 0.0, %v2518
        %2520 = vmatmul.f32.gmra.mxu0 %v2419
        %v2521 = vpop.f32.mrf.mxu0
        %v2522 = vadd.f32 0.0, %v2521
        %2523 = vmatmul.f32.gmra.mxu0 %v2420
        %v2524 = vpop.f32.mrf.mxu0
        %v2525 = vadd.f32 0.0, %v2524
        %2526 = vmatmul.f32.gmra.mxu0 %v2421
        %v2527 = vpop.f32.mrf.mxu0
        %v2528 = vadd.f32 0.0, %v2527
        %2529 = vmatmul.f32.gmra.mxu0 %v2422
        %v2530 = vpop.f32.mrf.mxu0
        %v2531 = vadd.f32 0.0, %v2530
        %2532 = vmatmul.f32.gmra.mxu0 %v2423
        %v2533 = vpop.f32.mrf.mxu0
        %v2534 = vadd.f32 0.0, %v2533
        %2535 = vmatmul.f32.gmra.mxu0 %v2424
        %v2536 = vpop.f32.mrf.mxu0
        %v2537 = vadd.f32 0.0, %v2536
        %2538 = vmatmul.f32.gmra.mxu0 %v2425
        %v2539 = vpop.f32.mrf.mxu0
        %v2540 = vadd.f32 0.0, %v2539
        %2541 = vmatmul.f32.gmra.mxu0 %v2426
        %v2542 = vpop.f32.mrf.mxu0
        %v2543 = vadd.f32 0.0, %v2542
        %2544 = vmatmul.f32.gmra.mxu0 %v2427
        %v2545 = vpop.f32.mrf.mxu0
        %v2546 = vadd.f32 0.0, %v2545
        %2547 = vmatmul.f32.gmra.mxu0 %v2428
        %v2548 = vpop.f32.mrf.mxu0
        %v2549 = vadd.f32 0.0, %v2548
        %2550 = vmatmul.f32.gmra.mxu0 %v2429
        %v2551 = vpop.f32.mrf.mxu0
        %v2552 = vadd.f32 0.0, %v2551
        %2553 = vmatmul.f32.gmra.mxu0 %v2430
        %v2554 = vpop.f32.mrf.mxu0
        %v2555 = vadd.f32 0.0, %v2554
        %2556 = vmatmul.f32.gmra.mxu0 %v2431
        %v2557 = vpop.f32.mrf.mxu0
        %v2558 = vadd.f32 0.0, %v2557
        %2559 = vmatmul.f32.gmra.mxu0 %v2432
        %v2560 = vpop.f32.mrf.mxu0
        %v2561 = vadd.f32 0.0, %v2560
        %2562 = vdwg.mxu0
        %v2563 = vadd.f32 %v2306, %v2468
        %v2564 = vadd.f32 %v2309, %v2471
        %v2565 = vadd.f32 %v2312, %v2474
        %v2566 = vadd.f32 %v2315, %v2477
        %v2567 = vadd.f32 %v2318, %v2480
        %v2568 = vadd.f32 %v2321, %v2483
        %v2569 = vadd.f32 %v2324, %v2486
        %v2570 = vadd.f32 %v2327, %v2489
        %v2571 = vadd.f32 %v2330, %v2492
        %v2572 = vadd.f32 %v2333, %v2495
        %v2573 = vadd.f32 %v2336, %v2498
        %v2574 = vadd.f32 %v2339, %v2501
        %v2575 = vadd.f32 %v2342, %v2504
        %v2576 = vadd.f32 %v2345, %v2507
        %v2577 = vadd.f32 %v2348, %v2510
        %v2578 = vadd.f32 %v2351, %v2513
        %v2579 = vadd.f32 %v2354, %v2516
        %v2580 = vadd.f32 %v2357, %v2519
        %v2581 = vadd.f32 %v2360, %v2522
        %v2582 = vadd.f32 %v2363, %v2525
        %v2583 = vadd.f32 %v2366, %v2528
        %v2584 = vadd.f32 %v2369, %v2531
        %v2585 = vadd.f32 %v2372, %v2534
        %v2586 = vadd.f32 %v2375, %v2537
        %v2587 = vadd.f32 %v2378, %v2540
        %v2588 = vadd.f32 %v2381, %v2543
        %v2589 = vadd.f32 %v2384, %v2546
        %v2590 = vadd.f32 %v2387, %v2549
        %v2591 = vadd.f32 %v2390, %v2552
        %v2592 = vadd.f32 %v2393, %v2555
        %v2593 = vadd.f32 %v2396, %v2558
        %v2594 = vadd.f32 %v2399, %v2561
        %v2595 = vld [vmem:[%s2045] sm:$0xff]
        %v2596 = vld [vmem:[%s2045 + $0x8] sm:$0xff]
        %v2597 = vld [vmem:[%s2045 + $0x18] sm:$0xff]
        %v2598 = vld [vmem:[%s2045 + $0x20] sm:$0xff]
        %v2599 = vld [vmem:[%s2045 + $0x30] sm:$0xff]
        %v2600 = vld [vmem:[%s2045 + $0x38] sm:$0xff]
        %v2601 = vld [vmem:[%s2045 + $0x48] sm:$0xff]
        %v2602 = vld [vmem:[%s2045 + $0x50] sm:$0xff]
        %v2603 = vld [vmem:[%s2045 + $0x60] sm:$0xff]
        %v2604 = vld [vmem:[%s2045 + $0x68] sm:$0xff]
        %v2605 = vld [vmem:[%s2045 + $0x78] sm:$0xff]
        %v2606 = vld [vmem:[%s2045 + $0x80] sm:$0xff]
        %v2607 = vld [vmem:[%s2045 + $0x90] sm:$0xff]
        %v2608 = vld [vmem:[%s2045 + $0x98] sm:$0xff]
        %v2609 = vld [vmem:[%s2045 + $0xa8] sm:$0xff]
        %v2610 = vld [vmem:[%s2045 + $0xb0] sm:$0xff]
        %v2611 = vld [vmem:[%s2045 + $0xc0] sm:$0xff]
        %v2612 = vld [vmem:[%s2045 + $0xc8] sm:$0xff]
        %v2613 = vld [vmem:[%s2045 + $0xd8] sm:$0xff]
        %v2614 = vld [vmem:[%s2045 + $0xe0] sm:$0xff]
        %v2615 = vld [vmem:[%s2045 + $0xf0] sm:$0xff]
        %v2616 = vld [vmem:[%s2045 + $0xf8] sm:$0xff]
        %v2617 = vld [vmem:[%s2045 + $0x108] sm:$0xff]
        %v2618 = vld [vmem:[%s2045 + $0x110] sm:$0xff]
        %v2619 = vld [vmem:[%s2045 + $0x120] sm:$0xff]
        %v2620 = vld [vmem:[%s2045 + $0x128] sm:$0xff]
        %v2621 = vld [vmem:[%s2045 + $0x138] sm:$0xff]
        %v2622 = vld [vmem:[%s2045 + $0x140] sm:$0xff]
        %v2623 = vld [vmem:[%s2045 + $0x150] sm:$0xff]
        %v2624 = vld [vmem:[%s2045 + $0x158] sm:$0xff]
        %v2625 = vld [vmem:[%s2045 + $0x168] sm:$0xff]
        %v2626 = vld [vmem:[%s2045 + $0x170] sm:$0xff]
        %s2627 = scalar_lea.vmem [#allocation3], 384
        %v2628 = vld [vmem:[%s2627] sm:$0xff]
        %v2629 = vld [vmem:[%s2627 + $0x8] sm:$0xff]
        %v2630 = vld [vmem:[%s2627 + $0x10] sm:$0xff]
        %v2631 = vld [vmem:[%s2627 + $0x18] sm:$0xff]
        %v2632 = vld [vmem:[%s2627 + $0x20] sm:$0xff]
        %v2633 = vld [vmem:[%s2627 + $0x28] sm:$0xff]
        %v2634 = vld [vmem:[%s2627 + $0x30] sm:$0xff]
        %v2635 = vld [vmem:[%s2627 + $0x38] sm:$0xff]
        %v2636 = vld [vmem:[%s2627 + $0x40] sm:$0xff]
        %v2637 = vld [vmem:[%s2627 + $0x48] sm:$0xff]
        %v2638 = vld [vmem:[%s2627 + $0x50] sm:$0xff]
        %v2639 = vld [vmem:[%s2627 + $0x58] sm:$0xff]
        %v2640 = vld [vmem:[%s2627 + $0x60] sm:$0xff]
        %v2641 = vld [vmem:[%s2627 + $0x68] sm:$0xff]
        %v2642 = vld [vmem:[%s2627 + $0x70] sm:$0xff]
        %v2643 = vld [vmem:[%s2627 + $0x78] sm:$0xff]
        %2644 = vmatpush.msra.mxu0 %v2643
        %2645 = vmatpush.msra.mxu0 %v2642
        %2646 = vmatpush.msra.mxu0 %v2641
        %2647 = vmatpush.msra.mxu0 %v2640
        %2648 = vmatpush.msra.mxu0 %v2639
        %2649 = vmatpush.msra.mxu0 %v2638
        %2650 = vmatpush.msra.mxu0 %v2637
        %2651 = vmatpush.msra.mxu0 %v2636
        %2652 = vmatpush.msra.mxu0 %v2635
        %2653 = vmatpush.msra.mxu0 %v2634
        %2654 = vmatpush.msra.mxu0 %v2633
        %2655 = vmatpush.msra.mxu0 %v2632
        %2656 = vmatpush.msra.mxu0 %v2631
        %2657 = vmatpush.msra.mxu0 %v2630
        %2658 = vmatpush.msra.mxu0 %v2629
        %2659 = vmatpush.msra.mxu0 %v2628
        %2660 = vmatmul.f32.gmra.mxu0 %v2595
        %v2661 = vpop.f32.mrf.mxu0
        %v2662 = vadd.f32 0.0, %v2661
        %2663 = vmatmul.f32.gmra.mxu0 %v2596
        %v2664 = vpop.f32.mrf.mxu0
        %v2665 = vadd.f32 0.0, %v2664
        %2666 = vmatmul.f32.gmra.mxu0 %v2597
        %v2667 = vpop.f32.mrf.mxu0
        %v2668 = vadd.f32 0.0, %v2667
        %2669 = vmatmul.f32.gmra.mxu0 %v2598
        %v2670 = vpop.f32.mrf.mxu0
        %v2671 = vadd.f32 0.0, %v2670
        %2672 = vmatmul.f32.gmra.mxu0 %v2599
        %v2673 = vpop.f32.mrf.mxu0
        %v2674 = vadd.f32 0.0, %v2673
        %2675 = vmatmul.f32.gmra.mxu0 %v2600
        %v2676 = vpop.f32.mrf.mxu0
        %v2677 = vadd.f32 0.0, %v2676
        %2678 = vmatmul.f32.gmra.mxu0 %v2601
        %v2679 = vpop.f32.mrf.mxu0
        %v2680 = vadd.f32 0.0, %v2679
        %2681 = vmatmul.f32.gmra.mxu0 %v2602
        %v2682 = vpop.f32.mrf.mxu0
        %v2683 = vadd.f32 0.0, %v2682
        %2684 = vmatmul.f32.gmra.mxu0 %v2603
        %v2685 = vpop.f32.mrf.mxu0
        %v2686 = vadd.f32 0.0, %v2685
        %2687 = vmatmul.f32.gmra.mxu0 %v2604
        %v2688 = vpop.f32.mrf.mxu0
        %v2689 = vadd.f32 0.0, %v2688
        %2690 = vmatmul.f32.gmra.mxu0 %v2605
        %v2691 = vpop.f32.mrf.mxu0
        %v2692 = vadd.f32 0.0, %v2691
        %2693 = vmatmul.f32.gmra.mxu0 %v2606
        %v2694 = vpop.f32.mrf.mxu0
        %v2695 = vadd.f32 0.0, %v2694
        %2696 = vmatmul.f32.gmra.mxu0 %v2607
        %v2697 = vpop.f32.mrf.mxu0
        %v2698 = vadd.f32 0.0, %v2697
        %2699 = vmatmul.f32.gmra.mxu0 %v2608
        %v2700 = vpop.f32.mrf.mxu0
        %v2701 = vadd.f32 0.0, %v2700
        %2702 = vmatmul.f32.gmra.mxu0 %v2609
        %v2703 = vpop.f32.mrf.mxu0
        %v2704 = vadd.f32 0.0, %v2703
        %2705 = vmatmul.f32.gmra.mxu0 %v2610
        %v2706 = vpop.f32.mrf.mxu0
        %v2707 = vadd.f32 0.0, %v2706
        %2708 = vmatmul.f32.gmra.mxu0 %v2611
        %v2709 = vpop.f32.mrf.mxu0
        %v2710 = vadd.f32 0.0, %v2709
        %2711 = vmatmul.f32.gmra.mxu0 %v2612
        %v2712 = vpop.f32.mrf.mxu0
        %v2713 = vadd.f32 0.0, %v2712
        %2714 = vmatmul.f32.gmra.mxu0 %v2613
        %v2715 = vpop.f32.mrf.mxu0
        %v2716 = vadd.f32 0.0, %v2715
        %2717 = vmatmul.f32.gmra.mxu0 %v2614
        %v2718 = vpop.f32.mrf.mxu0
        %v2719 = vadd.f32 0.0, %v2718
        %2720 = vmatmul.f32.gmra.mxu0 %v2615
        %v2721 = vpop.f32.mrf.mxu0
        %v2722 = vadd.f32 0.0, %v2721
        %2723 = vmatmul.f32.gmra.mxu0 %v2616
        %v2724 = vpop.f32.mrf.mxu0
        %v2725 = vadd.f32 0.0, %v2724
        %2726 = vmatmul.f32.gmra.mxu0 %v2617
        %v2727 = vpop.f32.mrf.mxu0
        %v2728 = vadd.f32 0.0, %v2727
        %2729 = vmatmul.f32.gmra.mxu0 %v2618
        %v2730 = vpop.f32.mrf.mxu0
        %v2731 = vadd.f32 0.0, %v2730
        %2732 = vmatmul.f32.gmra.mxu0 %v2619
        %v2733 = vpop.f32.mrf.mxu0
        %v2734 = vadd.f32 0.0, %v2733
        %2735 = vmatmul.f32.gmra.mxu0 %v2620
        %v2736 = vpop.f32.mrf.mxu0
        %v2737 = vadd.f32 0.0, %v2736
        %2738 = vmatmul.f32.gmra.mxu0 %v2621
        %v2739 = vpop.f32.mrf.mxu0
        %v2740 = vadd.f32 0.0, %v2739
        %2741 = vmatmul.f32.gmra.mxu0 %v2622
        %v2742 = vpop.f32.mrf.mxu0
        %v2743 = vadd.f32 0.0, %v2742
        %2744 = vmatmul.f32.gmra.mxu0 %v2623
        %v2745 = vpop.f32.mrf.mxu0
        %v2746 = vadd.f32 0.0, %v2745
        %2747 = vmatmul.f32.gmra.mxu0 %v2624
        %v2748 = vpop.f32.mrf.mxu0
        %v2749 = vadd.f32 0.0, %v2748
        %2750 = vmatmul.f32.gmra.mxu0 %v2625
        %v2751 = vpop.f32.mrf.mxu0
        %v2752 = vadd.f32 0.0, %v2751
        %2753 = vmatmul.f32.gmra.mxu0 %v2626
        %v2754 = vpop.f32.mrf.mxu0
        %v2755 = vadd.f32 0.0, %v2754
        %2756 = vdwg.mxu0
        %v2757 = vadd.f32 %v2563, %v2662
        %v2758 = vadd.f32 %v2564, %v2665
        %v2759 = vadd.f32 %v2565, %v2668
        %v2760 = vadd.f32 %v2566, %v2671
        %v2761 = vadd.f32 %v2567, %v2674
        %v2762 = vadd.f32 %v2568, %v2677
        %v2763 = vadd.f32 %v2569, %v2680
        %v2764 = vadd.f32 %v2570, %v2683
        %v2765 = vadd.f32 %v2571, %v2686
        %v2766 = vadd.f32 %v2572, %v2689
        %v2767 = vadd.f32 %v2573, %v2692
        %v2768 = vadd.f32 %v2574, %v2695
        %v2769 = vadd.f32 %v2575, %v2698
        %v2770 = vadd.f32 %v2576, %v2701
        %v2771 = vadd.f32 %v2577, %v2704
        %v2772 = vadd.f32 %v2578, %v2707
        %v2773 = vadd.f32 %v2579, %v2710
        %v2774 = vadd.f32 %v2580, %v2713
        %v2775 = vadd.f32 %v2581, %v2716
        %v2776 = vadd.f32 %v2582, %v2719
        %v2777 = vadd.f32 %v2583, %v2722
        %v2778 = vadd.f32 %v2584, %v2725
        %v2779 = vadd.f32 %v2585, %v2728
        %v2780 = vadd.f32 %v2586, %v2731
        %v2781 = vadd.f32 %v2587, %v2734
        %v2782 = vadd.f32 %v2588, %v2737
        %v2783 = vadd.f32 %v2589, %v2740
        %v2784 = vadd.f32 %v2590, %v2743
        %v2785 = vadd.f32 %v2591, %v2746
        %v2786 = vadd.f32 %v2592, %v2749
        %v2787 = vadd.f32 %v2593, %v2752
        %v2788 = vadd.f32 %v2594, %v2755
        %v2789 = vld [vmem:[%s2045 + $0x1] sm:$0xff]
        %v2790 = vld [vmem:[%s2045 + $0x9] sm:$0xff]
        %v2791 = vld [vmem:[%s2045 + $0x19] sm:$0xff]
        %v2792 = vld [vmem:[%s2045 + $0x21] sm:$0xff]
        %v2793 = vld [vmem:[%s2045 + $0x31] sm:$0xff]
        %v2794 = vld [vmem:[%s2045 + $0x39] sm:$0xff]
        %v2795 = vld [vmem:[%s2045 + $0x49] sm:$0xff]
        %v2796 = vld [vmem:[%s2045 + $0x51] sm:$0xff]
        %v2797 = vld [vmem:[%s2045 + $0x61] sm:$0xff]
        %v2798 = vld [vmem:[%s2045 + $0x69] sm:$0xff]
        %v2799 = vld [vmem:[%s2045 + $0x79] sm:$0xff]
        %v2800 = vld [vmem:[%s2045 + $0x81] sm:$0xff]
        %v2801 = vld [vmem:[%s2045 + $0x91] sm:$0xff]
        %v2802 = vld [vmem:[%s2045 + $0x99] sm:$0xff]
        %v2803 = vld [vmem:[%s2045 + $0xa9] sm:$0xff]
        %v2804 = vld [vmem:[%s2045 + $0xb1] sm:$0xff]
        %v2805 = vld [vmem:[%s2045 + $0xc1] sm:$0xff]
        %v2806 = vld [vmem:[%s2045 + $0xc9] sm:$0xff]
        %v2807 = vld [vmem:[%s2045 + $0xd9] sm:$0xff]
        %v2808 = vld [vmem:[%s2045 + $0xe1] sm:$0xff]
        %v2809 = vld [vmem:[%s2045 + $0xf1] sm:$0xff]
        %v2810 = vld [vmem:[%s2045 + $0xf9] sm:$0xff]
        %v2811 = vld [vmem:[%s2045 + $0x109] sm:$0xff]
        %v2812 = vld [vmem:[%s2045 + $0x111] sm:$0xff]
        %v2813 = vld [vmem:[%s2045 + $0x121] sm:$0xff]
        %v2814 = vld [vmem:[%s2045 + $0x129] sm:$0xff]
        %v2815 = vld [vmem:[%s2045 + $0x139] sm:$0xff]
        %v2816 = vld [vmem:[%s2045 + $0x141] sm:$0xff]
        %v2817 = vld [vmem:[%s2045 + $0x151] sm:$0xff]
        %v2818 = vld [vmem:[%s2045 + $0x159] sm:$0xff]
        %v2819 = vld [vmem:[%s2045 + $0x169] sm:$0xff]
        %v2820 = vld [vmem:[%s2045 + $0x171] sm:$0xff]
        %s2821 = scalar_lea.vmem [#allocation3], 512
        %v2822 = vld [vmem:[%s2821] sm:$0xff]
        %v2823 = vld [vmem:[%s2821 + $0x8] sm:$0xff]
        %v2824 = vld [vmem:[%s2821 + $0x10] sm:$0xff]
        %v2825 = vld [vmem:[%s2821 + $0x18] sm:$0xff]
        %v2826 = vld [vmem:[%s2821 + $0x20] sm:$0xff]
        %v2827 = vld [vmem:[%s2821 + $0x28] sm:$0xff]
        %v2828 = vld [vmem:[%s2821 + $0x30] sm:$0xff]
        %v2829 = vld [vmem:[%s2821 + $0x38] sm:$0xff]
        %v2830 = vld [vmem:[%s2821 + $0x40] sm:$0xff]
        %v2831 = vld [vmem:[%s2821 + $0x48] sm:$0xff]
        %v2832 = vld [vmem:[%s2821 + $0x50] sm:$0xff]
        %v2833 = vld [vmem:[%s2821 + $0x58] sm:$0xff]
        %v2834 = vld [vmem:[%s2821 + $0x60] sm:$0xff]
        %v2835 = vld [vmem:[%s2821 + $0x68] sm:$0xff]
        %v2836 = vld [vmem:[%s2821 + $0x70] sm:$0xff]
        %v2837 = vld [vmem:[%s2821 + $0x78] sm:$0xff]
        %2838 = vmatpush.msra.mxu0 %v2837
        %2839 = vmatpush.msra.mxu0 %v2836
        %2840 = vmatpush.msra.mxu0 %v2835
        %2841 = vmatpush.msra.mxu0 %v2834
        %2842 = vmatpush.msra.mxu0 %v2833
        %2843 = vmatpush.msra.mxu0 %v2832
        %2844 = vmatpush.msra.mxu0 %v2831
        %2845 = vmatpush.msra.mxu0 %v2830
        %2846 = vmatpush.msra.mxu0 %v2829
        %2847 = vmatpush.msra.mxu0 %v2828
        %2848 = vmatpush.msra.mxu0 %v2827
        %2849 = vmatpush.msra.mxu0 %v2826
        %2850 = vmatpush.msra.mxu0 %v2825
        %2851 = vmatpush.msra.mxu0 %v2824
        %2852 = vmatpush.msra.mxu0 %v2823
        %2853 = vmatpush.msra.mxu0 %v2822
        %2854 = vmatmul.f32.gmra.mxu0 %v2789
        %v2855 = vpop.f32.mrf.mxu0
        %v2856 = vadd.f32 0.0, %v2855
        %2857 = vmatmul.f32.gmra.mxu0 %v2790
        %v2858 = vpop.f32.mrf.mxu0
        %v2859 = vadd.f32 0.0, %v2858
        %2860 = vmatmul.f32.gmra.mxu0 %v2791
        %v2861 = vpop.f32.mrf.mxu0
        %v2862 = vadd.f32 0.0, %v2861
        %2863 = vmatmul.f32.gmra.mxu0 %v2792
        %v2864 = vpop.f32.mrf.mxu0
        %v2865 = vadd.f32 0.0, %v2864
        %2866 = vmatmul.f32.gmra.mxu0 %v2793
        %v2867 = vpop.f32.mrf.mxu0
        %v2868 = vadd.f32 0.0, %v2867
        %2869 = vmatmul.f32.gmra.mxu0 %v2794
        %v2870 = vpop.f32.mrf.mxu0
        %v2871 = vadd.f32 0.0, %v2870
        %2872 = vmatmul.f32.gmra.mxu0 %v2795
        %v2873 = vpop.f32.mrf.mxu0
        %v2874 = vadd.f32 0.0, %v2873
        %2875 = vmatmul.f32.gmra.mxu0 %v2796
        %v2876 = vpop.f32.mrf.mxu0
        %v2877 = vadd.f32 0.0, %v2876
        %2878 = vmatmul.f32.gmra.mxu0 %v2797
        %v2879 = vpop.f32.mrf.mxu0
        %v2880 = vadd.f32 0.0, %v2879
        %2881 = vmatmul.f32.gmra.mxu0 %v2798
        %v2882 = vpop.f32.mrf.mxu0
        %v2883 = vadd.f32 0.0, %v2882
        %2884 = vmatmul.f32.gmra.mxu0 %v2799
        %v2885 = vpop.f32.mrf.mxu0
        %v2886 = vadd.f32 0.0, %v2885
        %2887 = vmatmul.f32.gmra.mxu0 %v2800
        %v2888 = vpop.f32.mrf.mxu0
        %v2889 = vadd.f32 0.0, %v2888
        %2890 = vmatmul.f32.gmra.mxu0 %v2801
        %v2891 = vpop.f32.mrf.mxu0
        %v2892 = vadd.f32 0.0, %v2891
        %2893 = vmatmul.f32.gmra.mxu0 %v2802
        %v2894 = vpop.f32.mrf.mxu0
        %v2895 = vadd.f32 0.0, %v2894
        %2896 = vmatmul.f32.gmra.mxu0 %v2803
        %v2897 = vpop.f32.mrf.mxu0
        %v2898 = vadd.f32 0.0, %v2897
        %2899 = vmatmul.f32.gmra.mxu0 %v2804
        %v2900 = vpop.f32.mrf.mxu0
        %v2901 = vadd.f32 0.0, %v2900
        %2902 = vmatmul.f32.gmra.mxu0 %v2805
        %v2903 = vpop.f32.mrf.mxu0
        %v2904 = vadd.f32 0.0, %v2903
        %2905 = vmatmul.f32.gmra.mxu0 %v2806
        %v2906 = vpop.f32.mrf.mxu0
        %v2907 = vadd.f32 0.0, %v2906
        %2908 = vmatmul.f32.gmra.mxu0 %v2807
        %v2909 = vpop.f32.mrf.mxu0
        %v2910 = vadd.f32 0.0, %v2909
        %2911 = vmatmul.f32.gmra.mxu0 %v2808
        %v2912 = vpop.f32.mrf.mxu0
        %v2913 = vadd.f32 0.0, %v2912
        %2914 = vmatmul.f32.gmra.mxu0 %v2809
        %v2915 = vpop.f32.mrf.mxu0
        %v2916 = vadd.f32 0.0, %v2915
        %2917 = vmatmul.f32.gmra.mxu0 %v2810
        %v2918 = vpop.f32.mrf.mxu0
        %v2919 = vadd.f32 0.0, %v2918
        %2920 = vmatmul.f32.gmra.mxu0 %v2811
        %v2921 = vpop.f32.mrf.mxu0
        %v2922 = vadd.f32 0.0, %v2921
        %2923 = vmatmul.f32.gmra.mxu0 %v2812
        %v2924 = vpop.f32.mrf.mxu0
        %v2925 = vadd.f32 0.0, %v2924
        %2926 = vmatmul.f32.gmra.mxu0 %v2813
        %v2927 = vpop.f32.mrf.mxu0
        %v2928 = vadd.f32 0.0, %v2927
        %2929 = vmatmul.f32.gmra.mxu0 %v2814
        %v2930 = vpop.f32.mrf.mxu0
        %v2931 = vadd.f32 0.0, %v2930
        %2932 = vmatmul.f32.gmra.mxu0 %v2815
        %v2933 = vpop.f32.mrf.mxu0
        %v2934 = vadd.f32 0.0, %v2933
        %2935 = vmatmul.f32.gmra.mxu0 %v2816
        %v2936 = vpop.f32.mrf.mxu0
        %v2937 = vadd.f32 0.0, %v2936
        %2938 = vmatmul.f32.gmra.mxu0 %v2817
        %v2939 = vpop.f32.mrf.mxu0
        %v2940 = vadd.f32 0.0, %v2939
        %2941 = vmatmul.f32.gmra.mxu0 %v2818
        %v2942 = vpop.f32.mrf.mxu0
        %v2943 = vadd.f32 0.0, %v2942
        %2944 = vmatmul.f32.gmra.mxu0 %v2819
        %v2945 = vpop.f32.mrf.mxu0
        %v2946 = vadd.f32 0.0, %v2945
        %2947 = vmatmul.f32.gmra.mxu0 %v2820
        %v2948 = vpop.f32.mrf.mxu0
        %v2949 = vadd.f32 0.0, %v2948
        %2950 = vdwg.mxu0
        %v2951 = vadd.f32 %v2757, %v2856
        %v2952 = vadd.f32 %v2758, %v2859
        %v2953 = vadd.f32 %v2759, %v2862
        %v2954 = vadd.f32 %v2760, %v2865
        %v2955 = vadd.f32 %v2761, %v2868
        %v2956 = vadd.f32 %v2762, %v2871
        %v2957 = vadd.f32 %v2763, %v2874
        %v2958 = vadd.f32 %v2764, %v2877
        %v2959 = vadd.f32 %v2765, %v2880
        %v2960 = vadd.f32 %v2766, %v2883
        %v2961 = vadd.f32 %v2767, %v2886
        %v2962 = vadd.f32 %v2768, %v2889
        %v2963 = vadd.f32 %v2769, %v2892
        %v2964 = vadd.f32 %v2770, %v2895
        %v2965 = vadd.f32 %v2771, %v2898
        %v2966 = vadd.f32 %v2772, %v2901
        %v2967 = vadd.f32 %v2773, %v2904
        %v2968 = vadd.f32 %v2774, %v2907
        %v2969 = vadd.f32 %v2775, %v2910
        %v2970 = vadd.f32 %v2776, %v2913
        %v2971 = vadd.f32 %v2777, %v2916
        %v2972 = vadd.f32 %v2778, %v2919
        %v2973 = vadd.f32 %v2779, %v2922
        %v2974 = vadd.f32 %v2780, %v2925
        %v2975 = vadd.f32 %v2781, %v2928
        %v2976 = vadd.f32 %v2782, %v2931
        %v2977 = vadd.f32 %v2783, %v2934
        %v2978 = vadd.f32 %v2784, %v2937
        %v2979 = vadd.f32 %v2785, %v2940
        %v2980 = vadd.f32 %v2786, %v2943
        %v2981 = vadd.f32 %v2787, %v2946
        %v2982 = vadd.f32 %v2788, %v2949
        %v2983 = vld [vmem:[%s2045 + $0x2] sm:$0xff]
        %v2984 = vld [vmem:[%s2045 + $0xa] sm:$0xff]
        %v2985 = vld [vmem:[%s2045 + $0x1a] sm:$0xff]
        %v2986 = vld [vmem:[%s2045 + $0x22] sm:$0xff]
        %v2987 = vld [vmem:[%s2045 + $0x32] sm:$0xff]
        %v2988 = vld [vmem:[%s2045 + $0x3a] sm:$0xff]
        %v2989 = vld [vmem:[%s2045 + $0x4a] sm:$0xff]
        %v2990 = vld [vmem:[%s2045 + $0x52] sm:$0xff]
        %v2991 = vld [vmem:[%s2045 + $0x62] sm:$0xff]
        %v2992 = vld [vmem:[%s2045 + $0x6a] sm:$0xff]
        %v2993 = vld [vmem:[%s2045 + $0x7a] sm:$0xff]
        %v2994 = vld [vmem:[%s2045 + $0x82] sm:$0xff]
        %v2995 = vld [vmem:[%s2045 + $0x92] sm:$0xff]
        %v2996 = vld [vmem:[%s2045 + $0x9a] sm:$0xff]
        %v2997 = vld [vmem:[%s2045 + $0xaa] sm:$0xff]
        %v2998 = vld [vmem:[%s2045 + $0xb2] sm:$0xff]
        %v2999 = vld [vmem:[%s2045 + $0xc2] sm:$0xff]
        %v3000 = vld [vmem:[%s2045 + $0xca] sm:$0xff]
        %v3001 = vld [vmem:[%s2045 + $0xda] sm:$0xff]
        %v3002 = vld [vmem:[%s2045 + $0xe2] sm:$0xff]
        %v3003 = vld [vmem:[%s2045 + $0xf2] sm:$0xff]
        %v3004 = vld [vmem:[%s2045 + $0xfa] sm:$0xff]
        %v3005 = vld [vmem:[%s2045 + $0x10a] sm:$0xff]
        %v3006 = vld [vmem:[%s2045 + $0x112] sm:$0xff]
        %v3007 = vld [vmem:[%s2045 + $0x122] sm:$0xff]
        %v3008 = vld [vmem:[%s2045 + $0x12a] sm:$0xff]
        %v3009 = vld [vmem:[%s2045 + $0x13a] sm:$0xff]
        %v3010 = vld [vmem:[%s2045 + $0x142] sm:$0xff]
        %v3011 = vld [vmem:[%s2045 + $0x152] sm:$0xff]
        %v3012 = vld [vmem:[%s2045 + $0x15a] sm:$0xff]
        %v3013 = vld [vmem:[%s2045 + $0x16a] sm:$0xff]
        %v3014 = vld [vmem:[%s2045 + $0x172] sm:$0xff]
        %s3015 = scalar_lea.vmem [#allocation3], 640
        %v3016 = vld [vmem:[%s3015] sm:$0xff]
        %v3017 = vld [vmem:[%s3015 + $0x8] sm:$0xff]
        %v3018 = vld [vmem:[%s3015 + $0x10] sm:$0xff]
        %v3019 = vld [vmem:[%s3015 + $0x18] sm:$0xff]
        %v3020 = vld [vmem:[%s3015 + $0x20] sm:$0xff]
        %v3021 = vld [vmem:[%s3015 + $0x28] sm:$0xff]
        %v3022 = vld [vmem:[%s3015 + $0x30] sm:$0xff]
        %v3023 = vld [vmem:[%s3015 + $0x38] sm:$0xff]
        %v3024 = vld [vmem:[%s3015 + $0x40] sm:$0xff]
        %v3025 = vld [vmem:[%s3015 + $0x48] sm:$0xff]
        %v3026 = vld [vmem:[%s3015 + $0x50] sm:$0xff]
        %v3027 = vld [vmem:[%s3015 + $0x58] sm:$0xff]
        %v3028 = vld [vmem:[%s3015 + $0x60] sm:$0xff]
        %v3029 = vld [vmem:[%s3015 + $0x68] sm:$0xff]
        %v3030 = vld [vmem:[%s3015 + $0x70] sm:$0xff]
        %v3031 = vld [vmem:[%s3015 + $0x78] sm:$0xff]
        %3032 = vmatpush.msra.mxu0 %v3031
        %3033 = vmatpush.msra.mxu0 %v3030
        %3034 = vmatpush.msra.mxu0 %v3029
        %3035 = vmatpush.msra.mxu0 %v3028
        %3036 = vmatpush.msra.mxu0 %v3027
        %3037 = vmatpush.msra.mxu0 %v3026
        %3038 = vmatpush.msra.mxu0 %v3025
        %3039 = vmatpush.msra.mxu0 %v3024
        %3040 = vmatpush.msra.mxu0 %v3023
        %3041 = vmatpush.msra.mxu0 %v3022
        %3042 = vmatpush.msra.mxu0 %v3021
        %3043 = vmatpush.msra.mxu0 %v3020
        %3044 = vmatpush.msra.mxu0 %v3019
        %3045 = vmatpush.msra.mxu0 %v3018
        %3046 = vmatpush.msra.mxu0 %v3017
        %3047 = vmatpush.msra.mxu0 %v3016
        %3048 = vmatmul.f32.gmra.mxu0 %v2983
        %v3049 = vpop.f32.mrf.mxu0
        %v3050 = vadd.f32 0.0, %v3049
        %3051 = vmatmul.f32.gmra.mxu0 %v2984
        %v3052 = vpop.f32.mrf.mxu0
        %v3053 = vadd.f32 0.0, %v3052
        %3054 = vmatmul.f32.gmra.mxu0 %v2985
        %v3055 = vpop.f32.mrf.mxu0
        %v3056 = vadd.f32 0.0, %v3055
        %3057 = vmatmul.f32.gmra.mxu0 %v2986
        %v3058 = vpop.f32.mrf.mxu0
        %v3059 = vadd.f32 0.0, %v3058
        %3060 = vmatmul.f32.gmra.mxu0 %v2987
        %v3061 = vpop.f32.mrf.mxu0
        %v3062 = vadd.f32 0.0, %v3061
        %3063 = vmatmul.f32.gmra.mxu0 %v2988
        %v3064 = vpop.f32.mrf.mxu0
        %v3065 = vadd.f32 0.0, %v3064
        %3066 = vmatmul.f32.gmra.mxu0 %v2989
        %v3067 = vpop.f32.mrf.mxu0
        %v3068 = vadd.f32 0.0, %v3067
        %3069 = vmatmul.f32.gmra.mxu0 %v2990
        %v3070 = vpop.f32.mrf.mxu0
        %v3071 = vadd.f32 0.0, %v3070
        %3072 = vmatmul.f32.gmra.mxu0 %v2991
        %v3073 = vpop.f32.mrf.mxu0
        %v3074 = vadd.f32 0.0, %v3073
        %3075 = vmatmul.f32.gmra.mxu0 %v2992
        %v3076 = vpop.f32.mrf.mxu0
        %v3077 = vadd.f32 0.0, %v3076
        %3078 = vmatmul.f32.gmra.mxu0 %v2993
        %v3079 = vpop.f32.mrf.mxu0
        %v3080 = vadd.f32 0.0, %v3079
        %3081 = vmatmul.f32.gmra.mxu0 %v2994
        %v3082 = vpop.f32.mrf.mxu0
        %v3083 = vadd.f32 0.0, %v3082
        %3084 = vmatmul.f32.gmra.mxu0 %v2995
        %v3085 = vpop.f32.mrf.mxu0
        %v3086 = vadd.f32 0.0, %v3085
        %3087 = vmatmul.f32.gmra.mxu0 %v2996
        %v3088 = vpop.f32.mrf.mxu0
        %v3089 = vadd.f32 0.0, %v3088
        %3090 = vmatmul.f32.gmra.mxu0 %v2997
        %v3091 = vpop.f32.mrf.mxu0
        %v3092 = vadd.f32 0.0, %v3091
        %3093 = vmatmul.f32.gmra.mxu0 %v2998
        %v3094 = vpop.f32.mrf.mxu0
        %v3095 = vadd.f32 0.0, %v3094
        %3096 = vmatmul.f32.gmra.mxu0 %v2999
        %v3097 = vpop.f32.mrf.mxu0
        %v3098 = vadd.f32 0.0, %v3097
        %3099 = vmatmul.f32.gmra.mxu0 %v3000
        %v3100 = vpop.f32.mrf.mxu0
        %v3101 = vadd.f32 0.0, %v3100
        %3102 = vmatmul.f32.gmra.mxu0 %v3001
        %v3103 = vpop.f32.mrf.mxu0
        %v3104 = vadd.f32 0.0, %v3103
        %3105 = vmatmul.f32.gmra.mxu0 %v3002
        %v3106 = vpop.f32.mrf.mxu0
        %v3107 = vadd.f32 0.0, %v3106
        %3108 = vmatmul.f32.gmra.mxu0 %v3003
        %v3109 = vpop.f32.mrf.mxu0
        %v3110 = vadd.f32 0.0, %v3109
        %3111 = vmatmul.f32.gmra.mxu0 %v3004
        %v3112 = vpop.f32.mrf.mxu0
        %v3113 = vadd.f32 0.0, %v3112
        %3114 = vmatmul.f32.gmra.mxu0 %v3005
        %v3115 = vpop.f32.mrf.mxu0
        %v3116 = vadd.f32 0.0, %v3115
        %3117 = vmatmul.f32.gmra.mxu0 %v3006
        %v3118 = vpop.f32.mrf.mxu0
        %v3119 = vadd.f32 0.0, %v3118
        %3120 = vmatmul.f32.gmra.mxu0 %v3007
        %v3121 = vpop.f32.mrf.mxu0
        %v3122 = vadd.f32 0.0, %v3121
        %3123 = vmatmul.f32.gmra.mxu0 %v3008
        %v3124 = vpop.f32.mrf.mxu0
        %v3125 = vadd.f32 0.0, %v3124
        %3126 = vmatmul.f32.gmra.mxu0 %v3009
        %v3127 = vpop.f32.mrf.mxu0
        %v3128 = vadd.f32 0.0, %v3127
        %3129 = vmatmul.f32.gmra.mxu0 %v3010
        %v3130 = vpop.f32.mrf.mxu0
        %v3131 = vadd.f32 0.0, %v3130
        %3132 = vmatmul.f32.gmra.mxu0 %v3011
        %v3133 = vpop.f32.mrf.mxu0
        %v3134 = vadd.f32 0.0, %v3133
        %3135 = vmatmul.f32.gmra.mxu0 %v3012
        %v3136 = vpop.f32.mrf.mxu0
        %v3137 = vadd.f32 0.0, %v3136
        %3138 = vmatmul.f32.gmra.mxu0 %v3013
        %v3139 = vpop.f32.mrf.mxu0
        %v3140 = vadd.f32 0.0, %v3139
        %3141 = vmatmul.f32.gmra.mxu0 %v3014
        %v3142 = vpop.f32.mrf.mxu0
        %v3143 = vadd.f32 0.0, %v3142
        %3144 = vdwg.mxu0
        %v3145 = vadd.f32 %v2951, %v3050
        %v3146 = vadd.f32 %v2952, %v3053
        %v3147 = vadd.f32 %v2953, %v3056
        %v3148 = vadd.f32 %v2954, %v3059
        %v3149 = vadd.f32 %v2955, %v3062
        %v3150 = vadd.f32 %v2956, %v3065
        %v3151 = vadd.f32 %v2957, %v3068
        %v3152 = vadd.f32 %v2958, %v3071
        %v3153 = vadd.f32 %v2959, %v3074
        %v3154 = vadd.f32 %v2960, %v3077
        %v3155 = vadd.f32 %v2961, %v3080
        %v3156 = vadd.f32 %v2962, %v3083
        %v3157 = vadd.f32 %v2963, %v3086
        %v3158 = vadd.f32 %v2964, %v3089
        %v3159 = vadd.f32 %v2965, %v3092
        %v3160 = vadd.f32 %v2966, %v3095
        %v3161 = vadd.f32 %v2967, %v3098
        %v3162 = vadd.f32 %v2968, %v3101
        %v3163 = vadd.f32 %v2969, %v3104
        %v3164 = vadd.f32 %v2970, %v3107
        %v3165 = vadd.f32 %v2971, %v3110
        %v3166 = vadd.f32 %v2972, %v3113
        %v3167 = vadd.f32 %v2973, %v3116
        %v3168 = vadd.f32 %v2974, %v3119
        %v3169 = vadd.f32 %v2975, %v3122
        %v3170 = vadd.f32 %v2976, %v3125
        %v3171 = vadd.f32 %v2977, %v3128
        %v3172 = vadd.f32 %v2978, %v3131
        %v3173 = vadd.f32 %v2979, %v3134
        %v3174 = vadd.f32 %v2980, %v3137
        %v3175 = vadd.f32 %v2981, %v3140
        %v3176 = vadd.f32 %v2982, %v3143
        %s3177 = scalar_lea.vmem [#allocation2], 48
        %v3178 = vld [vmem:[%s3177] sm:$0xff]
        %v3179 = vld [vmem:[%s3177 + $0x8] sm:$0xff]
        %v3180 = vld [vmem:[%s3177 + $0x18] sm:$0xff]
        %v3181 = vld [vmem:[%s3177 + $0x20] sm:$0xff]
        %v3182 = vld [vmem:[%s3177 + $0x30] sm:$0xff]
        %v3183 = vld [vmem:[%s3177 + $0x38] sm:$0xff]
        %v3184 = vld [vmem:[%s3177 + $0x48] sm:$0xff]
        %v3185 = vld [vmem:[%s3177 + $0x50] sm:$0xff]
        %v3186 = vld [vmem:[%s3177 + $0x60] sm:$0xff]
        %v3187 = vld [vmem:[%s3177 + $0x68] sm:$0xff]
        %v3188 = vld [vmem:[%s3177 + $0x78] sm:$0xff]
        %v3189 = vld [vmem:[%s3177 + $0x80] sm:$0xff]
        %v3190 = vld [vmem:[%s3177 + $0x90] sm:$0xff]
        %v3191 = vld [vmem:[%s3177 + $0x98] sm:$0xff]
        %v3192 = vld [vmem:[%s3177 + $0xa8] sm:$0xff]
        %v3193 = vld [vmem:[%s3177 + $0xb0] sm:$0xff]
        %v3194 = vld [vmem:[%s3177 + $0xc0] sm:$0xff]
        %v3195 = vld [vmem:[%s3177 + $0xc8] sm:$0xff]
        %v3196 = vld [vmem:[%s3177 + $0xd8] sm:$0xff]
        %v3197 = vld [vmem:[%s3177 + $0xe0] sm:$0xff]
        %v3198 = vld [vmem:[%s3177 + $0xf0] sm:$0xff]
        %v3199 = vld [vmem:[%s3177 + $0xf8] sm:$0xff]
        %v3200 = vld [vmem:[%s3177 + $0x108] sm:$0xff]
        %v3201 = vld [vmem:[%s3177 + $0x110] sm:$0xff]
        %v3202 = vld [vmem:[%s3177 + $0x120] sm:$0xff]
        %v3203 = vld [vmem:[%s3177 + $0x128] sm:$0xff]
        %v3204 = vld [vmem:[%s3177 + $0x138] sm:$0xff]
        %v3205 = vld [vmem:[%s3177 + $0x140] sm:$0xff]
        %v3206 = vld [vmem:[%s3177 + $0x150] sm:$0xff]
        %v3207 = vld [vmem:[%s3177 + $0x158] sm:$0xff]
        %v3208 = vld [vmem:[%s3177 + $0x168] sm:$0xff]
        %v3209 = vld [vmem:[%s3177 + $0x170] sm:$0xff]
        %s3210 = scalar_lea.vmem [#allocation3], 768
        %v3211 = vld [vmem:[%s3210] sm:$0xff]
        %v3212 = vld [vmem:[%s3210 + $0x8] sm:$0xff]
        %v3213 = vld [vmem:[%s3210 + $0x10] sm:$0xff]
        %v3214 = vld [vmem:[%s3210 + $0x18] sm:$0xff]
        %v3215 = vld [vmem:[%s3210 + $0x20] sm:$0xff]
        %v3216 = vld [vmem:[%s3210 + $0x28] sm:$0xff]
        %v3217 = vld [vmem:[%s3210 + $0x30] sm:$0xff]
        %v3218 = vld [vmem:[%s3210 + $0x38] sm:$0xff]
        %v3219 = vld [vmem:[%s3210 + $0x40] sm:$0xff]
        %v3220 = vld [vmem:[%s3210 + $0x48] sm:$0xff]
        %v3221 = vld [vmem:[%s3210 + $0x50] sm:$0xff]
        %v3222 = vld [vmem:[%s3210 + $0x58] sm:$0xff]
        %v3223 = vld [vmem:[%s3210 + $0x60] sm:$0xff]
        %v3224 = vld [vmem:[%s3210 + $0x68] sm:$0xff]
        %v3225 = vld [vmem:[%s3210 + $0x70] sm:$0xff]
        %v3226 = vld [vmem:[%s3210 + $0x78] sm:$0xff]
        %3227 = vmatpush.msra.mxu0 %v3226
        %3228 = vmatpush.msra.mxu0 %v3225
        %3229 = vmatpush.msra.mxu0 %v3224
        %3230 = vmatpush.msra.mxu0 %v3223
        %3231 = vmatpush.msra.mxu0 %v3222
        %3232 = vmatpush.msra.mxu0 %v3221
        %3233 = vmatpush.msra.mxu0 %v3220
        %3234 = vmatpush.msra.mxu0 %v3219
        %3235 = vmatpush.msra.mxu0 %v3218
        %3236 = vmatpush.msra.mxu0 %v3217
        %3237 = vmatpush.msra.mxu0 %v3216
        %3238 = vmatpush.msra.mxu0 %v3215
        %3239 = vmatpush.msra.mxu0 %v3214
        %3240 = vmatpush.msra.mxu0 %v3213
        %3241 = vmatpush.msra.mxu0 %v3212
        %3242 = vmatpush.msra.mxu0 %v3211
        %3243 = vmatmul.f32.gmra.mxu0 %v3178
        %v3244 = vpop.f32.mrf.mxu0
        %v3245 = vadd.f32 0.0, %v3244
        %3246 = vmatmul.f32.gmra.mxu0 %v3179
        %v3247 = vpop.f32.mrf.mxu0
        %v3248 = vadd.f32 0.0, %v3247
        %3249 = vmatmul.f32.gmra.mxu0 %v3180
        %v3250 = vpop.f32.mrf.mxu0
        %v3251 = vadd.f32 0.0, %v3250
        %3252 = vmatmul.f32.gmra.mxu0 %v3181
        %v3253 = vpop.f32.mrf.mxu0
        %v3254 = vadd.f32 0.0, %v3253
        %3255 = vmatmul.f32.gmra.mxu0 %v3182
        %v3256 = vpop.f32.mrf.mxu0
        %v3257 = vadd.f32 0.0, %v3256
        %3258 = vmatmul.f32.gmra.mxu0 %v3183
        %v3259 = vpop.f32.mrf.mxu0
        %v3260 = vadd.f32 0.0, %v3259
        %3261 = vmatmul.f32.gmra.mxu0 %v3184
        %v3262 = vpop.f32.mrf.mxu0
        %v3263 = vadd.f32 0.0, %v3262
        %3264 = vmatmul.f32.gmra.mxu0 %v3185
        %v3265 = vpop.f32.mrf.mxu0
        %v3266 = vadd.f32 0.0, %v3265
        %3267 = vmatmul.f32.gmra.mxu0 %v3186
        %v3268 = vpop.f32.mrf.mxu0
        %v3269 = vadd.f32 0.0, %v3268
        %3270 = vmatmul.f32.gmra.mxu0 %v3187
        %v3271 = vpop.f32.mrf.mxu0
        %v3272 = vadd.f32 0.0, %v3271
        %3273 = vmatmul.f32.gmra.mxu0 %v3188
        %v3274 = vpop.f32.mrf.mxu0
        %v3275 = vadd.f32 0.0, %v3274
        %3276 = vmatmul.f32.gmra.mxu0 %v3189
        %v3277 = vpop.f32.mrf.mxu0
        %v3278 = vadd.f32 0.0, %v3277
        %3279 = vmatmul.f32.gmra.mxu0 %v3190
        %v3280 = vpop.f32.mrf.mxu0
        %v3281 = vadd.f32 0.0, %v3280
        %3282 = vmatmul.f32.gmra.mxu0 %v3191
        %v3283 = vpop.f32.mrf.mxu0
        %v3284 = vadd.f32 0.0, %v3283
        %3285 = vmatmul.f32.gmra.mxu0 %v3192
        %v3286 = vpop.f32.mrf.mxu0
        %v3287 = vadd.f32 0.0, %v3286
        %3288 = vmatmul.f32.gmra.mxu0 %v3193
        %v3289 = vpop.f32.mrf.mxu0
        %v3290 = vadd.f32 0.0, %v3289
        %3291 = vmatmul.f32.gmra.mxu0 %v3194
        %v3292 = vpop.f32.mrf.mxu0
        %v3293 = vadd.f32 0.0, %v3292
        %3294 = vmatmul.f32.gmra.mxu0 %v3195
        %v3295 = vpop.f32.mrf.mxu0
        %v3296 = vadd.f32 0.0, %v3295
        %3297 = vmatmul.f32.gmra.mxu0 %v3196
        %v3298 = vpop.f32.mrf.mxu0
        %v3299 = vadd.f32 0.0, %v3298
        %3300 = vmatmul.f32.gmra.mxu0 %v3197
        %v3301 = vpop.f32.mrf.mxu0
        %v3302 = vadd.f32 0.0, %v3301
        %3303 = vmatmul.f32.gmra.mxu0 %v3198
        %v3304 = vpop.f32.mrf.mxu0
        %v3305 = vadd.f32 0.0, %v3304
        %3306 = vmatmul.f32.gmra.mxu0 %v3199
        %v3307 = vpop.f32.mrf.mxu0
        %v3308 = vadd.f32 0.0, %v3307
        %3309 = vmatmul.f32.gmra.mxu0 %v3200
        %v3310 = vpop.f32.mrf.mxu0
        %v3311 = vadd.f32 0.0, %v3310
        %3312 = vmatmul.f32.gmra.mxu0 %v3201
        %v3313 = vpop.f32.mrf.mxu0
        %v3314 = vadd.f32 0.0, %v3313
        %3315 = vmatmul.f32.gmra.mxu0 %v3202
        %v3316 = vpop.f32.mrf.mxu0
        %v3317 = vadd.f32 0.0, %v3316
        %3318 = vmatmul.f32.gmra.mxu0 %v3203
        %v3319 = vpop.f32.mrf.mxu0
        %v3320 = vadd.f32 0.0, %v3319
        %3321 = vmatmul.f32.gmra.mxu0 %v3204
        %v3322 = vpop.f32.mrf.mxu0
        %v3323 = vadd.f32 0.0, %v3322
        %3324 = vmatmul.f32.gmra.mxu0 %v3205
        %v3325 = vpop.f32.mrf.mxu0
        %v3326 = vadd.f32 0.0, %v3325
        %3327 = vmatmul.f32.gmra.mxu0 %v3206
        %v3328 = vpop.f32.mrf.mxu0
        %v3329 = vadd.f32 0.0, %v3328
        %3330 = vmatmul.f32.gmra.mxu0 %v3207
        %v3331 = vpop.f32.mrf.mxu0
        %v3332 = vadd.f32 0.0, %v3331
        %3333 = vmatmul.f32.gmra.mxu0 %v3208
        %v3334 = vpop.f32.mrf.mxu0
        %v3335 = vadd.f32 0.0, %v3334
        %3336 = vmatmul.f32.gmra.mxu0 %v3209
        %v3337 = vpop.f32.mrf.mxu0
        %v3338 = vadd.f32 0.0, %v3337
        %3339 = vdwg.mxu0
        %v3340 = vadd.f32 %v3145, %v3245
        %v3341 = vadd.f32 %v3146, %v3248
        %v3342 = vadd.f32 %v3147, %v3251
        %v3343 = vadd.f32 %v3148, %v3254
        %v3344 = vadd.f32 %v3149, %v3257
        %v3345 = vadd.f32 %v3150, %v3260
        %v3346 = vadd.f32 %v3151, %v3263
        %v3347 = vadd.f32 %v3152, %v3266
        %v3348 = vadd.f32 %v3153, %v3269
        %v3349 = vadd.f32 %v3154, %v3272
        %v3350 = vadd.f32 %v3155, %v3275
        %v3351 = vadd.f32 %v3156, %v3278
        %v3352 = vadd.f32 %v3157, %v3281
        %v3353 = vadd.f32 %v3158, %v3284
        %v3354 = vadd.f32 %v3159, %v3287
        %v3355 = vadd.f32 %v3160, %v3290
        %v3356 = vadd.f32 %v3161, %v3293
        %v3357 = vadd.f32 %v3162, %v3296
        %v3358 = vadd.f32 %v3163, %v3299
        %v3359 = vadd.f32 %v3164, %v3302
        %v3360 = vadd.f32 %v3165, %v3305
        %v3361 = vadd.f32 %v3166, %v3308
        %v3362 = vadd.f32 %v3167, %v3311
        %v3363 = vadd.f32 %v3168, %v3314
        %v3364 = vadd.f32 %v3169, %v3317
        %v3365 = vadd.f32 %v3170, %v3320
        %v3366 = vadd.f32 %v3171, %v3323
        %v3367 = vadd.f32 %v3172, %v3326
        %v3368 = vadd.f32 %v3173, %v3329
        %v3369 = vadd.f32 %v3174, %v3332
        %v3370 = vadd.f32 %v3175, %v3335
        %v3371 = vadd.f32 %v3176, %v3338
        %v3372 = vld [vmem:[%s3177 + $0x1] sm:$0xff]
        %v3373 = vld [vmem:[%s3177 + $0x9] sm:$0xff]
        %v3374 = vld [vmem:[%s3177 + $0x19] sm:$0xff]
        %v3375 = vld [vmem:[%s3177 + $0x21] sm:$0xff]
        %v3376 = vld [vmem:[%s3177 + $0x31] sm:$0xff]
        %v3377 = vld [vmem:[%s3177 + $0x39] sm:$0xff]
        %v3378 = vld [vmem:[%s3177 + $0x49] sm:$0xff]
        %v3379 = vld [vmem:[%s3177 + $0x51] sm:$0xff]
        %v3380 = vld [vmem:[%s3177 + $0x61] sm:$0xff]
        %v3381 = vld [vmem:[%s3177 + $0x69] sm:$0xff]
        %v3382 = vld [vmem:[%s3177 + $0x79] sm:$0xff]
        %v3383 = vld [vmem:[%s3177 + $0x81] sm:$0xff]
        %v3384 = vld [vmem:[%s3177 + $0x91] sm:$0xff]
        %v3385 = vld [vmem:[%s3177 + $0x99] sm:$0xff]
        %v3386 = vld [vmem:[%s3177 + $0xa9] sm:$0xff]
        %v3387 = vld [vmem:[%s3177 + $0xb1] sm:$0xff]
        %v3388 = vld [vmem:[%s3177 + $0xc1] sm:$0xff]
        %v3389 = vld [vmem:[%s3177 + $0xc9] sm:$0xff]
        %v3390 = vld [vmem:[%s3177 + $0xd9] sm:$0xff]
        %v3391 = vld [vmem:[%s3177 + $0xe1] sm:$0xff]
        %v3392 = vld [vmem:[%s3177 + $0xf1] sm:$0xff]
        %v3393 = vld [vmem:[%s3177 + $0xf9] sm:$0xff]
        %v3394 = vld [vmem:[%s3177 + $0x109] sm:$0xff]
        %v3395 = vld [vmem:[%s3177 + $0x111] sm:$0xff]
        %v3396 = vld [vmem:[%s3177 + $0x121] sm:$0xff]
        %v3397 = vld [vmem:[%s3177 + $0x129] sm:$0xff]
        %v3398 = vld [vmem:[%s3177 + $0x139] sm:$0xff]
        %v3399 = vld [vmem:[%s3177 + $0x141] sm:$0xff]
        %v3400 = vld [vmem:[%s3177 + $0x151] sm:$0xff]
        %v3401 = vld [vmem:[%s3177 + $0x159] sm:$0xff]
        %v3402 = vld [vmem:[%s3177 + $0x169] sm:$0xff]
        %v3403 = vld [vmem:[%s3177 + $0x171] sm:$0xff]
        %s3404 = scalar_lea.vmem [#allocation3], 896
        %v3405 = vld [vmem:[%s3404] sm:$0xff]
        %v3406 = vld [vmem:[%s3404 + $0x8] sm:$0xff]
        %v3407 = vld [vmem:[%s3404 + $0x10] sm:$0xff]
        %v3408 = vld [vmem:[%s3404 + $0x18] sm:$0xff]
        %v3409 = vld [vmem:[%s3404 + $0x20] sm:$0xff]
        %v3410 = vld [vmem:[%s3404 + $0x28] sm:$0xff]
        %v3411 = vld [vmem:[%s3404 + $0x30] sm:$0xff]
        %v3412 = vld [vmem:[%s3404 + $0x38] sm:$0xff]
        %v3413 = vld [vmem:[%s3404 + $0x40] sm:$0xff]
        %v3414 = vld [vmem:[%s3404 + $0x48] sm:$0xff]
        %v3415 = vld [vmem:[%s3404 + $0x50] sm:$0xff]
        %v3416 = vld [vmem:[%s3404 + $0x58] sm:$0xff]
        %v3417 = vld [vmem:[%s3404 + $0x60] sm:$0xff]
        %v3418 = vld [vmem:[%s3404 + $0x68] sm:$0xff]
        %v3419 = vld [vmem:[%s3404 + $0x70] sm:$0xff]
        %v3420 = vld [vmem:[%s3404 + $0x78] sm:$0xff]
        %3421 = vmatpush.msra.mxu0 %v3420
        %3422 = vmatpush.msra.mxu0 %v3419
        %3423 = vmatpush.msra.mxu0 %v3418
        %3424 = vmatpush.msra.mxu0 %v3417
        %3425 = vmatpush.msra.mxu0 %v3416
        %3426 = vmatpush.msra.mxu0 %v3415
        %3427 = vmatpush.msra.mxu0 %v3414
        %3428 = vmatpush.msra.mxu0 %v3413
        %3429 = vmatpush.msra.mxu0 %v3412
        %3430 = vmatpush.msra.mxu0 %v3411
        %3431 = vmatpush.msra.mxu0 %v3410
        %3432 = vmatpush.msra.mxu0 %v3409
        %3433 = vmatpush.msra.mxu0 %v3408
        %3434 = vmatpush.msra.mxu0 %v3407
        %3435 = vmatpush.msra.mxu0 %v3406
        %3436 = vmatpush.msra.mxu0 %v3405
        %3437 = vmatmul.f32.gmra.mxu0 %v3372
        %v3438 = vpop.f32.mrf.mxu0
        %v3439 = vadd.f32 0.0, %v3438
        %3440 = vmatmul.f32.gmra.mxu0 %v3373
        %v3441 = vpop.f32.mrf.mxu0
        %v3442 = vadd.f32 0.0, %v3441
        %3443 = vmatmul.f32.gmra.mxu0 %v3374
        %v3444 = vpop.f32.mrf.mxu0
        %v3445 = vadd.f32 0.0, %v3444
        %3446 = vmatmul.f32.gmra.mxu0 %v3375
        %v3447 = vpop.f32.mrf.mxu0
        %v3448 = vadd.f32 0.0, %v3447
        %3449 = vmatmul.f32.gmra.mxu0 %v3376
        %v3450 = vpop.f32.mrf.mxu0
        %v3451 = vadd.f32 0.0, %v3450
        %3452 = vmatmul.f32.gmra.mxu0 %v3377
        %v3453 = vpop.f32.mrf.mxu0
        %v3454 = vadd.f32 0.0, %v3453
        %3455 = vmatmul.f32.gmra.mxu0 %v3378
        %v3456 = vpop.f32.mrf.mxu0
        %v3457 = vadd.f32 0.0, %v3456
        %3458 = vmatmul.f32.gmra.mxu0 %v3379
        %v3459 = vpop.f32.mrf.mxu0
        %v3460 = vadd.f32 0.0, %v3459
        %3461 = vmatmul.f32.gmra.mxu0 %v3380
        %v3462 = vpop.f32.mrf.mxu0
        %v3463 = vadd.f32 0.0, %v3462
        %3464 = vmatmul.f32.gmra.mxu0 %v3381
        %v3465 = vpop.f32.mrf.mxu0
        %v3466 = vadd.f32 0.0, %v3465
        %3467 = vmatmul.f32.gmra.mxu0 %v3382
        %v3468 = vpop.f32.mrf.mxu0
        %v3469 = vadd.f32 0.0, %v3468
        %3470 = vmatmul.f32.gmra.mxu0 %v3383
        %v3471 = vpop.f32.mrf.mxu0
        %v3472 = vadd.f32 0.0, %v3471
        %3473 = vmatmul.f32.gmra.mxu0 %v3384
        %v3474 = vpop.f32.mrf.mxu0
        %v3475 = vadd.f32 0.0, %v3474
        %3476 = vmatmul.f32.gmra.mxu0 %v3385
        %v3477 = vpop.f32.mrf.mxu0
        %v3478 = vadd.f32 0.0, %v3477
        %3479 = vmatmul.f32.gmra.mxu0 %v3386
        %v3480 = vpop.f32.mrf.mxu0
        %v3481 = vadd.f32 0.0, %v3480
        %3482 = vmatmul.f32.gmra.mxu0 %v3387
        %v3483 = vpop.f32.mrf.mxu0
        %v3484 = vadd.f32 0.0, %v3483
        %3485 = vmatmul.f32.gmra.mxu0 %v3388
        %v3486 = vpop.f32.mrf.mxu0
        %v3487 = vadd.f32 0.0, %v3486
        %3488 = vmatmul.f32.gmra.mxu0 %v3389
        %v3489 = vpop.f32.mrf.mxu0
        %v3490 = vadd.f32 0.0, %v3489
        %3491 = vmatmul.f32.gmra.mxu0 %v3390
        %v3492 = vpop.f32.mrf.mxu0
        %v3493 = vadd.f32 0.0, %v3492
        %3494 = vmatmul.f32.gmra.mxu0 %v3391
        %v3495 = vpop.f32.mrf.mxu0
        %v3496 = vadd.f32 0.0, %v3495
        %3497 = vmatmul.f32.gmra.mxu0 %v3392
        %v3498 = vpop.f32.mrf.mxu0
        %v3499 = vadd.f32 0.0, %v3498
        %3500 = vmatmul.f32.gmra.mxu0 %v3393
        %v3501 = vpop.f32.mrf.mxu0
        %v3502 = vadd.f32 0.0, %v3501
        %3503 = vmatmul.f32.gmra.mxu0 %v3394
        %v3504 = vpop.f32.mrf.mxu0
        %v3505 = vadd.f32 0.0, %v3504
        %3506 = vmatmul.f32.gmra.mxu0 %v3395
        %v3507 = vpop.f32.mrf.mxu0
        %v3508 = vadd.f32 0.0, %v3507
        %3509 = vmatmul.f32.gmra.mxu0 %v3396
        %v3510 = vpop.f32.mrf.mxu0
        %v3511 = vadd.f32 0.0, %v3510
        %3512 = vmatmul.f32.gmra.mxu0 %v3397
        %v3513 = vpop.f32.mrf.mxu0
        %v3514 = vadd.f32 0.0, %v3513
        %3515 = vmatmul.f32.gmra.mxu0 %v3398
        %v3516 = vpop.f32.mrf.mxu0
        %v3517 = vadd.f32 0.0, %v3516
        %3518 = vmatmul.f32.gmra.mxu0 %v3399
        %v3519 = vpop.f32.mrf.mxu0
        %v3520 = vadd.f32 0.0, %v3519
        %3521 = vmatmul.f32.gmra.mxu0 %v3400
        %v3522 = vpop.f32.mrf.mxu0
        %v3523 = vadd.f32 0.0, %v3522
        %3524 = vmatmul.f32.gmra.mxu0 %v3401
        %v3525 = vpop.f32.mrf.mxu0
        %v3526 = vadd.f32 0.0, %v3525
        %3527 = vmatmul.f32.gmra.mxu0 %v3402
        %v3528 = vpop.f32.mrf.mxu0
        %v3529 = vadd.f32 0.0, %v3528
        %3530 = vmatmul.f32.gmra.mxu0 %v3403
        %v3531 = vpop.f32.mrf.mxu0
        %v3532 = vadd.f32 0.0, %v3531
        %3533 = vdwg.mxu0
        %v3534 = vadd.f32 %v3340, %v3439
        %v3535 = vadd.f32 %v3341, %v3442
        %v3536 = vadd.f32 %v3342, %v3445
        %v3537 = vadd.f32 %v3343, %v3448
        %v3538 = vadd.f32 %v3344, %v3451
        %v3539 = vadd.f32 %v3345, %v3454
        %v3540 = vadd.f32 %v3346, %v3457
        %v3541 = vadd.f32 %v3347, %v3460
        %v3542 = vadd.f32 %v3348, %v3463
        %v3543 = vadd.f32 %v3349, %v3466
        %v3544 = vadd.f32 %v3350, %v3469
        %v3545 = vadd.f32 %v3351, %v3472
        %v3546 = vadd.f32 %v3352, %v3475
        %v3547 = vadd.f32 %v3353, %v3478
        %v3548 = vadd.f32 %v3354, %v3481
        %v3549 = vadd.f32 %v3355, %v3484
        %v3550 = vadd.f32 %v3356, %v3487
        %v3551 = vadd.f32 %v3357, %v3490
        %v3552 = vadd.f32 %v3358, %v3493
        %v3553 = vadd.f32 %v3359, %v3496
        %v3554 = vadd.f32 %v3360, %v3499
        %v3555 = vadd.f32 %v3361, %v3502
        %v3556 = vadd.f32 %v3362, %v3505
        %v3557 = vadd.f32 %v3363, %v3508
        %v3558 = vadd.f32 %v3364, %v3511
        %v3559 = vadd.f32 %v3365, %v3514
        %v3560 = vadd.f32 %v3366, %v3517
        %v3561 = vadd.f32 %v3367, %v3520
        %v3562 = vadd.f32 %v3368, %v3523
        %v3563 = vadd.f32 %v3369, %v3526
        %v3564 = vadd.f32 %v3370, %v3529
        %v3565 = vadd.f32 %v3371, %v3532
        %v3566 = vld [vmem:[%s3177 + $0x2] sm:$0xff]
        %v3567 = vld [vmem:[%s3177 + $0xa] sm:$0xff]
        %v3568 = vld [vmem:[%s3177 + $0x1a] sm:$0xff]
        %v3569 = vld [vmem:[%s3177 + $0x22] sm:$0xff]
        %v3570 = vld [vmem:[%s3177 + $0x32] sm:$0xff]
        %v3571 = vld [vmem:[%s3177 + $0x3a] sm:$0xff]
        %v3572 = vld [vmem:[%s3177 + $0x4a] sm:$0xff]
        %v3573 = vld [vmem:[%s3177 + $0x52] sm:$0xff]
        %v3574 = vld [vmem:[%s3177 + $0x62] sm:$0xff]
        %v3575 = vld [vmem:[%s3177 + $0x6a] sm:$0xff]
        %v3576 = vld [vmem:[%s3177 + $0x7a] sm:$0xff]
        %v3577 = vld [vmem:[%s3177 + $0x82] sm:$0xff]
        %v3578 = vld [vmem:[%s3177 + $0x92] sm:$0xff]
        %v3579 = vld [vmem:[%s3177 + $0x9a] sm:$0xff]
        %v3580 = vld [vmem:[%s3177 + $0xaa] sm:$0xff]
        %v3581 = vld [vmem:[%s3177 + $0xb2] sm:$0xff]
        %v3582 = vld [vmem:[%s3177 + $0xc2] sm:$0xff]
        %v3583 = vld [vmem:[%s3177 + $0xca] sm:$0xff]
        %v3584 = vld [vmem:[%s3177 + $0xda] sm:$0xff]
        %v3585 = vld [vmem:[%s3177 + $0xe2] sm:$0xff]
        %v3586 = vld [vmem:[%s3177 + $0xf2] sm:$0xff]
        %v3587 = vld [vmem:[%s3177 + $0xfa] sm:$0xff]
        %v3588 = vld [vmem:[%s3177 + $0x10a] sm:$0xff]
        %v3589 = vld [vmem:[%s3177 + $0x112] sm:$0xff]
        %v3590 = vld [vmem:[%s3177 + $0x122] sm:$0xff]
        %v3591 = vld [vmem:[%s3177 + $0x12a] sm:$0xff]
        %v3592 = vld [vmem:[%s3177 + $0x13a] sm:$0xff]
        %v3593 = vld [vmem:[%s3177 + $0x142] sm:$0xff]
        %v3594 = vld [vmem:[%s3177 + $0x152] sm:$0xff]
        %v3595 = vld [vmem:[%s3177 + $0x15a] sm:$0xff]
        %v3596 = vld [vmem:[%s3177 + $0x16a] sm:$0xff]
        %v3597 = vld [vmem:[%s3177 + $0x172] sm:$0xff]
        %s3598 = scalar_lea.vmem [#allocation3], 1024
        %v3599 = vld [vmem:[%s3598] sm:$0xff]
        %v3600 = vld [vmem:[%s3598 + $0x8] sm:$0xff]
        %v3601 = vld [vmem:[%s3598 + $0x10] sm:$0xff]
        %v3602 = vld [vmem:[%s3598 + $0x18] sm:$0xff]
        %v3603 = vld [vmem:[%s3598 + $0x20] sm:$0xff]
        %v3604 = vld [vmem:[%s3598 + $0x28] sm:$0xff]
        %v3605 = vld [vmem:[%s3598 + $0x30] sm:$0xff]
        %v3606 = vld [vmem:[%s3598 + $0x38] sm:$0xff]
        %v3607 = vld [vmem:[%s3598 + $0x40] sm:$0xff]
        %v3608 = vld [vmem:[%s3598 + $0x48] sm:$0xff]
        %v3609 = vld [vmem:[%s3598 + $0x50] sm:$0xff]
        %v3610 = vld [vmem:[%s3598 + $0x58] sm:$0xff]
        %v3611 = vld [vmem:[%s3598 + $0x60] sm:$0xff]
        %v3612 = vld [vmem:[%s3598 + $0x68] sm:$0xff]
        %v3613 = vld [vmem:[%s3598 + $0x70] sm:$0xff]
        %v3614 = vld [vmem:[%s3598 + $0x78] sm:$0xff]
        %3615 = vmatpush.msra.mxu0 %v3614
        %3616 = vmatpush.msra.mxu0 %v3613
        %3617 = vmatpush.msra.mxu0 %v3612
        %3618 = vmatpush.msra.mxu0 %v3611
        %3619 = vmatpush.msra.mxu0 %v3610
        %3620 = vmatpush.msra.mxu0 %v3609
        %3621 = vmatpush.msra.mxu0 %v3608
        %3622 = vmatpush.msra.mxu0 %v3607
        %3623 = vmatpush.msra.mxu0 %v3606
        %3624 = vmatpush.msra.mxu0 %v3605
        %3625 = vmatpush.msra.mxu0 %v3604
        %3626 = vmatpush.msra.mxu0 %v3603
        %3627 = vmatpush.msra.mxu0 %v3602
        %3628 = vmatpush.msra.mxu0 %v3601
        %3629 = vmatpush.msra.mxu0 %v3600
        %3630 = vmatpush.msra.mxu0 %v3599
        %3631 = vmatmul.f32.gmra.mxu0 %v3566
        %v3632 = vpop.f32.mrf.mxu0
        %v3633 = vadd.f32 0.0, %v3632
        %3634 = vmatmul.f32.gmra.mxu0 %v3567
        %v3635 = vpop.f32.mrf.mxu0
        %v3636 = vadd.f32 0.0, %v3635
        %3637 = vmatmul.f32.gmra.mxu0 %v3568
        %v3638 = vpop.f32.mrf.mxu0
        %v3639 = vadd.f32 0.0, %v3638
        %3640 = vmatmul.f32.gmra.mxu0 %v3569
        %v3641 = vpop.f32.mrf.mxu0
        %v3642 = vadd.f32 0.0, %v3641
        %3643 = vmatmul.f32.gmra.mxu0 %v3570
        %v3644 = vpop.f32.mrf.mxu0
        %v3645 = vadd.f32 0.0, %v3644
        %3646 = vmatmul.f32.gmra.mxu0 %v3571
        %v3647 = vpop.f32.mrf.mxu0
        %v3648 = vadd.f32 0.0, %v3647
        %3649 = vmatmul.f32.gmra.mxu0 %v3572
        %v3650 = vpop.f32.mrf.mxu0
        %v3651 = vadd.f32 0.0, %v3650
        %3652 = vmatmul.f32.gmra.mxu0 %v3573
        %v3653 = vpop.f32.mrf.mxu0
        %v3654 = vadd.f32 0.0, %v3653
        %3655 = vmatmul.f32.gmra.mxu0 %v3574
        %v3656 = vpop.f32.mrf.mxu0
        %v3657 = vadd.f32 0.0, %v3656
        %3658 = vmatmul.f32.gmra.mxu0 %v3575
        %v3659 = vpop.f32.mrf.mxu0
        %v3660 = vadd.f32 0.0, %v3659
        %3661 = vmatmul.f32.gmra.mxu0 %v3576
        %v3662 = vpop.f32.mrf.mxu0
        %v3663 = vadd.f32 0.0, %v3662
        %3664 = vmatmul.f32.gmra.mxu0 %v3577
        %v3665 = vpop.f32.mrf.mxu0
        %v3666 = vadd.f32 0.0, %v3665
        %3667 = vmatmul.f32.gmra.mxu0 %v3578
        %v3668 = vpop.f32.mrf.mxu0
        %v3669 = vadd.f32 0.0, %v3668
        %3670 = vmatmul.f32.gmra.mxu0 %v3579
        %v3671 = vpop.f32.mrf.mxu0
        %v3672 = vadd.f32 0.0, %v3671
        %3673 = vmatmul.f32.gmra.mxu0 %v3580
        %v3674 = vpop.f32.mrf.mxu0
        %v3675 = vadd.f32 0.0, %v3674
        %3676 = vmatmul.f32.gmra.mxu0 %v3581
        %v3677 = vpop.f32.mrf.mxu0
        %v3678 = vadd.f32 0.0, %v3677
        %3679 = vmatmul.f32.gmra.mxu0 %v3582
        %v3680 = vpop.f32.mrf.mxu0
        %v3681 = vadd.f32 0.0, %v3680
        %3682 = vmatmul.f32.gmra.mxu0 %v3583
        %v3683 = vpop.f32.mrf.mxu0
        %v3684 = vadd.f32 0.0, %v3683
        %3685 = vmatmul.f32.gmra.mxu0 %v3584
        %v3686 = vpop.f32.mrf.mxu0
        %v3687 = vadd.f32 0.0, %v3686
        %3688 = vmatmul.f32.gmra.mxu0 %v3585
        %v3689 = vpop.f32.mrf.mxu0
        %v3690 = vadd.f32 0.0, %v3689
        %3691 = vmatmul.f32.gmra.mxu0 %v3586
        %v3692 = vpop.f32.mrf.mxu0
        %v3693 = vadd.f32 0.0, %v3692
        %3694 = vmatmul.f32.gmra.mxu0 %v3587
        %v3695 = vpop.f32.mrf.mxu0
        %v3696 = vadd.f32 0.0, %v3695
        %3697 = vmatmul.f32.gmra.mxu0 %v3588
        %v3698 = vpop.f32.mrf.mxu0
        %v3699 = vadd.f32 0.0, %v3698
        %3700 = vmatmul.f32.gmra.mxu0 %v3589
        %v3701 = vpop.f32.mrf.mxu0
        %v3702 = vadd.f32 0.0, %v3701
        %3703 = vmatmul.f32.gmra.mxu0 %v3590
        %v3704 = vpop.f32.mrf.mxu0
        %v3705 = vadd.f32 0.0, %v3704
        %3706 = vmatmul.f32.gmra.mxu0 %v3591
        %v3707 = vpop.f32.mrf.mxu0
        %v3708 = vadd.f32 0.0, %v3707
        %3709 = vmatmul.f32.gmra.mxu0 %v3592
        %v3710 = vpop.f32.mrf.mxu0
        %v3711 = vadd.f32 0.0, %v3710
        %3712 = vmatmul.f32.gmra.mxu0 %v3593
        %v3713 = vpop.f32.mrf.mxu0
        %v3714 = vadd.f32 0.0, %v3713
        %3715 = vmatmul.f32.gmra.mxu0 %v3594
        %v3716 = vpop.f32.mrf.mxu0
        %v3717 = vadd.f32 0.0, %v3716
        %3718 = vmatmul.f32.gmra.mxu0 %v3595
        %v3719 = vpop.f32.mrf.mxu0
        %v3720 = vadd.f32 0.0, %v3719
        %3721 = vmatmul.f32.gmra.mxu0 %v3596
        %v3722 = vpop.f32.mrf.mxu0
        %v3723 = vadd.f32 0.0, %v3722
        %3724 = vmatmul.f32.gmra.mxu0 %v3597
        %v3725 = vpop.f32.mrf.mxu0
        %v3726 = vadd.f32 0.0, %v3725
        %3727 = vdwg.mxu0
        %v3728 = vadd.f32 %v3534, %v3633
        %v3729 = vadd.f32 %v3535, %v3636
        %v3730 = vadd.f32 %v3536, %v3639
        %v3731 = vadd.f32 %v3537, %v3642
        %v3732 = vadd.f32 %v3538, %v3645
        %v3733 = vadd.f32 %v3539, %v3648
        %v3734 = vadd.f32 %v3540, %v3651
        %v3735 = vadd.f32 %v3541, %v3654
        %v3736 = vadd.f32 %v3542, %v3657
        %v3737 = vadd.f32 %v3543, %v3660
        %v3738 = vadd.f32 %v3544, %v3663
        %v3739 = vadd.f32 %v3545, %v3666
        %v3740 = vadd.f32 %v3546, %v3669
        %v3741 = vadd.f32 %v3547, %v3672
        %v3742 = vadd.f32 %v3548, %v3675
        %v3743 = vadd.f32 %v3549, %v3678
        %v3744 = vadd.f32 %v3550, %v3681
        %v3745 = vadd.f32 %v3551, %v3684
        %v3746 = vadd.f32 %v3552, %v3687
        %v3747 = vadd.f32 %v3553, %v3690
        %v3748 = vadd.f32 %v3554, %v3693
        %v3749 = vadd.f32 %v3555, %v3696
        %v3750 = vadd.f32 %v3556, %v3699
        %v3751 = vadd.f32 %v3557, %v3702
        %v3752 = vadd.f32 %v3558, %v3705
        %v3753 = vadd.f32 %v3559, %v3708
        %v3754 = vadd.f32 %v3560, %v3711
        %v3755 = vadd.f32 %v3561, %v3714
        %v3756 = vadd.f32 %v3562, %v3717
        %v3757 = vadd.f32 %v3563, %v3720
        %v3758 = vadd.f32 %v3564, %v3723
        %v3759 = vadd.f32 %v3565, %v3726
        %v3760 = vld [vmem:[%s4] sm:$0x1]
        %v3762 = vperm.slane %v3760, 0
        %v3764 = vadd.f32 %v3728, %v3762
        %v3765 = vadd.f32 %v3729, %v3762
        %v3766 = vadd.f32 %v3730, %v3762
        %v3767 = vadd.f32 %v3731, %v3762
        %v3768 = vadd.f32 %v3732, %v3762
        %v3769 = vadd.f32 %v3733, %v3762
        %v3770 = vadd.f32 %v3734, %v3762
        %v3771 = vadd.f32 %v3735, %v3762
        %v3772 = vadd.f32 %v3736, %v3762
        %v3773 = vadd.f32 %v3737, %v3762
        %v3774 = vadd.f32 %v3738, %v3762
        %v3775 = vadd.f32 %v3739, %v3762
        %v3776 = vadd.f32 %v3740, %v3762
        %v3777 = vadd.f32 %v3741, %v3762
        %v3778 = vadd.f32 %v3742, %v3762
        %v3779 = vadd.f32 %v3743, %v3762
        %v3780 = vadd.f32 %v3744, %v3762
        %v3781 = vadd.f32 %v3745, %v3762
        %v3782 = vadd.f32 %v3746, %v3762
        %v3783 = vadd.f32 %v3747, %v3762
        %v3784 = vadd.f32 %v3748, %v3762
        %v3785 = vadd.f32 %v3749, %v3762
        %v3786 = vadd.f32 %v3750, %v3762
        %v3787 = vadd.f32 %v3751, %v3762
        %v3788 = vadd.f32 %v3752, %v3762
        %v3789 = vadd.f32 %v3753, %v3762
        %v3790 = vadd.f32 %v3754, %v3762
        %v3791 = vadd.f32 %v3755, %v3762
        %v3792 = vadd.f32 %v3756, %v3762
        %v3793 = vadd.f32 %v3757, %v3762
        %v3794 = vadd.f32 %v3758, %v3762
        %v3795 = vadd.f32 %v3759, %v3762
        %v3796 = vld [vmem:[%s757 + $0x1] sm:$0xff]
        %v3797 = vld [vmem:[%s757 + $0x9] sm:$0xff]
        %v3798 = vld [vmem:[%s757 + $0x19] sm:$0xff]
        %v3799 = vld [vmem:[%s757 + $0x21] sm:$0xff]
        %v3800 = vld [vmem:[%s757 + $0x31] sm:$0xff]
        %v3801 = vld [vmem:[%s757 + $0x39] sm:$0xff]
        %v3802 = vld [vmem:[%s757 + $0x49] sm:$0xff]
        %v3803 = vld [vmem:[%s757 + $0x51] sm:$0xff]
        %v3804 = vld [vmem:[%s757 + $0x61] sm:$0xff]
        %v3805 = vld [vmem:[%s757 + $0x69] sm:$0xff]
        %v3806 = vld [vmem:[%s757 + $0x79] sm:$0xff]
        %v3807 = vld [vmem:[%s757 + $0x81] sm:$0xff]
        %v3808 = vld [vmem:[%s757 + $0x91] sm:$0xff]
        %v3809 = vld [vmem:[%s757 + $0x99] sm:$0xff]
        %v3810 = vld [vmem:[%s757 + $0xa9] sm:$0xff]
        %v3811 = vld [vmem:[%s757 + $0xb1] sm:$0xff]
        %v3812 = vld [vmem:[%s757 + $0xc1] sm:$0xff]
        %v3813 = vld [vmem:[%s757 + $0xc9] sm:$0xff]
        %v3814 = vld [vmem:[%s757 + $0xd9] sm:$0xff]
        %v3815 = vld [vmem:[%s757 + $0xe1] sm:$0xff]
        %v3816 = vld [vmem:[%s757 + $0xf1] sm:$0xff]
        %v3817 = vld [vmem:[%s757 + $0xf9] sm:$0xff]
        %v3818 = vld [vmem:[%s757 + $0x109] sm:$0xff]
        %v3819 = vld [vmem:[%s757 + $0x111] sm:$0xff]
        %v3820 = vld [vmem:[%s757 + $0x121] sm:$0xff]
        %v3821 = vld [vmem:[%s757 + $0x129] sm:$0xff]
        %v3822 = vld [vmem:[%s757 + $0x139] sm:$0xff]
        %v3823 = vld [vmem:[%s757 + $0x141] sm:$0xff]
        %v3824 = vld [vmem:[%s757 + $0x151] sm:$0xff]
        %v3825 = vld [vmem:[%s757 + $0x159] sm:$0xff]
        %v3826 = vld [vmem:[%s757 + $0x169] sm:$0xff]
        %v3827 = vld [vmem:[%s757 + $0x171] sm:$0xff]
        %v3828 = vadd.f32 %v3764, %v3796
        %v3829 = vadd.f32 %v3765, %v3797
        %v3830 = vadd.f32 %v3766, %v3798
        %v3831 = vadd.f32 %v3767, %v3799
        %v3832 = vadd.f32 %v3768, %v3800
        %v3833 = vadd.f32 %v3769, %v3801
        %v3834 = vadd.f32 %v3770, %v3802
        %v3835 = vadd.f32 %v3771, %v3803
        %v3836 = vadd.f32 %v3772, %v3804
        %v3837 = vadd.f32 %v3773, %v3805
        %v3838 = vadd.f32 %v3774, %v3806
        %v3839 = vadd.f32 %v3775, %v3807
        %v3840 = vadd.f32 %v3776, %v3808
        %v3841 = vadd.f32 %v3777, %v3809
        %v3842 = vadd.f32 %v3778, %v3810
        %v3843 = vadd.f32 %v3779, %v3811
        %v3844 = vadd.f32 %v3780, %v3812
        %v3845 = vadd.f32 %v3781, %v3813
        %v3846 = vadd.f32 %v3782, %v3814
        %v3847 = vadd.f32 %v3783, %v3815
        %v3848 = vadd.f32 %v3784, %v3816
        %v3849 = vadd.f32 %v3785, %v3817
        %v3850 = vadd.f32 %v3786, %v3818
        %v3851 = vadd.f32 %v3787, %v3819
        %v3852 = vadd.f32 %v3788, %v3820
        %v3853 = vadd.f32 %v3789, %v3821
        %v3854 = vadd.f32 %v3790, %v3822
        %v3855 = vadd.f32 %v3791, %v3823
        %v3856 = vadd.f32 %v3792, %v3824
        %v3857 = vadd.f32 %v3793, %v3825
        %v3858 = vadd.f32 %v3794, %v3826
        %v3859 = vadd.f32 %v3795, %v3827
        %v3860 = vmax.f32 %v3828, 0.0
        %v3861 = vmax.f32 %v3829, 0.0
        %v3862 = vmax.f32 %v3830, 0.0
        %v3863 = vmax.f32 %v3831, 0.0
        %v3864 = vmax.f32 %v3832, 0.0
        %v3865 = vmax.f32 %v3833, 0.0
        %v3866 = vmax.f32 %v3834, 0.0
        %v3867 = vmax.f32 %v3835, 0.0
        %v3868 = vmax.f32 %v3836, 0.0
        %v3869 = vmax.f32 %v3837, 0.0
        %v3870 = vmax.f32 %v3838, 0.0
        %v3871 = vmax.f32 %v3839, 0.0
        %v3872 = vmax.f32 %v3840, 0.0
        %v3873 = vmax.f32 %v3841, 0.0
        %v3874 = vmax.f32 %v3842, 0.0
        %v3875 = vmax.f32 %v3843, 0.0
        %v3876 = vmax.f32 %v3844, 0.0
        %v3877 = vmax.f32 %v3845, 0.0
        %v3878 = vmax.f32 %v3846, 0.0
        %v3879 = vmax.f32 %v3847, 0.0
        %v3880 = vmax.f32 %v3848, 0.0
        %v3881 = vmax.f32 %v3849, 0.0
        %v3882 = vmax.f32 %v3850, 0.0
        %v3883 = vmax.f32 %v3851, 0.0
        %v3884 = vmax.f32 %v3852, 0.0
        %v3885 = vmax.f32 %v3853, 0.0
        %v3886 = vmax.f32 %v3854, 0.0
        %v3887 = vmax.f32 %v3855, 0.0
        %v3888 = vmax.f32 %v3856, 0.0
        %v3889 = vmax.f32 %v3857, 0.0
        %v3890 = vmax.f32 %v3858, 0.0
        %v3891 = vmax.f32 %v3859, 0.0
        %3892 = vst [vmem:[%s234] sm:$0xff] %v3860
        %3893 = vst [vmem:[%s234 + $0x8] sm:$0xff] %v3861
        %3894 = vst [vmem:[%s234 + $0x10] sm:$0xff] %v3862
        %3895 = vst [vmem:[%s234 + $0x18] sm:$0xff] %v3863
        %3896 = vst [vmem:[%s234 + $0x20] sm:$0xff] %v3864
        %3897 = vst [vmem:[%s234 + $0x28] sm:$0xff] %v3865
        %3898 = vst [vmem:[%s234 + $0x30] sm:$0xff] %v3866
        %3899 = vst [vmem:[%s234 + $0x38] sm:$0xff] %v3867
        %3900 = vst [vmem:[%s234 + $0x40] sm:$0xff] %v3868
        %3901 = vst [vmem:[%s234 + $0x48] sm:$0xff] %v3869
        %3902 = vst [vmem:[%s234 + $0x50] sm:$0xff] %v3870
        %3903 = vst [vmem:[%s234 + $0x58] sm:$0xff] %v3871
        %3904 = vst [vmem:[%s234 + $0x60] sm:$0xff] %v3872
        %3905 = vst [vmem:[%s234 + $0x68] sm:$0xff] %v3873
        %3906 = vst [vmem:[%s234 + $0x70] sm:$0xff] %v3874
        %3907 = vst [vmem:[%s234 + $0x78] sm:$0xff] %v3875
        %3908 = vst [vmem:[%s234 + $0x80] sm:$0xff] %v3876
        %3909 = vst [vmem:[%s234 + $0x88] sm:$0xff] %v3877
        %3910 = vst [vmem:[%s234 + $0x90] sm:$0xff] %v3878
        %3911 = vst [vmem:[%s234 + $0x98] sm:$0xff] %v3879
        %3912 = vst [vmem:[%s234 + $0xa0] sm:$0xff] %v3880
        %3913 = vst [vmem:[%s234 + $0xa8] sm:$0xff] %v3881
        %3914 = vst [vmem:[%s234 + $0xb0] sm:$0xff] %v3882
        %3915 = vst [vmem:[%s234 + $0xb8] sm:$0xff] %v3883
        %3916 = vst [vmem:[%s234 + $0xc0] sm:$0xff] %v3884
        %3917 = vst [vmem:[%s234 + $0xc8] sm:$0xff] %v3885
        %3918 = vst [vmem:[%s234 + $0xd0] sm:$0xff] %v3886
        %3919 = vst [vmem:[%s234 + $0xd8] sm:$0xff] %v3887
        %3920 = vst [vmem:[%s234 + $0xe0] sm:$0xff] %v3888
        %3921 = vst [vmem:[%s234 + $0xe8] sm:$0xff] %v3889
        %3922 = vst [vmem:[%s234 + $0xf0] sm:$0xff] %v3890
        %3923 = vst [vmem:[%s234 + $0xf8] sm:$0xff] %v3891
        %s3924 = sand.u32 %s138, 1
        %s3925 = scalar_lea.sflag [#allocation5], %s3924
        %s3926 = sand.u32 %s138, 1
        %s3927 = smul.addr %s3926, 256
        %s3928 = scalar_lea.vmem [#allocation6], %s3927
        // Predicated region
        $region45: #{tpu_custom_call.1} parent=39 // pred_check
          %p3929 = pneg %p148
        $region46: #{tpu_custom_call.1} parent=39 // pred_check_branch
          %3931 = sbr.rel (%p3929) target = $region48
        $region47: #{tpu_custom_call.1} parent=39 // pred_region
          %3933 = vsyncadd %s3925, 0
          %s3934 = smul.addr %s20, 32
          %s3935 = smul.addr %s3934, 8
          %s3936 = scalar_lea.hbm %s5, %s3935
          %s3937 = sshll.u32 %s3928, 4
          %s3938 = int_to_ptr.vmem [resolvable:$true] %s3937
          %s3939 = sshll.u32 %s3936, 4
          %s3940 = int_to_ptr.hbm [resolvable:$true] %s3939
          %3945 = dma.vmem_to_hbm [thread:$0]  %s3938, 4096, %s3940, %s3925, 128, 128, 8
        $region48: #{tpu_custom_call.1} parent=39 // pred_fallthru
          _
      $region40: #{tpu_custom_call.1} parent=5 // pred_fallthru
        _
      %p3946 = scmp.le.s32.totalorder 2, %s15
      // Predicated region
      $region49: #{tpu_custom_call.1} parent=5 // pred_check
        %p3947 = pneg %p3946
      $region50: #{tpu_custom_call.1} parent=5 // pred_check_branch
        %3949 = sbr.rel (%p3947) target = $region52
      $region51: #{tpu_custom_call.1} parent=5 // pred_region
        %s3950 = ssub.s32 %s15, 2
        // Predicated region
        $region53: #{tpu_custom_call.1} parent=51 // pred_check
          %p3951 = pneg %p154
        $region54: #{tpu_custom_call.1} parent=51 // pred_check_branch
          %3953 = sbr.rel (%p3951) target = $region56
        $region55: #{tpu_custom_call.1} parent=51 // pred_region
          %s3954 = sand.u32 %s139, 1
          %s3955 = scalar_lea.sflag [#allocation5], %s3954
          %s3956 = sand.u32 %s139, 1
          %s3957 = smul.addr %s3956, 256
          %s3958 = scalar_lea.vmem [#allocation6], %s3957
          %3960 = dma.done %s3955, 4096
        $region56: #{tpu_custom_call.1} parent=51 // pred_fallthru
          _
      $region52: #{tpu_custom_call.1} parent=5 // pred_fallthru
        _
    $region6: #{tpu_custom_call.1} parent=1 // loop_footer
      %s19 = sadd.s32 1, %s15
    $region7: #{tpu_custom_call.1} parent=1 // loop_footer_branch
      %14 = sbr.rel target = $region3
    $region8: #{tpu_custom_call.1} parent=1 // loop_exit
      _
    %3961 = vsyncpa [#allocation4], 1
    %s3962 = scalar_lea.sflag [#allocation4], 1
    %3963 = vsyncpa %s3962, 1
    %3964 = vsyncpa [#allocation5], 1
    %s3965 = scalar_lea.sflag [#allocation5], 1
    %3966 = vsyncpa %s3965, 1

</llo_original>
